<compile_context>
chip_gen: v7x
topology: tpu7x:2x2x1
jax: 0.10.0
libtpu: 0.0.40
codegen_flags: <defaults>
</compile_context>

<pallas_src>
import numpy as np
import jax
import jax.numpy as jnp
from jax.experimental import pallas as pl
from jax.experimental.pallas import tpu as pltpu


# ----------------------------- fused Pallas kernel --------------------------

def byt5_fused_kernel(tok_ref, emb_ref, bias_ref, ln1_ref, wqkv_ref, wo_ref,
                      ln2_ref, wi_ref, wff_ref, lnf_ref, fc3w_ref, fc3b_ref,
                      out_ref):
    """Embedding -> L x (RMSNorm -> MHSA(+rel-pos bias) -> residual -> RMSNorm
    -> ReLU FFN -> residual) -> final RMSNorm -> token-0 -> fc3."""
    V, D = emb_ref.shape
    H, S, _ = bias_ref.shape
    L = ln1_ref.shape[0]
    HDK = wo_ref.shape[1]
    dk = HDK // H
    BS = tok_ref.shape[0]
    B = BS // S
    eps = 1e-6
    bf16 = jnp.bfloat16

    # --- embedding lookup as a one-hot bf16 MXU matmul (no gather op) ---
    tok = tok_ref[...]                                             # (B*S, 1) i32
    iota = jax.lax.broadcasted_iota(jnp.int32, (BS, V), 1)
    onehot = jnp.where(iota == tok, 1.0, 0.0).astype(bf16)         # (B*S, V)
    xf = jnp.dot(onehot, emb_ref[...],
                 preferred_element_type=jnp.float32)               # (B*S, D) f32

    # Rel-pos bias tiled once (hoisted) into the (H*B, S, S) head-major layout.
    bias_hb = jnp.broadcast_to(bias_ref[...][:, None],
                               (H, B, S, S)).reshape(H * B, S, S)

    for l in range(L):                      # static unroll over layers (L=2)
        # --- T5 LayerNorm (RMSNorm, f32 on the VPU) ---
        var = jnp.mean(xf * xf, axis=-1, keepdims=True)
        h = xf * jax.lax.rsqrt(var + eps) * ln1_ref[l]             # (B*S, D)

        # --- fused QKV projection: ONE bf16 matmul per layer ---
        qkv = jnp.dot(h.astype(bf16), wqkv_ref[l],
                      preferred_element_type=jnp.float32)          # (B*S, 3*HDK)
        q3 = qkv[:, 0 * HDK:1 * HDK].reshape(B, S, HDK)
        k3 = qkv[:, 1 * HDK:2 * HDK].reshape(B, S, HDK)
        v3 = qkv[:, 2 * HDK:3 * HDK].reshape(B, S, HDK)

        # head-major single-batch-dim layout: row index = h*B + b
        q_hb = jnp.concatenate(
            [q3[:, :, i * dk:(i + 1) * dk] for i in range(H)], axis=0)
        k_hb = jnp.concatenate(
            [k3[:, :, i * dk:(i + 1) * dk] for i in range(H)], axis=0)
        v_hb = jnp.concatenate(
            [v3[:, :, i * dk:(i + 1) * dk] for i in range(H)], axis=0)

        # --- batched attention over (head, batch); T5: no 1/sqrt(dk) scale ---
        scores = jnp.einsum('bqd,bkd->bqk',
                            q_hb.astype(bf16), k_hb.astype(bf16),
                            preferred_element_type=jnp.float32) + bias_hb
        scores = scores - jnp.max(scores, axis=-1, keepdims=True)
        p = jnp.exp(scores)
        inv = pl.reciprocal(jnp.sum(p, axis=-1, keepdims=True))    # exact
        attn = p * inv
        ctx_hb = jnp.einsum('bqk,bkd->bqd',
                            attn.astype(bf16), v_hb.astype(bf16),
                            preferred_element_type=jnp.float32)    # (H*B, S, dk)

        # back to (B*S, H*dk): heads concatenated along lanes (head-major)
        ctx = jnp.concatenate(
            [ctx_hb[i * B:(i + 1) * B] for i in range(H)],
            axis=-1).reshape(BS, HDK)

        # --- fused output projection + residual ---
        xf = xf + jnp.dot(ctx.astype(bf16), wo_ref[l],
                          preferred_element_type=jnp.float32)

        # --- RMSNorm -> ReLU FFN -> residual ---
        var2 = jnp.mean(xf * xf, axis=-1, keepdims=True)
        h2 = xf * jax.lax.rsqrt(var2 + eps) * ln2_ref[l]
        ff = jnp.maximum(
            jnp.dot(h2.astype(bf16), wi_ref[l],
                    preferred_element_type=jnp.float32), 0.0)
        xf = xf + jnp.dot(ff.astype(bf16), wff_ref[l],
                          preferred_element_type=jnp.float32)

    # --- classifier head: final RMSNorm on token-0 rows only, one matmul ---
    cls = xf.reshape(B, S, D)[:, 0, :]                             # (B, D)
    var = jnp.mean(cls * cls, axis=-1, keepdims=True)
    cls_n = cls * jax.lax.rsqrt(var + eps) * lnf_ref[...]
    logits = jnp.dot(cls_n.astype(bf16), fc3w_ref[...],
                     preferred_element_type=jnp.float32) + fc3b_ref[...]
    out_ref[...] = logits.astype(out_ref.dtype)                    # (B, NC_pad)


# ----------------------------- wrapper ---------------------------------------

_VMEM = pl.BlockSpec(memory_space=pltpu.MemorySpace.VMEM)


def byt5_classifier_forward(input_ids, params):
    # PyTorch: input[:, 0, :].squeeze(1) -> token ids (B, S)
    tokens = input_ids[:, 0, :]
    B, S = tokens.shape
    tok_col = tokens.reshape(B * S, 1).astype(jnp.int32)

    nc_pad = params["fc3_w"].shape[1]
    logits_pad = pl.pallas_call(
        byt5_fused_kernel,
        out_shape=jax.ShapeDtypeStruct((B, nc_pad), jnp.float32),
        in_specs=[_VMEM] * 12,
        out_specs=_VMEM,
    )(tok_col, params["embedding"], params["pos_bias"], params["ln1"],
      params["wqkv"], params["wo"], params["ln2"], params["wi"],
      params["wff"], params["final_ln"], params["fc3_w"], params["fc3_b"])

    # intermediate_input = hidden[:, 4, :] is computed but unused in the torch forward
    # TODO(synk): dropout layers run in eval mode -> identity (omitted).
    return logits_pad[:, :params["n_clusters"]]


# ------------------ T5 relative position bias (init-time only) ---------------

def _t5_relative_position_bucket(rel_pos, num_buckets=32, max_distance=128):
    # bidirectional variant used by the T5 encoder
    nb = num_buckets // 2
    ret = (rel_pos > 0).astype(np.int64) * nb
    n = np.abs(rel_pos)
    max_exact = nb // 2
    is_small = n < max_exact
    val_if_large = max_exact + (
        np.log(np.maximum(n, 1) / max_exact) /
        np.log(max_distance / max_exact) * (nb - max_exact)
    ).astype(np.int64)
    val_if_large = np.minimum(val_if_large, nb - 1)
    return ret + np.where(is_small, n, val_if_large)


def compute_position_bias(rel_bias_table, seq_len):
    ctx = np.arange(seq_len)[:, None]
    mem = np.arange(seq_len)[None, :]
    buckets = _t5_relative_position_bucket(mem - ctx)               # (S, S)
    bias = jnp.take(rel_bias_table, jnp.asarray(buckets), axis=0)   # (S, S, H)
    return jnp.transpose(bias, (2, 0, 1)).astype(jnp.float32)       # (H, S, S)


# ----------------------------- parameters ------------------------------------

def init_params(key, vocab, d_model, d_kv, n_heads, d_ff, n_layers, n_clusters,
                seq_len, num_buckets=32, nc_pad=128):
    ks = iter(jax.random.split(key, 16))
    bf16 = jnp.bfloat16

    def nrm(shape, scale, dtype=jnp.float32):
        return (scale * jax.random.normal(next(ks), shape)).astype(dtype)

    hdk = n_heads * d_kv

    # fused QKV slab: (L, D, 3*H*dk), bf16 weights, head-major columns
    wq = nrm((n_layers, d_model, hdk), (d_model * d_kv) ** -0.5)
    wk = nrm((n_layers, d_model, hdk), d_model ** -0.5)
    wv = nrm((n_layers, d_model, hdk), d_model ** -0.5)
    wqkv = jnp.concatenate([wq, wk, wv], axis=-1).astype(bf16)

    rel_bias = nrm((num_buckets, n_heads), 0.1)
    pos_bias = compute_position_bias(rel_bias, seq_len)   # built ONCE at init

    fc3_w = nrm((d_model, n_clusters), d_model ** -0.5)
    fc3_b = nrm((1, n_clusters), 0.01)

    return {
        "embedding": nrm((vocab, d_model), 1.0, bf16),
        "pos_bias": pos_bias,                                   # (H, S, S) f32
        # layer weights stacked on a leading L axis -> single DMA per tensor
        "ln1": jnp.ones((n_layers, 1, d_model), jnp.float32),
        "wqkv": wqkv,
        "wo": nrm((n_layers, hdk, d_model), hdk ** -0.5, bf16),
        "ln2": jnp.ones((n_layers, 1, d_model), jnp.float32),
        "wi": nrm((n_layers, d_model, d_ff), d_model ** -0.5, bf16),
        "wff": nrm((n_layers, d_ff, d_model), d_ff ** -0.5, bf16),
        "final_ln": jnp.ones((1, d_model), jnp.float32),
        # fc3 padded to a lane-dense (D, 128) slab; real logits = [:, :n_clusters]
        "fc3_w": jnp.zeros((d_model, nc_pad), bf16)
                    .at[:, :n_clusters].set(fc3_w.astype(bf16)),
        "fc3_b": jnp.zeros((1, nc_pad), jnp.float32)
                    .at[:, :n_clusters].set(fc3_b),
        "n_clusters": n_clusters,
    }


# ----------------------------- main -------------------------------------------

if __name__ == "__main__":
    B, C, S = 2, 1, 8
    VOCAB, D_MODEL, D_KV, N_HEADS, D_FF = 384, 32, 8, 4, 64
    N_LAYERS, N_CLUSTERS = 2, 5

    key = jax.random.PRNGKey(0)
    params = init_params(key, VOCAB, D_MODEL, D_KV, N_HEADS, D_FF,
                         N_LAYERS, N_CLUSTERS, seq_len=S)

    input_ids = jax.random.randint(jax.random.fold_in(key, 123),
                                   (B, C, S), 0, VOCAB, dtype=jnp.int32)

    logits = jax.jit(lambda ids: byt5_classifier_forward(ids, params))(input_ids)
    logits = jax.block_until_ready(logits)

    assert logits.shape == (B, N_CLUSTERS)
    assert bool(jnp.all(jnp.isfinite(logits)))
    print("KERNEL_OK")
</pallas_src>

<mosaic_0001>
module attributes {stable_mosaic.version = 11 : i64} {
  func.func @byt5_fused_kernel(%arg0: memref<16x1xi32, #tpu.memory_space<vmem>>, %arg1: memref<384x32xbf16, #tpu.memory_space<vmem>>, %arg2: memref<4x8x8xf32, #tpu.memory_space<vmem>>, %arg3: memref<2x1x32xf32, #tpu.memory_space<vmem>>, %arg4: memref<2x32x96xbf16, #tpu.memory_space<vmem>>, %arg5: memref<2x32x32xbf16, #tpu.memory_space<vmem>>, %arg6: memref<2x1x32xf32, #tpu.memory_space<vmem>>, %arg7: memref<2x32x64xbf16, #tpu.memory_space<vmem>>, %arg8: memref<2x64x32xbf16, #tpu.memory_space<vmem>>, %arg9: memref<1x32xf32, #tpu.memory_space<vmem>>, %arg10: memref<32x128xbf16, #tpu.memory_space<vmem>>, %arg11: memref<1x128xf32, #tpu.memory_space<vmem>>, %arg12: memref<2x128xf32, #tpu.memory_space<vmem>>) attributes {dimension_semantics = [], scalar_prefetch = 0 : i64, scratch_operands = 0 : i64, tpu.core_type = #tpu.core_type<tc>} {
    %c0 = arith.constant 0 : index
    %c0_0 = arith.constant 0 : index
    %0 = vector.load %arg0[%c0, %c0_0] : memref<16x1xi32, #tpu.memory_space<vmem>>, vector<16x1xi32>
    %1 = tpu.iota {dimensions = array<i32: 1>} : vector<16x384xi32>
    %2 = vector.broadcast %0 : vector<16x1xi32> to vector<16x384xi32>
    %3 = arith.cmpi eq, %1, %2 : vector<16x384xi32>
    %cst = arith.constant 1.000000e+00 : f32
    %cst_1 = arith.constant 0.000000e+00 : f32
    %4 = vector.broadcast %cst : f32 to vector<16x384xf32>
    %5 = vector.broadcast %cst_1 : f32 to vector<16x384xf32>
    %6 = arith.select %3, %4, %5 : vector<16x384xi1>, vector<16x384xf32>
    %7 = arith.truncf %6 : vector<16x384xf32> to vector<16x384xbf16>
    %c0_2 = arith.constant 0 : index
    %c0_3 = arith.constant 0 : index
    %8 = vector.load %arg1[%c0_2, %c0_3] : memref<384x32xbf16, #tpu.memory_space<vmem>>, vector<384x32xbf16>
    %cst_4 = arith.constant dense<0.000000e+00> : vector<16x32xf32>
    %9 = tpu.matmul %7, %8, %cst_4 {dimension_numbers = #tpu.dot_dimension_numbers<[1], [0], [0], [1], [0, 0, 1, 1], [], []>} : vector<16x384xbf16>, vector<384x32xbf16>, vector<16x32xf32> -> vector<16x32xf32>
    %c0_5 = arith.constant 0 : index
    %c0_6 = arith.constant 0 : index
    %c0_7 = arith.constant 0 : index
    %10 = vector.load %arg2[%c0_5, %c0_6, %c0_7] : memref<4x8x8xf32, #tpu.memory_space<vmem>>, vector<4x8x8xf32>
    %11 = vector.shape_cast %10 : vector<4x8x8xf32> to vector<4x1x8x8xf32>
    %12 = vector.shape_cast %11 : vector<4x1x8x8xf32> to vector<4x1x8x8xf32>
    %13 = vector.broadcast %12 : vector<4x1x8x8xf32> to vector<4x2x8x8xf32>
    %14 = vector.shape_cast %13 : vector<4x2x8x8xf32> to vector<8x8x8xf32>
    %15 = arith.mulf %9, %9 : vector<16x32xf32>
    %cst_8 = arith.constant dense<0.000000e+00> : vector<16xf32>
    %16 = vector.multi_reduction <add>, %15, %cst_8 [1] : vector<16x32xf32> to vector<16xf32>
    %17 = vector.shape_cast %16 : vector<16xf32> to vector<16x1xf32>
    %cst_9 = arith.constant 3.200000e+01 : f32
    %18 = vector.broadcast %cst_9 : f32 to vector<16x1xf32>
    %19 = arith.divf %17, %18 : vector<16x1xf32>
    %cst_10 = arith.constant 9.99999997E-7 : f32
    %20 = vector.broadcast %cst_10 : f32 to vector<16x1xf32>
    %21 = arith.addf %19, %20 : vector<16x1xf32>
    %22 = math.rsqrt %21 : vector<16x1xf32>
    %23 = vector.broadcast %22 : vector<16x1xf32> to vector<16x32xf32>
    %24 = arith.mulf %9, %23 : vector<16x32xf32>
    %c0_11 = arith.constant 0 : index
    %c0_12 = arith.constant 0 : index
    %c0_13 = arith.constant 0 : index
    %25 = vector.load %arg3[%c0_11, %c0_12, %c0_13] : memref<2x1x32xf32, #tpu.memory_space<vmem>>, vector<1x1x32xf32>
    %26 = vector.shape_cast %25 : vector<1x1x32xf32> to vector<1x32xf32>
    %27 = vector.broadcast %26 : vector<1x32xf32> to vector<16x32xf32>
    %28 = arith.mulf %24, %27 : vector<16x32xf32>
    %29 = arith.truncf %28 : vector<16x32xf32> to vector<16x32xbf16>
    %c0_14 = arith.constant 0 : index
    %c0_15 = arith.constant 0 : index
    %c0_16 = arith.constant 0 : index
    %30 = vector.load %arg4[%c0_14, %c0_15, %c0_16] : memref<2x32x96xbf16, #tpu.memory_space<vmem>>, vector<1x32x96xbf16>
    %31 = vector.shape_cast %30 : vector<1x32x96xbf16> to vector<32x96xbf16>
    %cst_17 = arith.constant dense<0.000000e+00> : vector<16x96xf32>
    %32 = tpu.matmul %29, %31, %cst_17 {dimension_numbers = #tpu.dot_dimension_numbers<[1], [0], [0], [1], [0, 0, 1, 1], [], []>} : vector<16x32xbf16>, vector<32x96xbf16>, vector<16x96xf32> -> vector<16x96xf32>
    %33 = vector.extract_strided_slice %32 {offsets = [0, 0], sizes = [16, 32], strides = [1, 1]} : vector<16x96xf32> to vector<16x32xf32>
    %34 = vector.shape_cast %33 : vector<16x32xf32> to vector<2x8x32xf32>
    %35 = vector.extract_strided_slice %32 {offsets = [0, 32], sizes = [16, 32], strides = [1, 1]} : vector<16x96xf32> to vector<16x32xf32>
    %36 = vector.shape_cast %35 : vector<16x32xf32> to vector<2x8x32xf32>
    %37 = vector.extract_strided_slice %32 {offsets = [0, 64], sizes = [16, 32], strides = [1, 1]} : vector<16x96xf32> to vector<16x32xf32>
    %38 = vector.shape_cast %37 : vector<16x32xf32> to vector<2x8x32xf32>
    %39 = vector.extract_strided_slice %34 {offsets = [0, 0, 0], sizes = [2, 8, 8], strides = [1, 1, 1]} : vector<2x8x32xf32> to vector<2x8x8xf32>
    %40 = vector.extract_strided_slice %34 {offsets = [0, 0, 8], sizes = [2, 8, 8], strides = [1, 1, 1]} : vector<2x8x32xf32> to vector<2x8x8xf32>
    %41 = vector.extract_strided_slice %34 {offsets = [0, 0, 16], sizes = [2, 8, 8], strides = [1, 1, 1]} : vector<2x8x32xf32> to vector<2x8x8xf32>
    %42 = vector.extract_strided_slice %34 {offsets = [0, 0, 24], sizes = [2, 8, 8], strides = [1, 1, 1]} : vector<2x8x32xf32> to vector<2x8x8xf32>
    %43 = tpu.concatenate %39, %40, %41, %42 in 0 : vector<2x8x8xf32>, vector<2x8x8xf32>, vector<2x8x8xf32>, vector<2x8x8xf32> -> vector<8x8x8xf32>
    %44 = vector.extract_strided_slice %36 {offsets = [0, 0, 0], sizes = [2, 8, 8], strides = [1, 1, 1]} : vector<2x8x32xf32> to vector<2x8x8xf32>
    %45 = vector.extract_strided_slice %36 {offsets = [0, 0, 8], sizes = [2, 8, 8], strides = [1, 1, 1]} : vector<2x8x32xf32> to vector<2x8x8xf32>
    %46 = vector.extract_strided_slice %36 {offsets = [0, 0, 16], sizes = [2, 8, 8], strides = [1, 1, 1]} : vector<2x8x32xf32> to vector<2x8x8xf32>
    %47 = vector.extract_strided_slice %36 {offsets = [0, 0, 24], sizes = [2, 8, 8], strides = [1, 1, 1]} : vector<2x8x32xf32> to vector<2x8x8xf32>
    %48 = tpu.concatenate %44, %45, %46, %47 in 0 : vector<2x8x8xf32>, vector<2x8x8xf32>, vector<2x8x8xf32>, vector<2x8x8xf32> -> vector<8x8x8xf32>
    %49 = vector.extract_strided_slice %38 {offsets = [0, 0, 0], sizes = [2, 8, 8], strides = [1, 1, 1]} : vector<2x8x32xf32> to vector<2x8x8xf32>
    %50 = vector.extract_strided_slice %38 {offsets = [0, 0, 8], sizes = [2, 8, 8], strides = [1, 1, 1]} : vector<2x8x32xf32> to vector<2x8x8xf32>
    %51 = vector.extract_strided_slice %38 {offsets = [0, 0, 16], sizes = [2, 8, 8], strides = [1, 1, 1]} : vector<2x8x32xf32> to vector<2x8x8xf32>
    %52 = vector.extract_strided_slice %38 {offsets = [0, 0, 24], sizes = [2, 8, 8], strides = [1, 1, 1]} : vector<2x8x32xf32> to vector<2x8x8xf32>
    %53 = tpu.concatenate %49, %50, %51, %52 in 0 : vector<2x8x8xf32>, vector<2x8x8xf32>, vector<2x8x8xf32>, vector<2x8x8xf32> -> vector<8x8x8xf32>
    %54 = arith.truncf %43 : vector<8x8x8xf32> to vector<8x8x8xbf16>
    %55 = arith.truncf %48 : vector<8x8x8xf32> to vector<8x8x8xbf16>
    "tpu.trace_start"() <{level = 10 : i32, message = "bqd,bkd->bqk"}> : () -> ()
    %cst_18 = arith.constant dense<0.000000e+00> : vector<8x8x8xf32>
    %56 = tpu.matmul %54, %55, %cst_18 {dimension_numbers = #tpu.dot_dimension_numbers<[2], [2], [1], [1], [0, 0, 0, 1, 1, 1], [0], [0]>} : vector<8x8x8xbf16>, vector<8x8x8xbf16>, vector<8x8x8xf32> -> vector<8x8x8xf32>
    "tpu.trace_stop"() : () -> ()
    %57 = arith.addf %56, %14 : vector<8x8x8xf32>
    %cst_19 = arith.constant dense<0xFF800000> : vector<8x8xf32>
    %58 = vector.multi_reduction <maximumf>, %57, %cst_19 [2] : vector<8x8x8xf32> to vector<8x8xf32>
    %59 = vector.shape_cast %58 : vector<8x8xf32> to vector<8x8x1xf32>
    %60 = vector.broadcast %59 : vector<8x8x1xf32> to vector<8x8x8xf32>
    %61 = arith.subf %57, %60 : vector<8x8x8xf32>
    %62 = math.exp %61 : vector<8x8x8xf32>
    %cst_20 = arith.constant dense<0.000000e+00> : vector<8x8xf32>
    %63 = vector.multi_reduction <add>, %62, %cst_20 [2] : vector<8x8x8xf32> to vector<8x8xf32>
    %64 = vector.shape_cast %63 : vector<8x8xf32> to vector<8x8x1xf32>
    %65 = tpu.reciprocal %64 : vector<8x8x1xf32> -> vector<8x8x1xf32>
    %66 = vector.broadcast %65 : vector<8x8x1xf32> to vector<8x8x8xf32>
    %67 = arith.mulf %62, %66 : vector<8x8x8xf32>
    %68 = arith.truncf %67 : vector<8x8x8xf32> to vector<8x8x8xbf16>
    %69 = arith.truncf %53 : vector<8x8x8xf32> to vector<8x8x8xbf16>
    "tpu.trace_start"() <{level = 10 : i32, message = "bqk,bkd->bqd"}> : () -> ()
    %cst_21 = arith.constant dense<0.000000e+00> : vector<8x8x8xf32>
    %70 = tpu.matmul %68, %69, %cst_21 {dimension_numbers = #tpu.dot_dimension_numbers<[2], [1], [1], [2], [0, 0, 0, 1, 1, 2], [0], [0]>} : vector<8x8x8xbf16>, vector<8x8x8xbf16>, vector<8x8x8xf32> -> vector<8x8x8xf32>
    "tpu.trace_stop"() : () -> ()
    %71 = vector.extract_strided_slice %70 {offsets = [0, 0, 0], sizes = [2, 8, 8], strides = [1, 1, 1]} : vector<8x8x8xf32> to vector<2x8x8xf32>
    %72 = vector.extract_strided_slice %70 {offsets = [2, 0, 0], sizes = [2, 8, 8], strides = [1, 1, 1]} : vector<8x8x8xf32> to vector<2x8x8xf32>
    %73 = vector.extract_strided_slice %70 {offsets = [4, 0, 0], sizes = [2, 8, 8], strides = [1, 1, 1]} : vector<8x8x8xf32> to vector<2x8x8xf32>
    %74 = vector.extract_strided_slice %70 {offsets = [6, 0, 0], sizes = [2, 8, 8], strides = [1, 1, 1]} : vector<8x8x8xf32> to vector<2x8x8xf32>
    %75 = tpu.concatenate %71, %72, %73, %74 in 2 : vector<2x8x8xf32>, vector<2x8x8xf32>, vector<2x8x8xf32>, vector<2x8x8xf32> -> vector<2x8x32xf32>
    %76 = vector.shape_cast %75 : vector<2x8x32xf32> to vector<16x32xf32>
    %77 = arith.truncf %76 : vector<16x32xf32> to vector<16x32xbf16>
    %c0_22 = arith.constant 0 : index
    %c0_23 = arith.constant 0 : index
    %c0_24 = arith.constant 0 : index
    %78 = vector.load %arg5[%c0_22, %c0_23, %c0_24] : memref<2x32x32xbf16, #tpu.memory_space<vmem>>, vector<1x32x32xbf16>
    %79 = vector.shape_cast %78 : vector<1x32x32xbf16> to vector<32x32xbf16>
    %cst_25 = arith.constant dense<0.000000e+00> : vector<16x32xf32>
    %80 = tpu.matmul %77, %79, %cst_25 {dimension_numbers = #tpu.dot_dimension_numbers<[1], [0], [0], [1], [0, 0, 1, 1], [], []>} : vector<16x32xbf16>, vector<32x32xbf16>, vector<16x32xf32> -> vector<16x32xf32>
    %81 = arith.addf %9, %80 : vector<16x32xf32>
    %82 = arith.mulf %81, %81 : vector<16x32xf32>
    %cst_26 = arith.constant dense<0.000000e+00> : vector<16xf32>
    %83 = vector.multi_reduction <add>, %82, %cst_26 [1] : vector<16x32xf32> to vector<16xf32>
    %84 = vector.shape_cast %83 : vector<16xf32> to vector<16x1xf32>
    %cst_27 = arith.constant 3.200000e+01 : f32
    %85 = vector.broadcast %cst_27 : f32 to vector<16x1xf32>
    %86 = arith.divf %84, %85 : vector<16x1xf32>
    %cst_28 = arith.constant 9.99999997E-7 : f32
    %87 = vector.broadcast %cst_28 : f32 to vector<16x1xf32>
    %88 = arith.addf %86, %87 : vector<16x1xf32>
    %89 = math.rsqrt %88 : vector<16x1xf32>
    %90 = vector.broadcast %89 : vector<16x1xf32> to vector<16x32xf32>
    %91 = arith.mulf %81, %90 : vector<16x32xf32>
    %c0_29 = arith.constant 0 : index
    %c0_30 = arith.constant 0 : index
    %c0_31 = arith.constant 0 : index
    %92 = vector.load %arg6[%c0_29, %c0_30, %c0_31] : memref<2x1x32xf32, #tpu.memory_space<vmem>>, vector<1x1x32xf32>
    %93 = vector.shape_cast %92 : vector<1x1x32xf32> to vector<1x32xf32>
    %94 = vector.broadcast %93 : vector<1x32xf32> to vector<16x32xf32>
    %95 = arith.mulf %91, %94 : vector<16x32xf32>
    %96 = arith.truncf %95 : vector<16x32xf32> to vector<16x32xbf16>
    %c0_32 = arith.constant 0 : index
    %c0_33 = arith.constant 0 : index
    %c0_34 = arith.constant 0 : index
    %97 = vector.load %arg7[%c0_32, %c0_33, %c0_34] : memref<2x32x64xbf16, #tpu.memory_space<vmem>>, vector<1x32x64xbf16>
    %98 = vector.shape_cast %97 : vector<1x32x64xbf16> to vector<32x64xbf16>
    %cst_35 = arith.constant dense<0.000000e+00> : vector<16x64xf32>
    %99 = tpu.matmul %96, %98, %cst_35 {dimension_numbers = #tpu.dot_dimension_numbers<[1], [0], [0], [1], [0, 0, 1, 1], [], []>} : vector<16x32xbf16>, vector<32x64xbf16>, vector<16x64xf32> -> vector<16x64xf32>
    %cst_36 = arith.constant 0.000000e+00 : f32
    %100 = vector.broadcast %cst_36 : f32 to vector<16x64xf32>
    %101 = arith.maximumf %99, %100 : vector<16x64xf32>
    %102 = arith.truncf %101 : vector<16x64xf32> to vector<16x64xbf16>
    %c0_37 = arith.constant 0 : index
    %c0_38 = arith.constant 0 : index
    %c0_39 = arith.constant 0 : index
    %103 = vector.load %arg8[%c0_37, %c0_38, %c0_39] : memref<2x64x32xbf16, #tpu.memory_space<vmem>>, vector<1x64x32xbf16>
    %104 = vector.shape_cast %103 : vector<1x64x32xbf16> to vector<64x32xbf16>
    %cst_40 = arith.constant dense<0.000000e+00> : vector<16x32xf32>
    %105 = tpu.matmul %102, %104, %cst_40 {dimension_numbers = #tpu.dot_dimension_numbers<[1], [0], [0], [1], [0, 0, 1, 1], [], []>} : vector<16x64xbf16>, vector<64x32xbf16>, vector<16x32xf32> -> vector<16x32xf32>
    %106 = arith.addf %81, %105 : vector<16x32xf32>
    %107 = arith.mulf %106, %106 : vector<16x32xf32>
    %cst_41 = arith.constant dense<0.000000e+00> : vector<16xf32>
    %108 = vector.multi_reduction <add>, %107, %cst_41 [1] : vector<16x32xf32> to vector<16xf32>
    %109 = vector.shape_cast %108 : vector<16xf32> to vector<16x1xf32>
    %cst_42 = arith.constant 3.200000e+01 : f32
    %110 = vector.broadcast %cst_42 : f32 to vector<16x1xf32>
    %111 = arith.divf %109, %110 : vector<16x1xf32>
    %cst_43 = arith.constant 9.99999997E-7 : f32
    %112 = vector.broadcast %cst_43 : f32 to vector<16x1xf32>
    %113 = arith.addf %111, %112 : vector<16x1xf32>
    %114 = math.rsqrt %113 : vector<16x1xf32>
    %115 = vector.broadcast %114 : vector<16x1xf32> to vector<16x32xf32>
    %116 = arith.mulf %106, %115 : vector<16x32xf32>
    %c1 = arith.constant 1 : index
    %c0_44 = arith.constant 0 : index
    %c0_45 = arith.constant 0 : index
    %117 = vector.load %arg3[%c1, %c0_44, %c0_45] : memref<2x1x32xf32, #tpu.memory_space<vmem>>, vector<1x1x32xf32>
    %118 = vector.shape_cast %117 : vector<1x1x32xf32> to vector<1x32xf32>
    %119 = vector.broadcast %118 : vector<1x32xf32> to vector<16x32xf32>
    %120 = arith.mulf %116, %119 : vector<16x32xf32>
    %121 = arith.truncf %120 : vector<16x32xf32> to vector<16x32xbf16>
    %c1_46 = arith.constant 1 : index
    %c0_47 = arith.constant 0 : index
    %c0_48 = arith.constant 0 : index
    %122 = vector.load %arg4[%c1_46, %c0_47, %c0_48] : memref<2x32x96xbf16, #tpu.memory_space<vmem>>, vector<1x32x96xbf16>
    %123 = vector.shape_cast %122 : vector<1x32x96xbf16> to vector<32x96xbf16>
    %cst_49 = arith.constant dense<0.000000e+00> : vector<16x96xf32>
    %124 = tpu.matmul %121, %123, %cst_49 {dimension_numbers = #tpu.dot_dimension_numbers<[1], [0], [0], [1], [0, 0, 1, 1], [], []>} : vector<16x32xbf16>, vector<32x96xbf16>, vector<16x96xf32> -> vector<16x96xf32>
    %125 = vector.extract_strided_slice %124 {offsets = [0, 0], sizes = [16, 32], strides = [1, 1]} : vector<16x96xf32> to vector<16x32xf32>
    %126 = vector.shape_cast %125 : vector<16x32xf32> to vector<2x8x32xf32>
    %127 = vector.extract_strided_slice %124 {offsets = [0, 32], sizes = [16, 32], strides = [1, 1]} : vector<16x96xf32> to vector<16x32xf32>
    %128 = vector.shape_cast %127 : vector<16x32xf32> to vector<2x8x32xf32>
    %129 = vector.extract_strided_slice %124 {offsets = [0, 64], sizes = [16, 32], strides = [1, 1]} : vector<16x96xf32> to vector<16x32xf32>
    %130 = vector.shape_cast %129 : vector<16x32xf32> to vector<2x8x32xf32>
    %131 = vector.extract_strided_slice %126 {offsets = [0, 0, 0], sizes = [2, 8, 8], strides = [1, 1, 1]} : vector<2x8x32xf32> to vector<2x8x8xf32>
    %132 = vector.extract_strided_slice %126 {offsets = [0, 0, 8], sizes = [2, 8, 8], strides = [1, 1, 1]} : vector<2x8x32xf32> to vector<2x8x8xf32>
    %133 = vector.extract_strided_slice %126 {offsets = [0, 0, 16], sizes = [2, 8, 8], strides = [1, 1, 1]} : vector<2x8x32xf32> to vector<2x8x8xf32>
    %134 = vector.extract_strided_slice %126 {offsets = [0, 0, 24], sizes = [2, 8, 8], strides = [1, 1, 1]} : vector<2x8x32xf32> to vector<2x8x8xf32>
    %135 = tpu.concatenate %131, %132, %133, %134 in 0 : vector<2x8x8xf32>, vector<2x8x8xf32>, vector<2x8x8xf32>, vector<2x8x8xf32> -> vector<8x8x8xf32>
    %136 = vector.extract_strided_slice %128 {offsets = [0, 0, 0], sizes = [2, 8, 8], strides = [1, 1, 1]} : vector<2x8x32xf32> to vector<2x8x8xf32>
    %137 = vector.extract_strided_slice %128 {offsets = [0, 0, 8], sizes = [2, 8, 8], strides = [1, 1, 1]} : vector<2x8x32xf32> to vector<2x8x8xf32>
    %138 = vector.extract_strided_slice %128 {offsets = [0, 0, 16], sizes = [2, 8, 8], strides = [1, 1, 1]} : vector<2x8x32xf32> to vector<2x8x8xf32>
    %139 = vector.extract_strided_slice %128 {offsets = [0, 0, 24], sizes = [2, 8, 8], strides = [1, 1, 1]} : vector<2x8x32xf32> to vector<2x8x8xf32>
    %140 = tpu.concatenate %136, %137, %138, %139 in 0 : vector<2x8x8xf32>, vector<2x8x8xf32>, vector<2x8x8xf32>, vector<2x8x8xf32> -> vector<8x8x8xf32>
    %141 = vector.extract_strided_slice %130 {offsets = [0, 0, 0], sizes = [2, 8, 8], strides = [1, 1, 1]} : vector<2x8x32xf32> to vector<2x8x8xf32>
    %142 = vector.extract_strided_slice %130 {offsets = [0, 0, 8], sizes = [2, 8, 8], strides = [1, 1, 1]} : vector<2x8x32xf32> to vector<2x8x8xf32>
    %143 = vector.extract_strided_slice %130 {offsets = [0, 0, 16], sizes = [2, 8, 8], strides = [1, 1, 1]} : vector<2x8x32xf32> to vector<2x8x8xf32>
    %144 = vector.extract_strided_slice %130 {offsets = [0, 0, 24], sizes = [2, 8, 8], strides = [1, 1, 1]} : vector<2x8x32xf32> to vector<2x8x8xf32>
    %145 = tpu.concatenate %141, %142, %143, %144 in 0 : vector<2x8x8xf32>, vector<2x8x8xf32>, vector<2x8x8xf32>, vector<2x8x8xf32> -> vector<8x8x8xf32>
    %146 = arith.truncf %135 : vector<8x8x8xf32> to vector<8x8x8xbf16>
    %147 = arith.truncf %140 : vector<8x8x8xf32> to vector<8x8x8xbf16>
    "tpu.trace_start"() <{level = 10 : i32, message = "bqd,bkd->bqk"}> : () -> ()
    %cst_50 = arith.constant dense<0.000000e+00> : vector<8x8x8xf32>
    %148 = tpu.matmul %146, %147, %cst_50 {dimension_numbers = #tpu.dot_dimension_numbers<[2], [2], [1], [1], [0, 0, 0, 1, 1, 1], [0], [0]>} : vector<8x8x8xbf16>, vector<8x8x8xbf16>, vector<8x8x8xf32> -> vector<8x8x8xf32>
    "tpu.trace_stop"() : () -> ()
    %149 = arith.addf %148, %14 : vector<8x8x8xf32>
    %cst_51 = arith.constant dense<0xFF800000> : vector<8x8xf32>
    %150 = vector.multi_reduction <maximumf>, %149, %cst_51 [2] : vector<8x8x8xf32> to vector<8x8xf32>
    %151 = vector.shape_cast %150 : vector<8x8xf32> to vector<8x8x1xf32>
    %152 = vector.broadcast %151 : vector<8x8x1xf32> to vector<8x8x8xf32>
    %153 = arith.subf %149, %152 : vector<8x8x8xf32>
    %154 = math.exp %153 : vector<8x8x8xf32>
    %cst_52 = arith.constant dense<0.000000e+00> : vector<8x8xf32>
    %155 = vector.multi_reduction <add>, %154, %cst_52 [2] : vector<8x8x8xf32> to vector<8x8xf32>
    %156 = vector.shape_cast %155 : vector<8x8xf32> to vector<8x8x1xf32>
    %157 = tpu.reciprocal %156 : vector<8x8x1xf32> -> vector<8x8x1xf32>
    %158 = vector.broadcast %157 : vector<8x8x1xf32> to vector<8x8x8xf32>
    %159 = arith.mulf %154, %158 : vector<8x8x8xf32>
    %160 = arith.truncf %159 : vector<8x8x8xf32> to vector<8x8x8xbf16>
    %161 = arith.truncf %145 : vector<8x8x8xf32> to vector<8x8x8xbf16>
    "tpu.trace_start"() <{level = 10 : i32, message = "bqk,bkd->bqd"}> : () -> ()
    %cst_53 = arith.constant dense<0.000000e+00> : vector<8x8x8xf32>
    %162 = tpu.matmul %160, %161, %cst_53 {dimension_numbers = #tpu.dot_dimension_numbers<[2], [1], [1], [2], [0, 0, 0, 1, 1, 2], [0], [0]>} : vector<8x8x8xbf16>, vector<8x8x8xbf16>, vector<8x8x8xf32> -> vector<8x8x8xf32>
    "tpu.trace_stop"() : () -> ()
    %163 = vector.extract_strided_slice %162 {offsets = [0, 0, 0], sizes = [2, 8, 8], strides = [1, 1, 1]} : vector<8x8x8xf32> to vector<2x8x8xf32>
    %164 = vector.extract_strided_slice %162 {offsets = [2, 0, 0], sizes = [2, 8, 8], strides = [1, 1, 1]} : vector<8x8x8xf32> to vector<2x8x8xf32>
    %165 = vector.extract_strided_slice %162 {offsets = [4, 0, 0], sizes = [2, 8, 8], strides = [1, 1, 1]} : vector<8x8x8xf32> to vector<2x8x8xf32>
    %166 = vector.extract_strided_slice %162 {offsets = [6, 0, 0], sizes = [2, 8, 8], strides = [1, 1, 1]} : vector<8x8x8xf32> to vector<2x8x8xf32>
    %167 = tpu.concatenate %163, %164, %165, %166 in 2 : vector<2x8x8xf32>, vector<2x8x8xf32>, vector<2x8x8xf32>, vector<2x8x8xf32> -> vector<2x8x32xf32>
    %168 = vector.shape_cast %167 : vector<2x8x32xf32> to vector<16x32xf32>
    %169 = arith.truncf %168 : vector<16x32xf32> to vector<16x32xbf16>
    %c1_54 = arith.constant 1 : index
    %c0_55 = arith.constant 0 : index
    %c0_56 = arith.constant 0 : index
    %170 = vector.load %arg5[%c1_54, %c0_55, %c0_56] : memref<2x32x32xbf16, #tpu.memory_space<vmem>>, vector<1x32x32xbf16>
    %171 = vector.shape_cast %170 : vector<1x32x32xbf16> to vector<32x32xbf16>
    %cst_57 = arith.constant dense<0.000000e+00> : vector<16x32xf32>
    %172 = tpu.matmul %169, %171, %cst_57 {dimension_numbers = #tpu.dot_dimension_numbers<[1], [0], [0], [1], [0, 0, 1, 1], [], []>} : vector<16x32xbf16>, vector<32x32xbf16>, vector<16x32xf32> -> vector<16x32xf32>
    %173 = arith.addf %106, %172 : vector<16x32xf32>
    %174 = arith.mulf %173, %173 : vector<16x32xf32>
    %cst_58 = arith.constant dense<0.000000e+00> : vector<16xf32>
    %175 = vector.multi_reduction <add>, %174, %cst_58 [1] : vector<16x32xf32> to vector<16xf32>
    %176 = vector.shape_cast %175 : vector<16xf32> to vector<16x1xf32>
    %cst_59 = arith.constant 3.200000e+01 : f32
    %177 = vector.broadcast %cst_59 : f32 to vector<16x1xf32>
    %178 = arith.divf %176, %177 : vector<16x1xf32>
    %cst_60 = arith.constant 9.99999997E-7 : f32
    %179 = vector.broadcast %cst_60 : f32 to vector<16x1xf32>
    %180 = arith.addf %178, %179 : vector<16x1xf32>
    %181 = math.rsqrt %180 : vector<16x1xf32>
    %182 = vector.broadcast %181 : vector<16x1xf32> to vector<16x32xf32>
    %183 = arith.mulf %173, %182 : vector<16x32xf32>
    %c1_61 = arith.constant 1 : index
    %c0_62 = arith.constant 0 : index
    %c0_63 = arith.constant 0 : index
    %184 = vector.load %arg6[%c1_61, %c0_62, %c0_63] : memref<2x1x32xf32, #tpu.memory_space<vmem>>, vector<1x1x32xf32>
    %185 = vector.shape_cast %184 : vector<1x1x32xf32> to vector<1x32xf32>
    %186 = vector.broadcast %185 : vector<1x32xf32> to vector<16x32xf32>
    %187 = arith.mulf %183, %186 : vector<16x32xf32>
    %188 = arith.truncf %187 : vector<16x32xf32> to vector<16x32xbf16>
    %c1_64 = arith.constant 1 : index
    %c0_65 = arith.constant 0 : index
    %c0_66 = arith.constant 0 : index
    %189 = vector.load %arg7[%c1_64, %c0_65, %c0_66] : memref<2x32x64xbf16, #tpu.memory_space<vmem>>, vector<1x32x64xbf16>
    %190 = vector.shape_cast %189 : vector<1x32x64xbf16> to vector<32x64xbf16>
    %cst_67 = arith.constant dense<0.000000e+00> : vector<16x64xf32>
    %191 = tpu.matmul %188, %190, %cst_67 {dimension_numbers = #tpu.dot_dimension_numbers<[1], [0], [0], [1], [0, 0, 1, 1], [], []>} : vector<16x32xbf16>, vector<32x64xbf16>, vector<16x64xf32> -> vector<16x64xf32>
    %cst_68 = arith.constant 0.000000e+00 : f32
    %192 = vector.broadcast %cst_68 : f32 to vector<16x64xf32>
    %193 = arith.maximumf %191, %192 : vector<16x64xf32>
    %194 = arith.truncf %193 : vector<16x64xf32> to vector<16x64xbf16>
    %c1_69 = arith.constant 1 : index
    %c0_70 = arith.constant 0 : index
    %c0_71 = arith.constant 0 : index
    %195 = vector.load %arg8[%c1_69, %c0_70, %c0_71] : memref<2x64x32xbf16, #tpu.memory_space<vmem>>, vector<1x64x32xbf16>
    %196 = vector.shape_cast %195 : vector<1x64x32xbf16> to vector<64x32xbf16>
    %cst_72 = arith.constant dense<0.000000e+00> : vector<16x32xf32>
    %197 = tpu.matmul %194, %196, %cst_72 {dimension_numbers = #tpu.dot_dimension_numbers<[1], [0], [0], [1], [0, 0, 1, 1], [], []>} : vector<16x64xbf16>, vector<64x32xbf16>, vector<16x32xf32> -> vector<16x32xf32>
    %198 = arith.addf %173, %197 : vector<16x32xf32>
    %199 = vector.shape_cast %198 : vector<16x32xf32> to vector<2x8x32xf32>
    %200 = vector.extract_strided_slice %199 {offsets = [0, 0, 0], sizes = [2, 1, 32], strides = [1, 1, 1]} : vector<2x8x32xf32> to vector<2x1x32xf32>
    %201 = vector.shape_cast %200 : vector<2x1x32xf32> to vector<2x32xf32>
    %202 = arith.mulf %201, %201 : vector<2x32xf32>
    %cst_73 = arith.constant dense<0.000000e+00> : vector<2xf32>
    %203 = vector.multi_reduction <add>, %202, %cst_73 [1] : vector<2x32xf32> to vector<2xf32>
    %204 = vector.shape_cast %203 : vector<2xf32> to vector<2x1xf32>
    %cst_74 = arith.constant 3.200000e+01 : f32
    %205 = vector.broadcast %cst_74 : f32 to vector<2x1xf32>
    %206 = arith.divf %204, %205 : vector<2x1xf32>
    %cst_75 = arith.constant 9.99999997E-7 : f32
    %207 = vector.broadcast %cst_75 : f32 to vector<2x1xf32>
    %208 = arith.addf %206, %207 : vector<2x1xf32>
    %209 = math.rsqrt %208 : vector<2x1xf32>
    %210 = vector.broadcast %209 : vector<2x1xf32> to vector<2x32xf32>
    %211 = arith.mulf %201, %210 : vector<2x32xf32>
    %c0_76 = arith.constant 0 : index
    %c0_77 = arith.constant 0 : index
    %212 = vector.load %arg9[%c0_76, %c0_77] : memref<1x32xf32, #tpu.memory_space<vmem>>, vector<1x32xf32>
    %213 = vector.broadcast %212 : vector<1x32xf32> to vector<2x32xf32>
    %214 = arith.mulf %211, %213 : vector<2x32xf32>
    %215 = arith.truncf %214 : vector<2x32xf32> to vector<2x32xbf16>
    %c0_78 = arith.constant 0 : index
    %c0_79 = arith.constant 0 : index
    %216 = vector.load %arg10[%c0_78, %c0_79] : memref<32x128xbf16, #tpu.memory_space<vmem>>, vector<32x128xbf16>
    %cst_80 = arith.constant dense<0.000000e+00> : vector<2x128xf32>
    %217 = tpu.matmul %215, %216, %cst_80 {dimension_numbers = #tpu.dot_dimension_numbers<[1], [0], [0], [1], [0, 0, 1, 1], [], []>} : vector<2x32xbf16>, vector<32x128xbf16>, vector<2x128xf32> -> vector<2x128xf32>
    %c0_81 = arith.constant 0 : index
    %c0_82 = arith.constant 0 : index
    %218 = vector.load %arg11[%c0_81, %c0_82] : memref<1x128xf32, #tpu.memory_space<vmem>>, vector<1x128xf32>
    %219 = vector.broadcast %218 : vector<1x128xf32> to vector<2x128xf32>
    %220 = arith.addf %217, %219 : vector<2x128xf32>
    %c0_83 = arith.constant 0 : index
    %c0_84 = arith.constant 0 : index
    %221 = vector.load %arg12[%c0_83, %c0_84] : memref<2x128xf32, #tpu.memory_space<vmem>>, vector<2x128xf32>
    tpu.vector_store %arg12[%c0_83, %c0_84], %220 {strides = array<i32>} : memref<2x128xf32, #tpu.memory_space<vmem>>, vector<2x128xf32>,
    return
  }
}

</mosaic_0001>

<llo_original>
// kernel: squeeze.0
$region0: #{squeeze.0}
  %s0 = inlined_call_operand.vmem [shape: s32[2,8], index: 0, kind: input, shape index: {}]
  %s1 = inlined_call_operand.vmem [shape: s32[16,1], index: 1, kind: output, shape index: {}]
  $region1: #{squeeze.0} parent=0
    #allocation0 [shape = 'u8[4096]{0}', space=vmem, size = 0x1000, scoped, tag = 'scoped mem for input reshape']
    %s3 = sshllo.u32 0, 2
    %v4 = vld [vmem:[%s0] sm:%s3]
    %5 = vst [vmem:[#allocation0] sm:%s3] %v4
    %v6 = vld [vmem:[#allocation0] sm:$0x3]
    %vm7 = vcmask 7168
    %8 = vst.msk [vmem:[%s1] ss:$8 sm:$0x3] %vm7, %v6
    %v9 = vld [vmem:[#allocation0] sm:$0x3]
    %10 = vrot.lane.b32.xlu0 %v9, 127
    %v11 = vpop.permute.xlu0 %10
    %vm12 = vcmask 7168
    %s13 = scalar_lea.vmem %s1, 1
    %14 = vst.msk [vmem:[%s13] ss:$8 sm:$0x3] %vm12, %v11
    %v15 = vld [vmem:[#allocation0] sm:$0x3]
    %16 = vrot.lane.b32.xlu0 %v15, 126
    %v17 = vpop.permute.xlu0 %16
    %vm18 = vcmask 7168
    %s19 = scalar_lea.vmem %s1, 2
    %20 = vst.msk [vmem:[%s19] ss:$8 sm:$0x3] %vm18, %v17
    %v21 = vld [vmem:[#allocation0] sm:$0x3]
    %22 = vrot.lane.b32.xlu0 %v21, 125
    %v23 = vpop.permute.xlu0 %22
    %vm24 = vcmask 7168
    %s25 = scalar_lea.vmem %s1, 3
    %26 = vst.msk [vmem:[%s25] ss:$8 sm:$0x3] %vm24, %v23
    %v27 = vld [vmem:[#allocation0] sm:$0x3]
    %28 = vrot.lane.b32.xlu0 %v27, 124
    %v29 = vpop.permute.xlu0 %28
    %vm30 = vcmask 7168
    %s31 = scalar_lea.vmem %s1, 4
    %32 = vst.msk [vmem:[%s31] ss:$8 sm:$0x3] %vm30, %v29
    %v33 = vld [vmem:[#allocation0] sm:$0x3]
    %34 = vrot.lane.b32.xlu0 %v33, 123
    %v35 = vpop.permute.xlu0 %34
    %vm36 = vcmask 7168
    %s37 = scalar_lea.vmem %s1, 5
    %38 = vst.msk [vmem:[%s37] ss:$8 sm:$0x3] %vm36, %v35
    %v39 = vld [vmem:[#allocation0] sm:$0x3]
    %40 = vrot.lane.b32.xlu0 %v39, 122
    %v41 = vpop.permute.xlu0 %40
    %vm42 = vcmask 7168
    %s43 = scalar_lea.vmem %s1, 6
    %44 = vst.msk [vmem:[%s43] ss:$8 sm:$0x3] %vm42, %v41
    %v45 = vld [vmem:[#allocation0] sm:$0x3]
    %46 = vrot.lane.b32.xlu0 %v45, 121
    %v47 = vpop.permute.xlu0 %46
    %vm48 = vcmask 7168
    %s49 = scalar_lea.vmem %s1, 7
    %50 = vst.msk [vmem:[%s49] ss:$8 sm:$0x3] %vm48, %v47

// kernel: _lambda_.1
$region0: #{_lambda_.1}
  #allocation0 [shape = 'u32[]', space=smem, size = 0x4, offset = 0x4, fixed_abs, tag = 'smem constant byte address 0x4 - core index']
  #allocation1 [shape = 'u32[144,128]{1,0:T(1,128)}', space=vmem, size = 0x12000, scoped, tag = 'internal scratch']
  %s0 = inlined_call_operand.vmem [shape: s32[16,1], index: 0, kind: input, shape index: {}]
  %s1 = inlined_call_operand.hbm [shape: bf16[384,32], index: 1, kind: input, shape index: {}]
  %s2 = inlined_call_operand.hbm [shape: f32[4,8,8], index: 2, kind: input, shape index: {}]
  %s3 = inlined_call_operand.vmem [shape: f32[2,1,32], index: 3, kind: input, shape index: {}, may-alias: {3,6}]
  %s4 = inlined_call_operand.hbm [shape: bf16[2,32,96], index: 4, kind: input, shape index: {}]
  %s5 = inlined_call_operand.hbm [shape: bf16[2,32,32], index: 5, kind: input, shape index: {}]
  %s6 = inlined_call_operand.vmem [shape: f32[2,1,32], index: 6, kind: input, shape index: {}, may-alias: {3,6}]
  %s7 = inlined_call_operand.hbm [shape: bf16[2,32,64], index: 7, kind: input, shape index: {}]
  %s8 = inlined_call_operand.vmem [shape: bf16[2,64,32], index: 8, kind: input, shape index: {}]
  %s9 = inlined_call_operand.vmem [shape: f32[1,32], index: 9, kind: input, shape index: {}]
  %s10 = inlined_call_operand.vmem [shape: bf16[32,128], index: 10, kind: input, shape index: {}]
  %s11 = inlined_call_operand.vmem [shape: f32[1,128], index: 11, kind: input, shape index: {}]
  %s12 = inlined_call_operand.hbm [shape: f32[2,128], index: 12, kind: output, shape index: {}]
  %s13 = sld [smem:[#allocation0]]
  $region78: #{_lambda_.1} parent=0
    _
  %s15 = ssub.s32 1, %s13
  %s16 = scalar_select 0, %s15, %s13
  $region1: #{_lambda_.1} parent=0
    #allocation2 [shape = 'u8[98304]{0}', space=vmem, size = 0x18000, scoped, tag = 'input window, operand 1, single buffered']
    #allocation3 [shape = 's32[1]{0}', space=sflag, size = 0x4, scoped, tag = 'scoped memory for _lambda_.1']
    #allocation4 [shape = 's32[1]{0}', space=sflag, size = 0x4, scoped, tag = 'scoped memory for _lambda_.1']
    #allocation5 [shape = 'u8[16384]{0}', space=vmem, size = 0x4000, scoped, tag = 'input window, operand 2, single buffered']
    #allocation6 [shape = 's32[1]{0}', space=sflag, size = 0x4, scoped, tag = 'scoped memory for _lambda_.1']
    #allocation7 [shape = 'u8[16384]{0}', space=vmem, size = 0x4000, scoped, tag = 'input window, operand 4, single buffered']
    #allocation8 [shape = 'u8[16384]{0}', space=vmem, size = 0x4000, scoped, tag = 'input window, operand 5, single buffered']
    #allocation9 [shape = 's32[1]{0}', space=sflag, size = 0x4, scoped, tag = 'scoped memory for _lambda_.1']
    #allocation10 [shape = 'u8[16384]{0}', space=vmem, size = 0x4000, scoped, tag = 'input window, operand 7, single buffered']
    #allocation11 [shape = 'u8[1024]{0}', space=vmem, size = 0x400, scoped, tag = 'output window, operand 0, single buffered']
    %17 = vsyncpa [#allocation3], 0
    %18 = vsyncpa [#allocation6], 0
    %19 = vsyncpa [#allocation9], 0
    %20 = vsyncpa [#allocation4], 0
    // Predicated region
    $region2: #{_lambda_.1} parent=1 // pred_check
      _
    $region3: #{_lambda_.1} parent=1 // pred_check_branch
      %22 = sbr.rel (0) target = $region5
    $region4: #{_lambda_.1} parent=1 // pred_region
      _
    $region5: #{_lambda_.1} parent=1 // pred_fallthru
      _
    // Predicated region
    $region6: #{_lambda_.1} parent=1 // pred_check
      _
    $region7: #{_lambda_.1} parent=1 // pred_check_branch
      %24 = sbr.rel (0) target = $region9
    $region8: #{_lambda_.1} parent=1 // pred_region
      %s26 = ssub.s32 3072, 3072
      %27 = vsyncadd [#allocation3], %s26
      %s28 = sshll.u32 [#allocation2], 4
      %s29 = int_to_ptr.vmem [resolvable:$true] %s28
      %34 = dma.hbm_to_vmem [thread:$0]  %s1, 3072, %s29, [#allocation3], 64, 64, 4
    $region9: #{_lambda_.1} parent=1 // pred_fallthru
      _
    // Predicated region
    $region10: #{_lambda_.1} parent=1 // pred_check
      _
    $region11: #{_lambda_.1} parent=1 // pred_check_branch
      %36 = sbr.rel (0) target = $region13
    $region12: #{_lambda_.1} parent=1 // pred_region
      %s38 = ssub.s32 512, 512
      %39 = vsyncadd [#allocation6], %s38
      %s40 = sshll.u32 [#allocation5], 4
      %s41 = int_to_ptr.vmem [resolvable:$true] %s40
      %46 = dma.hbm_to_vmem [thread:$0]  %s2, 512, %s41, [#allocation6], 128, 128, 8
    $region13: #{_lambda_.1} parent=1 // pred_fallthru
      _
    // Predicated region
    $region14: #{_lambda_.1} parent=1 // pred_check
      _
    $region15: #{_lambda_.1} parent=1 // pred_check_branch
      %48 = sbr.rel (0) target = $region17
    $region16: #{_lambda_.1} parent=1 // pred_region
      _
    $region17: #{_lambda_.1} parent=1 // pred_fallthru
      _
    // Predicated region
    $region18: #{_lambda_.1} parent=1 // pred_check
      _
    $region19: #{_lambda_.1} parent=1 // pred_check_branch
      %50 = sbr.rel (0) target = $region21
    $region20: #{_lambda_.1} parent=1 // pred_region
      %s52 = ssub.s32 512, 512
      %53 = vsyncadd [#allocation6], %s52
      %s54 = sshll.u32 [#allocation7], 4
      %s55 = int_to_ptr.vmem [resolvable:$true] %s54
      %60 = dma.hbm_to_vmem [thread:$0]  %s4, 512, %s55, [#allocation6], 64, 64, 4
    $region21: #{_lambda_.1} parent=1 // pred_fallthru
      _
    // Predicated region
    $region22: #{_lambda_.1} parent=1 // pred_check
      _
    $region23: #{_lambda_.1} parent=1 // pred_check_branch
      %62 = sbr.rel (0) target = $region25
    $region24: #{_lambda_.1} parent=1 // pred_region
      %s64 = ssub.s32 512, 512
      %65 = vsyncadd [#allocation9], %s64
      %s66 = sshll.u32 [#allocation8], 4
      %s67 = int_to_ptr.vmem [resolvable:$true] %s66
      %72 = dma.hbm_to_vmem [thread:$0]  %s5, 512, %s67, [#allocation9], 64, 64, 4
    $region25: #{_lambda_.1} parent=1 // pred_fallthru
      _
    // Predicated region
    $region26: #{_lambda_.1} parent=1 // pred_check
      _
    $region27: #{_lambda_.1} parent=1 // pred_check_branch
      %74 = sbr.rel (0) target = $region29
    $region28: #{_lambda_.1} parent=1 // pred_region
      _
    $region29: #{_lambda_.1} parent=1 // pred_fallthru
      _
    // Predicated region
    $region30: #{_lambda_.1} parent=1 // pred_check
      _
    $region31: #{_lambda_.1} parent=1 // pred_check_branch
      %76 = sbr.rel (0) target = $region33
    $region32: #{_lambda_.1} parent=1 // pred_region
      %s78 = ssub.s32 512, 512
      %79 = vsyncadd [#allocation9], %s78
      %s80 = sshll.u32 [#allocation10], 4
      %s81 = int_to_ptr.vmem [resolvable:$true] %s80
      %86 = dma.hbm_to_vmem [thread:$0]  %s7, 512, %s81, [#allocation9], 64, 64, 4
    $region33: #{_lambda_.1} parent=1 // pred_fallthru
      _
    // Predicated region
    $region34: #{_lambda_.1} parent=1 // pred_check
      _
    $region35: #{_lambda_.1} parent=1 // pred_check_branch
      %88 = sbr.rel (0) target = $region37
    $region36: #{_lambda_.1} parent=1 // pred_region
      _
    $region37: #{_lambda_.1} parent=1 // pred_fallthru
      _
    // Predicated region
    $region38: #{_lambda_.1} parent=1 // pred_check
      _
    $region39: #{_lambda_.1} parent=1 // pred_check_branch
      %90 = sbr.rel (0) target = $region41
    $region40: #{_lambda_.1} parent=1 // pred_region
      _
    $region41: #{_lambda_.1} parent=1 // pred_fallthru
      _
    // Predicated region
    $region42: #{_lambda_.1} parent=1 // pred_check
      _
    $region43: #{_lambda_.1} parent=1 // pred_check_branch
      %92 = sbr.rel (0) target = $region45
    $region44: #{_lambda_.1} parent=1 // pred_region
      _
    $region45: #{_lambda_.1} parent=1 // pred_fallthru
      _
    // Predicated region
    $region46: #{_lambda_.1} parent=1 // pred_check
      _
    $region47: #{_lambda_.1} parent=1 // pred_check_branch
      %94 = sbr.rel (0) target = $region49
    $region48: #{_lambda_.1} parent=1 // pred_region
      _
    $region49: #{_lambda_.1} parent=1 // pred_fallthru
      _
    // Predicated region
    $region50: #{_lambda_.1} parent=1 // pred_check
      _
    $region51: #{_lambda_.1} parent=1 // pred_check_branch
      %96 = sbr.rel (0) target = $region53
    $region52: #{_lambda_.1} parent=1 // pred_region
      %97 = dma.done [#allocation3], 3072
    $region53: #{_lambda_.1} parent=1 // pred_fallthru
      _
    // Predicated region
    $region54: #{_lambda_.1} parent=1 // pred_check
      _
    $region55: #{_lambda_.1} parent=1 // pred_check_branch
      %99 = sbr.rel (0) target = $region57
    $region56: #{_lambda_.1} parent=1 // pred_region
      %100 = dma.done [#allocation6], 512
    $region57: #{_lambda_.1} parent=1 // pred_fallthru
      _
    // Predicated region
    $region58: #{_lambda_.1} parent=1 // pred_check
      _
    $region59: #{_lambda_.1} parent=1 // pred_check_branch
      %102 = sbr.rel (0) target = $region61
    $region60: #{_lambda_.1} parent=1 // pred_region
      %103 = dma.done [#allocation6], 512
    $region61: #{_lambda_.1} parent=1 // pred_fallthru
      _
    // Predicated region
    $region62: #{_lambda_.1} parent=1 // pred_check
      _
    $region63: #{_lambda_.1} parent=1 // pred_check_branch
      %105 = sbr.rel (0) target = $region65
    $region64: #{_lambda_.1} parent=1 // pred_region
      %106 = dma.done [#allocation9], 512
    $region65: #{_lambda_.1} parent=1 // pred_fallthru
      _
    // Predicated region
    $region66: #{_lambda_.1} parent=1 // pred_check
      _
    $region67: #{_lambda_.1} parent=1 // pred_check_branch
      %108 = sbr.rel (0) target = $region69
    $region68: #{_lambda_.1} parent=1 // pred_region
      %109 = dma.done [#allocation9], 512
    $region69: #{_lambda_.1} parent=1 // pred_fallthru
      _
    %v111 = vld [vmem:[%s0] sm:$0xff]
    %v112 = vld [vmem:[%s0 + $0x8] sm:$0xff]
    %v113 = vlaneseq
    %v114 = vand.u32 %v113, 127
    %v115 = vadd.s32 %v114, 128
    %v116 = vadd.s32 %v114, 256
    %117 = vset.pattern.permute.xlu0 0
    %118 = vperm.xlu0 %117, %v111
    %v119 = vpop.permute.xlu0 %118
    %120 = vset.pattern.permute.xlu0 0
    %121 = vperm.xlu0 %120, %v112
    %v122 = vpop.permute.xlu0 %121
    %vm123 = vcmp.eq.s32.totalorder %v114, %v119
    %vm124 = vcmp.eq.s32.totalorder %v115, %v119
    %vm125 = vcmp.eq.s32.totalorder %v116, %v119
    %vm126 = vcmp.eq.s32.totalorder %v114, %v122
    %vm127 = vcmp.eq.s32.totalorder %v115, %v122
    %vm128 = vcmp.eq.s32.totalorder %v116, %v122
    %v129 = vsel %vm123, 1.0, 0.0
    %v130 = vsel %vm124, 1.0, 0.0
    %v131 = vsel %vm125, 1.0, 0.0
    %v132 = vsel %vm126, 1.0, 0.0
    %v133 = vsel %vm127, 1.0, 0.0
    %v134 = vsel %vm128, 1.0, 0.0
    %v135 = vpack.c.bf16 %v132, %v129
    %v136 = vpack.c.bf16 %v133, %v130
    %v137 = vpack.c.bf16 %v134, %v131
    %v138 = vld [vmem:[#allocation2] sm:$0xf]
    %v139 = vld [vmem:[#allocation2 + $0x4] sm:$0xf]
    %v140 = vld [vmem:[#allocation2 + $0x8] sm:$0xf]
    %v141 = vld [vmem:[#allocation2 + $0xc] sm:$0xf]
    %v142 = vld [vmem:[#allocation2 + $0x10] sm:$0xf]
    %v143 = vld [vmem:[#allocation2 + $0x14] sm:$0xf]
    %v144 = vld [vmem:[#allocation2 + $0x18] sm:$0xf]
    %v145 = vld [vmem:[#allocation2 + $0x1c] sm:$0xf]
    %v146 = vld [vmem:[#allocation2 + $0x20] sm:$0xf]
    %v147 = vld [vmem:[#allocation2 + $0x24] sm:$0xf]
    %v148 = vld [vmem:[#allocation2 + $0x28] sm:$0xf]
    %v149 = vld [vmem:[#allocation2 + $0x2c] sm:$0xf]
    %v150 = vld [vmem:[#allocation2 + $0x30] sm:$0xf]
    %v151 = vld [vmem:[#allocation2 + $0x34] sm:$0xf]
    %v152 = vld [vmem:[#allocation2 + $0x38] sm:$0xf]
    %v153 = vld [vmem:[#allocation2 + $0x3c] sm:$0xf]
    %v154 = vld [vmem:[#allocation2 + $0x40] sm:$0xf]
    %v155 = vld [vmem:[#allocation2 + $0x44] sm:$0xf]
    %v156 = vld [vmem:[#allocation2 + $0x48] sm:$0xf]
    %v157 = vld [vmem:[#allocation2 + $0x4c] sm:$0xf]
    %v158 = vld [vmem:[#allocation2 + $0x50] sm:$0xf]
    %v159 = vld [vmem:[#allocation2 + $0x54] sm:$0xf]
    %v160 = vld [vmem:[#allocation2 + $0x58] sm:$0xf]
    %v161 = vld [vmem:[#allocation2 + $0x5c] sm:$0xf]
    %v162 = vld [vmem:[#allocation2 + $0x60] sm:$0xf]
    %v163 = vld [vmem:[#allocation2 + $0x64] sm:$0xf]
    %v164 = vld [vmem:[#allocation2 + $0x68] sm:$0xf]
    %v165 = vld [vmem:[#allocation2 + $0x6c] sm:$0xf]
    %v166 = vld [vmem:[#allocation2 + $0x70] sm:$0xf]
    %v167 = vld [vmem:[#allocation2 + $0x74] sm:$0xf]
    %v168 = vld [vmem:[#allocation2 + $0x78] sm:$0xf]
    %v169 = vld [vmem:[#allocation2 + $0x7c] sm:$0xf]
    %v170 = vld [vmem:[#allocation2 + $0x80] sm:$0xf]
    %v171 = vld [vmem:[#allocation2 + $0x84] sm:$0xf]
    %v172 = vld [vmem:[#allocation2 + $0x88] sm:$0xf]
    %v173 = vld [vmem:[#allocation2 + $0x8c] sm:$0xf]
    %v174 = vld [vmem:[#allocation2 + $0x90] sm:$0xf]
    %v175 = vld [vmem:[#allocation2 + $0x94] sm:$0xf]
    %v176 = vld [vmem:[#allocation2 + $0x98] sm:$0xf]
    %v177 = vld [vmem:[#allocation2 + $0x9c] sm:$0xf]
    %v178 = vld [vmem:[#allocation2 + $0xa0] sm:$0xf]
    %v179 = vld [vmem:[#allocation2 + $0xa4] sm:$0xf]
    %v180 = vld [vmem:[#allocation2 + $0xa8] sm:$0xf]
    %v181 = vld [vmem:[#allocation2 + $0xac] sm:$0xf]
    %v182 = vld [vmem:[#allocation2 + $0xb0] sm:$0xf]
    %v183 = vld [vmem:[#allocation2 + $0xb4] sm:$0xf]
    %v184 = vld [vmem:[#allocation2 + $0xb8] sm:$0xf]
    %v185 = vld [vmem:[#allocation2 + $0xbc] sm:$0xf]
    %v234 = vunpack.c.l.b16 %v138
    %v235 = vunpack.c.l.b16 %v139
    %v236 = vunpack.c.l.b16 %v140
    %v237 = vunpack.c.l.b16 %v141
    %v238 = vunpack.c.l.b16 %v142
    %v239 = vunpack.c.l.b16 %v143
    %v240 = vunpack.c.l.b16 %v144
    %v241 = vunpack.c.l.b16 %v145
    %v242 = vunpack.c.l.b16 %v146
    %v243 = vunpack.c.l.b16 %v147
    %v244 = vunpack.c.l.b16 %v148
    %v245 = vunpack.c.l.b16 %v149
    %v246 = vunpack.c.l.b16 %v150
    %v247 = vunpack.c.l.b16 %v151
    %v248 = vunpack.c.l.b16 %v152
    %v249 = vunpack.c.l.b16 %v153
    %v250 = vunpack.c.l.b16 %v154
    %v251 = vunpack.c.l.b16 %v155
    %v252 = vunpack.c.l.b16 %v156
    %v253 = vunpack.c.l.b16 %v157
    %v254 = vunpack.c.l.b16 %v158
    %v255 = vunpack.c.l.b16 %v159
    %v256 = vunpack.c.l.b16 %v160
    %v257 = vunpack.c.l.b16 %v161
    %v258 = vunpack.c.l.b16 %v162
    %v259 = vunpack.c.l.b16 %v163
    %v260 = vunpack.c.l.b16 %v164
    %v261 = vunpack.c.l.b16 %v165
    %v262 = vunpack.c.l.b16 %v166
    %v263 = vunpack.c.l.b16 %v167
    %v264 = vunpack.c.l.b16 %v168
    %v265 = vunpack.c.l.b16 %v169
    %v266 = vunpack.c.l.b16 %v170
    %v267 = vunpack.c.l.b16 %v171
    %v268 = vunpack.c.l.b16 %v172
    %v269 = vunpack.c.l.b16 %v173
    %v270 = vunpack.c.l.b16 %v174
    %v271 = vunpack.c.l.b16 %v175
    %v272 = vunpack.c.l.b16 %v176
    %v273 = vunpack.c.l.b16 %v177
    %v274 = vunpack.c.l.b16 %v178
    %v275 = vunpack.c.l.b16 %v179
    %v276 = vunpack.c.l.b16 %v180
    %v277 = vunpack.c.l.b16 %v181
    %v278 = vunpack.c.l.b16 %v182
    %v279 = vunpack.c.l.b16 %v183
    %v280 = vunpack.c.l.b16 %v184
    %v281 = vunpack.c.l.b16 %v185
    %v282 = vpack.c.b16 %v235, %v234
    %v283 = vpack.c.b16 %v237, %v236
    %v284 = vpack.c.b16 %v239, %v238
    %v285 = vpack.c.b16 %v241, %v240
    %v286 = vpack.c.b16 %v243, %v242
    %v287 = vpack.c.b16 %v245, %v244
    %v288 = vpack.c.b16 %v247, %v246
    %v289 = vpack.c.b16 %v249, %v248
    %v290 = vpack.c.b16 %v251, %v250
    %v291 = vpack.c.b16 %v253, %v252
    %v292 = vpack.c.b16 %v255, %v254
    %v293 = vpack.c.b16 %v257, %v256
    %v294 = vpack.c.b16 %v259, %v258
    %v295 = vpack.c.b16 %v261, %v260
    %v296 = vpack.c.b16 %v263, %v262
    %v297 = vpack.c.b16 %v265, %v264
    %v298 = vpack.c.b16 %v267, %v266
    %v299 = vpack.c.b16 %v269, %v268
    %v300 = vpack.c.b16 %v271, %v270
    %v301 = vpack.c.b16 %v273, %v272
    %v302 = vpack.c.b16 %v275, %v274
    %v303 = vpack.c.b16 %v277, %v276
    %v304 = vpack.c.b16 %v279, %v278
    %v305 = vpack.c.b16 %v281, %v280
    %330 = vmatprep.subr.bf16.mxu0 0
    %331 = vmatpush1.bf16.msra.mxu0 %v282
    %332 = vmatprep.subr.bf16.mxu0 0
    %333 = vmatpush1.bf16.msra.mxu0 %v283
    %334 = vmatprep.subr.bf16.mxu0 0
    %335 = vmatpush1.bf16.msra.mxu0 %v284
    %336 = vmatprep.subr.bf16.mxu0 0
    %337 = vmatpush1.bf16.msra.mxu0 %v285
    %338 = vmatprep.subr.bf16.mxu0 0
    %339 = vmatpush1.bf16.msra.mxu0 %v286
    %340 = vmatprep.subr.bf16.mxu0 0
    %341 = vmatpush1.bf16.msra.mxu0 %v287
    %342 = vmatprep.subr.bf16.mxu0 0
    %343 = vmatpush1.bf16.msra.mxu0 %v288
    %344 = vmatprep.subr.bf16.mxu0 0
    %345 = vmatpush1.bf16.msra.mxu0 %v289
    %346 = vmatprep.subr.bf16.mxu0 0
    %347 = vmatpush1.bf16.msra.mxu0 %v290
    %348 = vmatprep.subr.bf16.mxu0 0
    %349 = vmatpush1.bf16.msra.mxu0 %v291
    %350 = vmatprep.subr.bf16.mxu0 0
    %351 = vmatpush1.bf16.msra.mxu0 %v292
    %352 = vmatprep.subr.bf16.mxu0 0
    %353 = vmatpush1.bf16.msra.mxu0 %v293
    %354 = vmatprep.subr.bf16.mxu0 0
    %355 = vmatpush1.bf16.msra.mxu0 %v294
    %356 = vmatprep.subr.bf16.mxu0 0
    %357 = vmatpush1.bf16.msra.mxu0 %v295
    %358 = vmatprep.subr.bf16.mxu0 0
    %359 = vmatpush1.bf16.msra.mxu0 %v296
    %360 = vmatprep.subr.bf16.mxu0 0
    %361 = vmatpush1.bf16.msra.mxu0 %v297
    %362 = vmatprep.mubr.bf16.mxu0 %v136
    %363 = vmatmul.mubr.bf16.gmra.mrb[0].mxu0 %v135
    %v364 = vpop.f32.mrb[0].mxu0
    %v365 = vadd.f32 0.0, %v364
    %v366 = vpop.f32.mrb[0].mxu0
    %v367 = vpop.f32.mrb[0].mxu0
    %v368 = vadd.f32 0.0, %v367
    %v369 = vpop.f32.mrb[0].mxu0
    %370 = vdwg.mxu0
    %371 = vmatprep.subr.bf16.mxu0 0
    %372 = vmatpush1.bf16.msra.mxu0 %v298
    %373 = vmatprep.subr.bf16.mxu0 0
    %374 = vmatpush1.bf16.msra.mxu0 %v299
    %375 = vmatprep.subr.bf16.mxu0 0
    %376 = vmatpush1.bf16.msra.mxu0 %v300
    %377 = vmatprep.subr.bf16.mxu0 0
    %378 = vmatpush1.bf16.msra.mxu0 %v301
    %379 = vmatprep.subr.bf16.mxu0 0
    %380 = vmatpush1.bf16.msra.mxu0 %v302
    %381 = vmatprep.subr.bf16.mxu0 0
    %382 = vmatpush1.bf16.msra.mxu0 %v303
    %383 = vmatprep.subr.bf16.mxu0 0
    %384 = vmatpush1.bf16.msra.mxu0 %v304
    %385 = vmatprep.subr.bf16.mxu0 0
    %386 = vmatpush1.bf16.msra.mxu0 %v305
    %387 = vmatprep.subr.bf16.mxu0 0
    %388 = vmatpush1.bf16.msra.mxu0 0
    %389 = vmatprep.subr.bf16.mxu0 0
    %390 = vmatpush1.bf16.msra.mxu0 0
    %391 = vmatprep.subr.bf16.mxu0 0
    %392 = vmatpush1.bf16.msra.mxu0 0
    %393 = vmatprep.subr.bf16.mxu0 0
    %394 = vmatpush1.bf16.msra.mxu0 0
    %395 = vmatprep.subr.bf16.mxu0 0
    %396 = vmatpush1.bf16.msra.mxu0 0
    %397 = vmatprep.subr.bf16.mxu0 0
    %398 = vmatpush1.bf16.msra.mxu0 0
    %399 = vmatprep.subr.bf16.mxu0 0
    %400 = vmatpush1.bf16.msra.mxu0 0
    %401 = vmatprep.subr.bf16.mxu0 0
    %402 = vmatpush1.bf16.msra.mxu0 0
    %403 = vmatprep.mubr.bf16.mxu0 0
    %404 = vmatmul.mubr.bf16.gmra.mrb[0].mxu0 %v137
    %v405 = vpop.f32.mrb[0].mxu0
    %v406 = vadd.f32 %v365, %v405
    %v407 = vpop.f32.mrb[0].mxu0
    %v408 = vpop.f32.mrb[0].mxu0
    %v409 = vadd.f32 %v368, %v408
    %v410 = vpop.f32.mrb[0].mxu0
    %411 = vdwg.mxu0
    %v412 = vld [vmem:[#allocation5] sm:$0xff]
    %v413 = vld [vmem:[#allocation5 + $0x8] sm:$0xff]
    %v414 = vld [vmem:[#allocation5 + $0x10] sm:$0xff]
    %v415 = vld [vmem:[#allocation5 + $0x18] sm:$0xff]
    %v416 = vmul.f32 %v406, %v406
    %v417 = vmul.f32 %v409, %v409
    %vm418 = vcmask 261120
    %v419 = vsel %vm418, %v416, 0.0
    %420 = vadd.xlane.f32.xlu0 %v419
    %v421 = vpop.xlane.xlu0 %420
    %v422 = vsel %vm418, %v417, 0.0
    %423 = vadd.xlane.f32.xlu0 %v422
    %v424 = vpop.xlane.xlu0 %423
    %v425 = vrcp.pop 32.0
    %v426 = vmul.f32 %v421, %v425
    %v427 = vmul.f32 %v424, %v425
    %v428 = vadd.f32 %v426, 1e-06
    %v429 = vadd.f32 %v427, 1e-06
    %v430 = vrsqrt.pop %v428
    %v431 = vrsqrt.pop %v429
    %v432 = vmul.f32 %v406, %v430
    %v433 = vmul.f32 %v409, %v431
    %v434 = vld [vmem:[%s3] sm:$0x1]
    %v436 = vlaneseq
    %v437 = vshrl.u32 %v436, 7
    %v438 = vsub.s32 0, %v437
    %v439 = vrot.slane %v434, %v438
    %v441 = vmul.f32 %v432, %v439
    %v442 = vmul.f32 %v433, %v439
    %v443 = vpack.c.bf16 %v442, %v441
    %v444 = vld [vmem:[#allocation7] sm:$0xf]
    %v445 = vld [vmem:[#allocation7 + $0x4] sm:$0xf]
    %v446 = vld [vmem:[#allocation7 + $0x8] sm:$0xf]
    %v447 = vld [vmem:[#allocation7 + $0xc] sm:$0xf]
    %v452 = vunpack.c.l.b16 %v444
    %v453 = vunpack.c.l.b16 %v445
    %v454 = vunpack.c.l.b16 %v446
    %v455 = vunpack.c.l.b16 %v447
    %v456 = vpack.c.b16 %v453, %v452
    %v457 = vpack.c.b16 %v455, %v454
    %v461 = vsel %vm418, %v443, 0
    %463 = vmatprep.subr.bf16.mxu0 0
    %464 = vmatpush1.bf16.msra.mxu0 %v456
    %465 = vmatprep.subr.bf16.mxu0 0
    %466 = vmatpush1.bf16.msra.mxu0 %v457
    %467 = vmatprep.subr.bf16.mxu0 0
    %468 = vmatpush1.bf16.msra.mxu0 0
    %469 = vmatprep.subr.bf16.mxu0 0
    %470 = vmatpush1.bf16.msra.mxu0 0
    %471 = vmatprep.subr.bf16.mxu0 0
    %472 = vmatpush1.bf16.msra.mxu0 0
    %473 = vmatprep.subr.bf16.mxu0 0
    %474 = vmatpush1.bf16.msra.mxu0 0
    %475 = vmatprep.subr.bf16.mxu0 0
    %476 = vmatpush1.bf16.msra.mxu0 0
    %477 = vmatprep.subr.bf16.mxu0 0
    %478 = vmatpush1.bf16.msra.mxu0 0
    %479 = vmatprep.subr.bf16.mxu0 0
    %480 = vmatpush1.bf16.msra.mxu0 0
    %481 = vmatprep.subr.bf16.mxu0 0
    %482 = vmatpush1.bf16.msra.mxu0 0
    %483 = vmatprep.subr.bf16.mxu0 0
    %484 = vmatpush1.bf16.msra.mxu0 0
    %485 = vmatprep.subr.bf16.mxu0 0
    %486 = vmatpush1.bf16.msra.mxu0 0
    %487 = vmatprep.subr.bf16.mxu0 0
    %488 = vmatpush1.bf16.msra.mxu0 0
    %489 = vmatprep.subr.bf16.mxu0 0
    %490 = vmatpush1.bf16.msra.mxu0 0
    %491 = vmatprep.subr.bf16.mxu0 0
    %492 = vmatpush1.bf16.msra.mxu0 0
    %493 = vmatprep.subr.bf16.mxu0 0
    %494 = vmatpush1.bf16.msra.mxu0 0
    %495 = vmatprep.mubr.bf16.mxu0 0
    %496 = vmatmul.mubr.bf16.gmra.mrb[0].mxu0 %v461
    %v497 = vpop.f32.mrb[0].mxu0
    %v498 = vadd.f32 0.0, %v497
    %v499 = vpop.f32.mrb[0].mxu0
    %v500 = vpop.f32.mrb[0].mxu0
    %v501 = vadd.f32 0.0, %v500
    %v502 = vpop.f32.mrb[0].mxu0
    %503 = vdwg.mxu0
    %506 = vrot.lane.b32.xlu0 %v498, 120
    %v507 = vpop.permute.xlu0 %506
    %508 = vrot.lane.b32.xlu0 %v501, 120
    %v509 = vpop.permute.xlu0 %508
    %512 = vrot.lane.b32.xlu0 %v498, 112
    %v513 = vpop.permute.xlu0 %512
    %514 = vrot.lane.b32.xlu0 %v501, 112
    %v515 = vpop.permute.xlu0 %514
    %518 = vrot.lane.b32.xlu0 %v498, 104
    %v519 = vpop.permute.xlu0 %518
    %520 = vrot.lane.b32.xlu0 %v501, 104
    %v521 = vpop.permute.xlu0 %520
    %v524 = vpack.c.bf16 %v498, %v498
    %v525 = vpack.c.bf16 %v501, %v501
    %v526 = vpack.c.bf16 %v507, %v507
    %v527 = vpack.c.bf16 %v509, %v509
    %v528 = vpack.c.bf16 %v513, %v513
    %v529 = vpack.c.bf16 %v515, %v515
    %v530 = vpack.c.bf16 %v519, %v519
    %v531 = vpack.c.bf16 %v521, %v521
    %533 = vrot.lane.b32.xlu0 %v524, 96
    %v534 = vpop.permute.xlu0 %533
    %vm535 = vcmask 64512
    %v537 = vsel %vm535, %v524, 0
    %v540 = vsel %vm535, %v534, 0
    %542 = vmatprep.subr.bf16.mxu0 0
    %543 = vmatpush1.bf16.xpose.msra.mxu0 %v540
    %544 = vmatprep.subr.bf16.mxu0 0
    %545 = vmatpush1.bf16.xpose.msra.mxu0 0
    %546 = vmatprep.subr.bf16.mxu0 0
    %547 = vmatpush1.bf16.xpose.msra.mxu0 0
    %548 = vmatprep.subr.bf16.mxu0 0
    %549 = vmatpush1.bf16.xpose.msra.mxu0 0
    %550 = vmatprep.subr.bf16.mxu0 0
    %551 = vmatpush1.bf16.xpose.msra.mxu0 0
    %552 = vmatprep.subr.bf16.mxu0 0
    %553 = vmatpush1.bf16.xpose.msra.mxu0 0
    %554 = vmatprep.subr.bf16.mxu0 0
    %555 = vmatpush1.bf16.xpose.msra.mxu0 0
    %556 = vmatprep.subr.bf16.mxu0 0
    %557 = vmatpush1.bf16.xpose.msra.mxu0 0
    %558 = vmatprep.subr.bf16.mxu0 0
    %559 = vmatpush1.bf16.xpose.msra.mxu0 0
    %560 = vmatprep.subr.bf16.mxu0 0
    %561 = vmatpush1.bf16.xpose.msra.mxu0 0
    %562 = vmatprep.subr.bf16.mxu0 0
    %563 = vmatpush1.bf16.xpose.msra.mxu0 0
    %564 = vmatprep.subr.bf16.mxu0 0
    %565 = vmatpush1.bf16.xpose.msra.mxu0 0
    %566 = vmatprep.subr.bf16.mxu0 0
    %567 = vmatpush1.bf16.xpose.msra.mxu0 0
    %568 = vmatprep.subr.bf16.mxu0 0
    %569 = vmatpush1.bf16.xpose.msra.mxu0 0
    %570 = vmatprep.subr.bf16.mxu0 0
    %571 = vmatpush1.bf16.xpose.msra.mxu0 0
    %572 = vmatprep.subr.bf16.mxu0 0
    %573 = vmatpush1.bf16.xpose.msra.mxu0 0
    %574 = vmatprep.mubr.bf16.mxu0 0
    %575 = vmatmul.mubr.bf16.gmra.mrb[0].mxu0 %v537
    %v576 = vpop.f32.mrb[0].mxu0
    %v577 = vadd.f32 %v412, %v576
    %v578 = vpop.f32.mrb[0].mxu0
    %v579 = vpop.f32.mrb[0].mxu0
    %v580 = vpop.f32.mrb[0].mxu0
    %581 = vdwg.mxu0
    %583 = vrot.lane.b32.xlu0 %v525, 96
    %v584 = vpop.permute.xlu0 %583
    %v586 = vsel %vm535, %v525, 0
    %v589 = vsel %vm535, %v584, 0
    %591 = vmatprep.subr.bf16.mxu0 0
    %592 = vmatpush1.bf16.xpose.msra.mxu0 %v589
    %593 = vmatprep.subr.bf16.mxu0 0
    %594 = vmatpush1.bf16.xpose.msra.mxu0 0
    %595 = vmatprep.subr.bf16.mxu0 0
    %596 = vmatpush1.bf16.xpose.msra.mxu0 0
    %597 = vmatprep.subr.bf16.mxu0 0
    %598 = vmatpush1.bf16.xpose.msra.mxu0 0
    %599 = vmatprep.subr.bf16.mxu0 0
    %600 = vmatpush1.bf16.xpose.msra.mxu0 0
    %601 = vmatprep.subr.bf16.mxu0 0
    %602 = vmatpush1.bf16.xpose.msra.mxu0 0
    %603 = vmatprep.subr.bf16.mxu0 0
    %604 = vmatpush1.bf16.xpose.msra.mxu0 0
    %605 = vmatprep.subr.bf16.mxu0 0
    %606 = vmatpush1.bf16.xpose.msra.mxu0 0
    %607 = vmatprep.subr.bf16.mxu0 0
    %608 = vmatpush1.bf16.xpose.msra.mxu0 0
    %609 = vmatprep.subr.bf16.mxu0 0
    %610 = vmatpush1.bf16.xpose.msra.mxu0 0
    %611 = vmatprep.subr.bf16.mxu0 0
    %612 = vmatpush1.bf16.xpose.msra.mxu0 0
    %613 = vmatprep.subr.bf16.mxu0 0
    %614 = vmatpush1.bf16.xpose.msra.mxu0 0
    %615 = vmatprep.subr.bf16.mxu0 0
    %616 = vmatpush1.bf16.xpose.msra.mxu0 0
    %617 = vmatprep.subr.bf16.mxu0 0
    %618 = vmatpush1.bf16.xpose.msra.mxu0 0
    %619 = vmatprep.subr.bf16.mxu0 0
    %620 = vmatpush1.bf16.xpose.msra.mxu0 0
    %621 = vmatprep.subr.bf16.mxu0 0
    %622 = vmatpush1.bf16.xpose.msra.mxu0 0
    %623 = vmatprep.mubr.bf16.mxu0 0
    %624 = vmatmul.mubr.bf16.gmra.mrb[0].mxu0 %v586
    %v625 = vpop.f32.mrb[0].mxu0
    %v626 = vadd.f32 %v412, %v625
    %v627 = vpop.f32.mrb[0].mxu0
    %v628 = vpop.f32.mrb[0].mxu0
    %v629 = vpop.f32.mrb[0].mxu0
    %630 = vdwg.mxu0
    %632 = vrot.lane.b32.xlu0 %v526, 96
    %v633 = vpop.permute.xlu0 %632
    %v635 = vsel %vm535, %v526, 0
    %v638 = vsel %vm535, %v633, 0
    %640 = vmatprep.subr.bf16.mxu0 0
    %641 = vmatpush1.bf16.xpose.msra.mxu0 %v638
    %642 = vmatprep.subr.bf16.mxu0 0
    %643 = vmatpush1.bf16.xpose.msra.mxu0 0
    %644 = vmatprep.subr.bf16.mxu0 0
    %645 = vmatpush1.bf16.xpose.msra.mxu0 0
    %646 = vmatprep.subr.bf16.mxu0 0
    %647 = vmatpush1.bf16.xpose.msra.mxu0 0
    %648 = vmatprep.subr.bf16.mxu0 0
    %649 = vmatpush1.bf16.xpose.msra.mxu0 0
    %650 = vmatprep.subr.bf16.mxu0 0
    %651 = vmatpush1.bf16.xpose.msra.mxu0 0
    %652 = vmatprep.subr.bf16.mxu0 0
    %653 = vmatpush1.bf16.xpose.msra.mxu0 0
    %654 = vmatprep.subr.bf16.mxu0 0
    %655 = vmatpush1.bf16.xpose.msra.mxu0 0
    %656 = vmatprep.subr.bf16.mxu0 0
    %657 = vmatpush1.bf16.xpose.msra.mxu0 0
    %658 = vmatprep.subr.bf16.mxu0 0
    %659 = vmatpush1.bf16.xpose.msra.mxu0 0
    %660 = vmatprep.subr.bf16.mxu0 0
    %661 = vmatpush1.bf16.xpose.msra.mxu0 0
    %662 = vmatprep.subr.bf16.mxu0 0
    %663 = vmatpush1.bf16.xpose.msra.mxu0 0
    %664 = vmatprep.subr.bf16.mxu0 0
    %665 = vmatpush1.bf16.xpose.msra.mxu0 0
    %666 = vmatprep.subr.bf16.mxu0 0
    %667 = vmatpush1.bf16.xpose.msra.mxu0 0
    %668 = vmatprep.subr.bf16.mxu0 0
    %669 = vmatpush1.bf16.xpose.msra.mxu0 0
    %670 = vmatprep.subr.bf16.mxu0 0
    %671 = vmatpush1.bf16.xpose.msra.mxu0 0
    %672 = vmatprep.mubr.bf16.mxu0 0
    %673 = vmatmul.mubr.bf16.gmra.mrb[0].mxu0 %v635
    %v674 = vpop.f32.mrb[0].mxu0
    %v675 = vadd.f32 %v413, %v674
    %v676 = vpop.f32.mrb[0].mxu0
    %v677 = vpop.f32.mrb[0].mxu0
    %v678 = vpop.f32.mrb[0].mxu0
    %679 = vdwg.mxu0
    %681 = vrot.lane.b32.xlu0 %v527, 96
    %v682 = vpop.permute.xlu0 %681
    %v684 = vsel %vm535, %v527, 0
    %v687 = vsel %vm535, %v682, 0
    %689 = vmatprep.subr.bf16.mxu0 0
    %690 = vmatpush1.bf16.xpose.msra.mxu0 %v687
    %691 = vmatprep.subr.bf16.mxu0 0
    %692 = vmatpush1.bf16.xpose.msra.mxu0 0
    %693 = vmatprep.subr.bf16.mxu0 0
    %694 = vmatpush1.bf16.xpose.msra.mxu0 0
    %695 = vmatprep.subr.bf16.mxu0 0
    %696 = vmatpush1.bf16.xpose.msra.mxu0 0
    %697 = vmatprep.subr.bf16.mxu0 0
    %698 = vmatpush1.bf16.xpose.msra.mxu0 0
    %699 = vmatprep.subr.bf16.mxu0 0
    %700 = vmatpush1.bf16.xpose.msra.mxu0 0
    %701 = vmatprep.subr.bf16.mxu0 0
    %702 = vmatpush1.bf16.xpose.msra.mxu0 0
    %703 = vmatprep.subr.bf16.mxu0 0
    %704 = vmatpush1.bf16.xpose.msra.mxu0 0
    %705 = vmatprep.subr.bf16.mxu0 0
    %706 = vmatpush1.bf16.xpose.msra.mxu0 0
    %707 = vmatprep.subr.bf16.mxu0 0
    %708 = vmatpush1.bf16.xpose.msra.mxu0 0
    %709 = vmatprep.subr.bf16.mxu0 0
    %710 = vmatpush1.bf16.xpose.msra.mxu0 0
    %711 = vmatprep.subr.bf16.mxu0 0
    %712 = vmatpush1.bf16.xpose.msra.mxu0 0
    %713 = vmatprep.subr.bf16.mxu0 0
    %714 = vmatpush1.bf16.xpose.msra.mxu0 0
    %715 = vmatprep.subr.bf16.mxu0 0
    %716 = vmatpush1.bf16.xpose.msra.mxu0 0
    %717 = vmatprep.subr.bf16.mxu0 0
    %718 = vmatpush1.bf16.xpose.msra.mxu0 0
    %719 = vmatprep.subr.bf16.mxu0 0
    %720 = vmatpush1.bf16.xpose.msra.mxu0 0
    %721 = vmatprep.mubr.bf16.mxu0 0
    %722 = vmatmul.mubr.bf16.gmra.mrb[0].mxu0 %v684
    %v723 = vpop.f32.mrb[0].mxu0
    %v724 = vadd.f32 %v413, %v723
    %v725 = vpop.f32.mrb[0].mxu0
    %v726 = vpop.f32.mrb[0].mxu0
    %v727 = vpop.f32.mrb[0].mxu0
    %728 = vdwg.mxu0
    %730 = vrot.lane.b32.xlu0 %v528, 96
    %v731 = vpop.permute.xlu0 %730
    %v733 = vsel %vm535, %v528, 0
    %v736 = vsel %vm535, %v731, 0
    %738 = vmatprep.subr.bf16.mxu0 0
    %739 = vmatpush1.bf16.xpose.msra.mxu0 %v736
    %740 = vmatprep.subr.bf16.mxu0 0
    %741 = vmatpush1.bf16.xpose.msra.mxu0 0
    %742 = vmatprep.subr.bf16.mxu0 0
    %743 = vmatpush1.bf16.xpose.msra.mxu0 0
    %744 = vmatprep.subr.bf16.mxu0 0
    %745 = vmatpush1.bf16.xpose.msra.mxu0 0
    %746 = vmatprep.subr.bf16.mxu0 0
    %747 = vmatpush1.bf16.xpose.msra.mxu0 0
    %748 = vmatprep.subr.bf16.mxu0 0
    %749 = vmatpush1.bf16.xpose.msra.mxu0 0
    %750 = vmatprep.subr.bf16.mxu0 0
    %751 = vmatpush1.bf16.xpose.msra.mxu0 0
    %752 = vmatprep.subr.bf16.mxu0 0
    %753 = vmatpush1.bf16.xpose.msra.mxu0 0
    %754 = vmatprep.subr.bf16.mxu0 0
    %755 = vmatpush1.bf16.xpose.msra.mxu0 0
    %756 = vmatprep.subr.bf16.mxu0 0
    %757 = vmatpush1.bf16.xpose.msra.mxu0 0
    %758 = vmatprep.subr.bf16.mxu0 0
    %759 = vmatpush1.bf16.xpose.msra.mxu0 0
    %760 = vmatprep.subr.bf16.mxu0 0
    %761 = vmatpush1.bf16.xpose.msra.mxu0 0
    %762 = vmatprep.subr.bf16.mxu0 0
    %763 = vmatpush1.bf16.xpose.msra.mxu0 0
    %764 = vmatprep.subr.bf16.mxu0 0
    %765 = vmatpush1.bf16.xpose.msra.mxu0 0
    %766 = vmatprep.subr.bf16.mxu0 0
    %767 = vmatpush1.bf16.xpose.msra.mxu0 0
    %768 = vmatprep.subr.bf16.mxu0 0
    %769 = vmatpush1.bf16.xpose.msra.mxu0 0
    %770 = vmatprep.mubr.bf16.mxu0 0
    %771 = vmatmul.mubr.bf16.gmra.mrb[0].mxu0 %v733
    %v772 = vpop.f32.mrb[0].mxu0
    %v773 = vadd.f32 %v414, %v772
    %v774 = vpop.f32.mrb[0].mxu0
    %v775 = vpop.f32.mrb[0].mxu0
    %v776 = vpop.f32.mrb[0].mxu0
    %777 = vdwg.mxu0
    %779 = vrot.lane.b32.xlu0 %v529, 96
    %v780 = vpop.permute.xlu0 %779
    %v782 = vsel %vm535, %v529, 0
    %v785 = vsel %vm535, %v780, 0
    %787 = vmatprep.subr.bf16.mxu0 0
    %788 = vmatpush1.bf16.xpose.msra.mxu0 %v785
    %789 = vmatprep.subr.bf16.mxu0 0
    %790 = vmatpush1.bf16.xpose.msra.mxu0 0
    %791 = vmatprep.subr.bf16.mxu0 0
    %792 = vmatpush1.bf16.xpose.msra.mxu0 0
    %793 = vmatprep.subr.bf16.mxu0 0
    %794 = vmatpush1.bf16.xpose.msra.mxu0 0
    %795 = vmatprep.subr.bf16.mxu0 0
    %796 = vmatpush1.bf16.xpose.msra.mxu0 0
    %797 = vmatprep.subr.bf16.mxu0 0
    %798 = vmatpush1.bf16.xpose.msra.mxu0 0
    %799 = vmatprep.subr.bf16.mxu0 0
    %800 = vmatpush1.bf16.xpose.msra.mxu0 0
    %801 = vmatprep.subr.bf16.mxu0 0
    %802 = vmatpush1.bf16.xpose.msra.mxu0 0
    %803 = vmatprep.subr.bf16.mxu0 0
    %804 = vmatpush1.bf16.xpose.msra.mxu0 0
    %805 = vmatprep.subr.bf16.mxu0 0
    %806 = vmatpush1.bf16.xpose.msra.mxu0 0
    %807 = vmatprep.subr.bf16.mxu0 0
    %808 = vmatpush1.bf16.xpose.msra.mxu0 0
    %809 = vmatprep.subr.bf16.mxu0 0
    %810 = vmatpush1.bf16.xpose.msra.mxu0 0
    %811 = vmatprep.subr.bf16.mxu0 0
    %812 = vmatpush1.bf16.xpose.msra.mxu0 0
    %813 = vmatprep.subr.bf16.mxu0 0
    %814 = vmatpush1.bf16.xpose.msra.mxu0 0
    %815 = vmatprep.subr.bf16.mxu0 0
    %816 = vmatpush1.bf16.xpose.msra.mxu0 0
    %817 = vmatprep.subr.bf16.mxu0 0
    %818 = vmatpush1.bf16.xpose.msra.mxu0 0
    %819 = vmatprep.mubr.bf16.mxu0 0
    %820 = vmatmul.mubr.bf16.gmra.mrb[0].mxu0 %v782
    %v821 = vpop.f32.mrb[0].mxu0
    %v822 = vadd.f32 %v414, %v821
    %v823 = vpop.f32.mrb[0].mxu0
    %v824 = vpop.f32.mrb[0].mxu0
    %v825 = vpop.f32.mrb[0].mxu0
    %826 = vdwg.mxu0
    %828 = vrot.lane.b32.xlu0 %v530, 96
    %v829 = vpop.permute.xlu0 %828
    %v831 = vsel %vm535, %v530, 0
    %v834 = vsel %vm535, %v829, 0
    %836 = vmatprep.subr.bf16.mxu0 0
    %837 = vmatpush1.bf16.xpose.msra.mxu0 %v834
    %838 = vmatprep.subr.bf16.mxu0 0
    %839 = vmatpush1.bf16.xpose.msra.mxu0 0
    %840 = vmatprep.subr.bf16.mxu0 0
    %841 = vmatpush1.bf16.xpose.msra.mxu0 0
    %842 = vmatprep.subr.bf16.mxu0 0
    %843 = vmatpush1.bf16.xpose.msra.mxu0 0
    %844 = vmatprep.subr.bf16.mxu0 0
    %845 = vmatpush1.bf16.xpose.msra.mxu0 0
    %846 = vmatprep.subr.bf16.mxu0 0
    %847 = vmatpush1.bf16.xpose.msra.mxu0 0
    %848 = vmatprep.subr.bf16.mxu0 0
    %849 = vmatpush1.bf16.xpose.msra.mxu0 0
    %850 = vmatprep.subr.bf16.mxu0 0
    %851 = vmatpush1.bf16.xpose.msra.mxu0 0
    %852 = vmatprep.subr.bf16.mxu0 0
    %853 = vmatpush1.bf16.xpose.msra.mxu0 0
    %854 = vmatprep.subr.bf16.mxu0 0
    %855 = vmatpush1.bf16.xpose.msra.mxu0 0
    %856 = vmatprep.subr.bf16.mxu0 0
    %857 = vmatpush1.bf16.xpose.msra.mxu0 0
    %858 = vmatprep.subr.bf16.mxu0 0
    %859 = vmatpush1.bf16.xpose.msra.mxu0 0
    %860 = vmatprep.subr.bf16.mxu0 0
    %861 = vmatpush1.bf16.xpose.msra.mxu0 0
    %862 = vmatprep.subr.bf16.mxu0 0
    %863 = vmatpush1.bf16.xpose.msra.mxu0 0
    %864 = vmatprep.subr.bf16.mxu0 0
    %865 = vmatpush1.bf16.xpose.msra.mxu0 0
    %866 = vmatprep.subr.bf16.mxu0 0
    %867 = vmatpush1.bf16.xpose.msra.mxu0 0
    %868 = vmatprep.mubr.bf16.mxu0 0
    %869 = vmatmul.mubr.bf16.gmra.mrb[0].mxu0 %v831
    %v870 = vpop.f32.mrb[0].mxu0
    %v871 = vadd.f32 %v415, %v870
    %v872 = vpop.f32.mrb[0].mxu0
    %v873 = vpop.f32.mrb[0].mxu0
    %v874 = vpop.f32.mrb[0].mxu0
    %875 = vdwg.mxu0
    %877 = vrot.lane.b32.xlu0 %v531, 96
    %v878 = vpop.permute.xlu0 %877
    %v880 = vsel %vm535, %v531, 0
    %v883 = vsel %vm535, %v878, 0
    %885 = vmatprep.subr.bf16.mxu0 0
    %886 = vmatpush1.bf16.xpose.msra.mxu0 %v883
    %887 = vmatprep.subr.bf16.mxu0 0
    %888 = vmatpush1.bf16.xpose.msra.mxu0 0
    %889 = vmatprep.subr.bf16.mxu0 0
    %890 = vmatpush1.bf16.xpose.msra.mxu0 0
    %891 = vmatprep.subr.bf16.mxu0 0
    %892 = vmatpush1.bf16.xpose.msra.mxu0 0
    %893 = vmatprep.subr.bf16.mxu0 0
    %894 = vmatpush1.bf16.xpose.msra.mxu0 0
    %895 = vmatprep.subr.bf16.mxu0 0
    %896 = vmatpush1.bf16.xpose.msra.mxu0 0
    %897 = vmatprep.subr.bf16.mxu0 0
    %898 = vmatpush1.bf16.xpose.msra.mxu0 0
    %899 = vmatprep.subr.bf16.mxu0 0
    %900 = vmatpush1.bf16.xpose.msra.mxu0 0
    %901 = vmatprep.subr.bf16.mxu0 0
    %902 = vmatpush1.bf16.xpose.msra.mxu0 0
    %903 = vmatprep.subr.bf16.mxu0 0
    %904 = vmatpush1.bf16.xpose.msra.mxu0 0
    %905 = vmatprep.subr.bf16.mxu0 0
    %906 = vmatpush1.bf16.xpose.msra.mxu0 0
    %907 = vmatprep.subr.bf16.mxu0 0
    %908 = vmatpush1.bf16.xpose.msra.mxu0 0
    %909 = vmatprep.subr.bf16.mxu0 0
    %910 = vmatpush1.bf16.xpose.msra.mxu0 0
    %911 = vmatprep.subr.bf16.mxu0 0
    %912 = vmatpush1.bf16.xpose.msra.mxu0 0
    %913 = vmatprep.subr.bf16.mxu0 0
    %914 = vmatpush1.bf16.xpose.msra.mxu0 0
    %915 = vmatprep.subr.bf16.mxu0 0
    %916 = vmatpush1.bf16.xpose.msra.mxu0 0
    %917 = vmatprep.mubr.bf16.mxu0 0
    %918 = vmatmul.mubr.bf16.gmra.mrb[0].mxu0 %v880
    %v919 = vpop.f32.mrb[0].mxu0
    %v920 = vadd.f32 %v415, %v919
    %v921 = vpop.f32.mrb[0].mxu0
    %v922 = vpop.f32.mrb[0].mxu0
    %v923 = vpop.f32.mrb[0].mxu0
    %924 = vdwg.mxu0
    %v925 = vsel %vm535, %v577, -inf
    %926 = vmax.xlane.f32.xlu0 %v925
    %v927 = vpop.xlane.xlu0 %926
    %v928 = vsel %vm535, %v626, -inf
    %929 = vmax.xlane.f32.xlu0 %v928
    %v930 = vpop.xlane.xlu0 %929
    %v931 = vsel %vm535, %v675, -inf
    %932 = vmax.xlane.f32.xlu0 %v931
    %v933 = vpop.xlane.xlu0 %932
    %v934 = vsel %vm535, %v724, -inf
    %935 = vmax.xlane.f32.xlu0 %v934
    %v936 = vpop.xlane.xlu0 %935
    %v937 = vsel %vm535, %v773, -inf
    %938 = vmax.xlane.f32.xlu0 %v937
    %v939 = vpop.xlane.xlu0 %938
    %v940 = vsel %vm535, %v822, -inf
    %941 = vmax.xlane.f32.xlu0 %v940
    %v942 = vpop.xlane.xlu0 %941
    %v943 = vsel %vm535, %v871, -inf
    %944 = vmax.xlane.f32.xlu0 %v943
    %v945 = vpop.xlane.xlu0 %944
    %v946 = vsel %vm535, %v920, -inf
    %947 = vmax.xlane.f32.xlu0 %v946
    %v948 = vpop.xlane.xlu0 %947
    %v949 = vsub.f32 %v577, %v927
    %v950 = vsub.f32 %v626, %v930
    %v951 = vsub.f32 %v675, %v933
    %v952 = vsub.f32 %v724, %v936
    %v953 = vsub.f32 %v773, %v939
    %v954 = vsub.f32 %v822, %v942
    %v955 = vsub.f32 %v871, %v945
    %v956 = vsub.f32 %v920, %v948
    %v957 = vmul.f32 %v949, 1.442695
    %v958 = vpow.pop %v957
    %v959 = vmul.f32 %v950, 1.442695
    %v960 = vpow.pop %v959
    %v961 = vmul.f32 %v951, 1.442695
    %v962 = vpow.pop %v961
    %v963 = vmul.f32 %v952, 1.442695
    %v964 = vpow.pop %v963
    %v965 = vmul.f32 %v953, 1.442695
    %v966 = vpow.pop %v965
    %v967 = vmul.f32 %v954, 1.442695
    %v968 = vpow.pop %v967
    %v969 = vmul.f32 %v955, 1.442695
    %v970 = vpow.pop %v969
    %v971 = vmul.f32 %v956, 1.442695
    %v972 = vpow.pop %v971
    %v973 = vsel %vm535, %v958, 0.0
    %974 = vadd.xlane.f32.xlu0 %v973
    %v975 = vpop.xlane.xlu0 %974
    %v976 = vsel %vm535, %v960, 0.0
    %977 = vadd.xlane.f32.xlu0 %v976
    %v978 = vpop.xlane.xlu0 %977
    %v979 = vsel %vm535, %v962, 0.0
    %980 = vadd.xlane.f32.xlu0 %v979
    %v981 = vpop.xlane.xlu0 %980
    %v982 = vsel %vm535, %v964, 0.0
    %983 = vadd.xlane.f32.xlu0 %v982
    %v984 = vpop.xlane.xlu0 %983
    %v985 = vsel %vm535, %v966, 0.0
    %986 = vadd.xlane.f32.xlu0 %v985
    %v987 = vpop.xlane.xlu0 %986
    %v988 = vsel %vm535, %v968, 0.0
    %989 = vadd.xlane.f32.xlu0 %v988
    %v990 = vpop.xlane.xlu0 %989
    %v991 = vsel %vm535, %v970, 0.0
    %992 = vadd.xlane.f32.xlu0 %v991
    %v993 = vpop.xlane.xlu0 %992
    %v994 = vsel %vm535, %v972, 0.0
    %995 = vadd.xlane.f32.xlu0 %v994
    %v996 = vpop.xlane.xlu0 %995
    %v997 = vrcp.pop %v975
    %v998 = vrcp.pop %v978
    %v999 = vrcp.pop %v981
    %v1000 = vrcp.pop %v984
    %v1001 = vrcp.pop %v987
    %v1002 = vrcp.pop %v990
    %v1003 = vrcp.pop %v993
    %v1004 = vrcp.pop %v996
    %v1005 = vmul.f32 %v958, %v997
    %v1006 = vmul.f32 %v960, %v998
    %v1007 = vmul.f32 %v962, %v999
    %v1008 = vmul.f32 %v964, %v1000
    %v1009 = vmul.f32 %v966, %v1001
    %v1010 = vmul.f32 %v968, %v1002
    %v1011 = vmul.f32 %v970, %v1003
    %v1012 = vmul.f32 %v972, %v1004
    %v1013 = vpack.c.bf16 %v1005, %v1005
    %v1014 = vpack.c.bf16 %v1006, %v1006
    %v1015 = vpack.c.bf16 %v1007, %v1007
    %v1016 = vpack.c.bf16 %v1008, %v1008
    %v1017 = vpack.c.bf16 %v1009, %v1009
    %v1018 = vpack.c.bf16 %v1010, %v1010
    %v1019 = vpack.c.bf16 %v1011, %v1011
    %v1020 = vpack.c.bf16 %v1012, %v1012
    %1021 = vrot.lane.b32.xlu0 %v524, 64
    %v1022 = vpop.permute.xlu0 %1021
    %v1024 = vsel %vm535, %v1013, 0
    %vm1026 = vcmask 1043456
    %v1028 = vsel %vm1026, %v1022, 0
    %1030 = vmatprep.subr.bf16.mxu0 0
    %1031 = vmatpush1.bf16.msra.mxu0 %v1028
    %1032 = vmatprep.subr.bf16.mxu0 0
    %1033 = vmatpush1.bf16.msra.mxu0 0
    %1034 = vmatprep.subr.bf16.mxu0 0
    %1035 = vmatpush1.bf16.msra.mxu0 0
    %1036 = vmatprep.subr.bf16.mxu0 0
    %1037 = vmatpush1.bf16.msra.mxu0 0
    %1038 = vmatprep.subr.bf16.mxu0 0
    %1039 = vmatpush1.bf16.msra.mxu0 0
    %1040 = vmatprep.subr.bf16.mxu0 0
    %1041 = vmatpush1.bf16.msra.mxu0 0
    %1042 = vmatprep.subr.bf16.mxu0 0
    %1043 = vmatpush1.bf16.msra.mxu0 0
    %1044 = vmatprep.subr.bf16.mxu0 0
    %1045 = vmatpush1.bf16.msra.mxu0 0
    %1046 = vmatprep.subr.bf16.mxu0 0
    %1047 = vmatpush1.bf16.msra.mxu0 0
    %1048 = vmatprep.subr.bf16.mxu0 0
    %1049 = vmatpush1.bf16.msra.mxu0 0
    %1050 = vmatprep.subr.bf16.mxu0 0
    %1051 = vmatpush1.bf16.msra.mxu0 0
    %1052 = vmatprep.subr.bf16.mxu0 0
    %1053 = vmatpush1.bf16.msra.mxu0 0
    %1054 = vmatprep.subr.bf16.mxu0 0
    %1055 = vmatpush1.bf16.msra.mxu0 0
    %1056 = vmatprep.subr.bf16.mxu0 0
    %1057 = vmatpush1.bf16.msra.mxu0 0
    %1058 = vmatprep.subr.bf16.mxu0 0
    %1059 = vmatpush1.bf16.msra.mxu0 0
    %1060 = vmatprep.subr.bf16.mxu0 0
    %1061 = vmatpush1.bf16.msra.mxu0 0
    %1062 = vmatprep.mubr.bf16.mxu0 0
    %1063 = vmatmul.mubr.bf16.gmra.mrb[0].mxu0 %v1024
    %v1064 = vpop.f32.mrb[0].mxu0
    %v1065 = vadd.f32 0.0, %v1064
    %v1066 = vpop.f32.mrb[0].mxu0
    %v1067 = vpop.f32.mrb[0].mxu0
    %v1068 = vpop.f32.mrb[0].mxu0
    %1069 = vdwg.mxu0
    %1070 = vrot.lane.b32.xlu0 %v525, 64
    %v1071 = vpop.permute.xlu0 %1070
    %v1073 = vsel %vm535, %v1014, 0
    %v1076 = vsel %vm1026, %v1071, 0
    %1078 = vmatprep.subr.bf16.mxu0 0
    %1079 = vmatpush1.bf16.msra.mxu0 %v1076
    %1080 = vmatprep.subr.bf16.mxu0 0
    %1081 = vmatpush1.bf16.msra.mxu0 0
    %1082 = vmatprep.subr.bf16.mxu0 0
    %1083 = vmatpush1.bf16.msra.mxu0 0
    %1084 = vmatprep.subr.bf16.mxu0 0
    %1085 = vmatpush1.bf16.msra.mxu0 0
    %1086 = vmatprep.subr.bf16.mxu0 0
    %1087 = vmatpush1.bf16.msra.mxu0 0
    %1088 = vmatprep.subr.bf16.mxu0 0
    %1089 = vmatpush1.bf16.msra.mxu0 0
    %1090 = vmatprep.subr.bf16.mxu0 0
    %1091 = vmatpush1.bf16.msra.mxu0 0
    %1092 = vmatprep.subr.bf16.mxu0 0
    %1093 = vmatpush1.bf16.msra.mxu0 0
    %1094 = vmatprep.subr.bf16.mxu0 0
    %1095 = vmatpush1.bf16.msra.mxu0 0
    %1096 = vmatprep.subr.bf16.mxu0 0
    %1097 = vmatpush1.bf16.msra.mxu0 0
    %1098 = vmatprep.subr.bf16.mxu0 0
    %1099 = vmatpush1.bf16.msra.mxu0 0
    %1100 = vmatprep.subr.bf16.mxu0 0
    %1101 = vmatpush1.bf16.msra.mxu0 0
    %1102 = vmatprep.subr.bf16.mxu0 0
    %1103 = vmatpush1.bf16.msra.mxu0 0
    %1104 = vmatprep.subr.bf16.mxu0 0
    %1105 = vmatpush1.bf16.msra.mxu0 0
    %1106 = vmatprep.subr.bf16.mxu0 0
    %1107 = vmatpush1.bf16.msra.mxu0 0
    %1108 = vmatprep.subr.bf16.mxu0 0
    %1109 = vmatpush1.bf16.msra.mxu0 0
    %1110 = vmatprep.mubr.bf16.mxu0 0
    %1111 = vmatmul.mubr.bf16.gmra.mrb[0].mxu0 %v1073
    %v1112 = vpop.f32.mrb[0].mxu0
    %v1113 = vadd.f32 0.0, %v1112
    %v1114 = vpop.f32.mrb[0].mxu0
    %v1115 = vpop.f32.mrb[0].mxu0
    %v1116 = vpop.f32.mrb[0].mxu0
    %1117 = vdwg.mxu0
    %1118 = vrot.lane.b32.xlu0 %v526, 64
    %v1119 = vpop.permute.xlu0 %1118
    %v1121 = vsel %vm535, %v1015, 0
    %v1124 = vsel %vm1026, %v1119, 0
    %1126 = vmatprep.subr.bf16.mxu0 0
    %1127 = vmatpush1.bf16.msra.mxu0 %v1124
    %1128 = vmatprep.subr.bf16.mxu0 0
    %1129 = vmatpush1.bf16.msra.mxu0 0
    %1130 = vmatprep.subr.bf16.mxu0 0
    %1131 = vmatpush1.bf16.msra.mxu0 0
    %1132 = vmatprep.subr.bf16.mxu0 0
    %1133 = vmatpush1.bf16.msra.mxu0 0
    %1134 = vmatprep.subr.bf16.mxu0 0
    %1135 = vmatpush1.bf16.msra.mxu0 0
    %1136 = vmatprep.subr.bf16.mxu0 0
    %1137 = vmatpush1.bf16.msra.mxu0 0
    %1138 = vmatprep.subr.bf16.mxu0 0
    %1139 = vmatpush1.bf16.msra.mxu0 0
    %1140 = vmatprep.subr.bf16.mxu0 0
    %1141 = vmatpush1.bf16.msra.mxu0 0
    %1142 = vmatprep.subr.bf16.mxu0 0
    %1143 = vmatpush1.bf16.msra.mxu0 0
    %1144 = vmatprep.subr.bf16.mxu0 0
    %1145 = vmatpush1.bf16.msra.mxu0 0
    %1146 = vmatprep.subr.bf16.mxu0 0
    %1147 = vmatpush1.bf16.msra.mxu0 0
    %1148 = vmatprep.subr.bf16.mxu0 0
    %1149 = vmatpush1.bf16.msra.mxu0 0
    %1150 = vmatprep.subr.bf16.mxu0 0
    %1151 = vmatpush1.bf16.msra.mxu0 0
    %1152 = vmatprep.subr.bf16.mxu0 0
    %1153 = vmatpush1.bf16.msra.mxu0 0
    %1154 = vmatprep.subr.bf16.mxu0 0
    %1155 = vmatpush1.bf16.msra.mxu0 0
    %1156 = vmatprep.subr.bf16.mxu0 0
    %1157 = vmatpush1.bf16.msra.mxu0 0
    %1158 = vmatprep.mubr.bf16.mxu0 0
    %1159 = vmatmul.mubr.bf16.gmra.mrb[0].mxu0 %v1121
    %v1160 = vpop.f32.mrb[0].mxu0
    %v1161 = vadd.f32 0.0, %v1160
    %v1162 = vpop.f32.mrb[0].mxu0
    %v1163 = vpop.f32.mrb[0].mxu0
    %v1164 = vpop.f32.mrb[0].mxu0
    %1165 = vdwg.mxu0
    %1166 = vrot.lane.b32.xlu0 %v527, 64
    %v1167 = vpop.permute.xlu0 %1166
    %v1169 = vsel %vm535, %v1016, 0
    %v1172 = vsel %vm1026, %v1167, 0
    %1174 = vmatprep.subr.bf16.mxu0 0
    %1175 = vmatpush1.bf16.msra.mxu0 %v1172
    %1176 = vmatprep.subr.bf16.mxu0 0
    %1177 = vmatpush1.bf16.msra.mxu0 0
    %1178 = vmatprep.subr.bf16.mxu0 0
    %1179 = vmatpush1.bf16.msra.mxu0 0
    %1180 = vmatprep.subr.bf16.mxu0 0
    %1181 = vmatpush1.bf16.msra.mxu0 0
    %1182 = vmatprep.subr.bf16.mxu0 0
    %1183 = vmatpush1.bf16.msra.mxu0 0
    %1184 = vmatprep.subr.bf16.mxu0 0
    %1185 = vmatpush1.bf16.msra.mxu0 0
    %1186 = vmatprep.subr.bf16.mxu0 0
    %1187 = vmatpush1.bf16.msra.mxu0 0
    %1188 = vmatprep.subr.bf16.mxu0 0
    %1189 = vmatpush1.bf16.msra.mxu0 0
    %1190 = vmatprep.subr.bf16.mxu0 0
    %1191 = vmatpush1.bf16.msra.mxu0 0
    %1192 = vmatprep.subr.bf16.mxu0 0
    %1193 = vmatpush1.bf16.msra.mxu0 0
    %1194 = vmatprep.subr.bf16.mxu0 0
    %1195 = vmatpush1.bf16.msra.mxu0 0
    %1196 = vmatprep.subr.bf16.mxu0 0
    %1197 = vmatpush1.bf16.msra.mxu0 0
    %1198 = vmatprep.subr.bf16.mxu0 0
    %1199 = vmatpush1.bf16.msra.mxu0 0
    %1200 = vmatprep.subr.bf16.mxu0 0
    %1201 = vmatpush1.bf16.msra.mxu0 0
    %1202 = vmatprep.subr.bf16.mxu0 0
    %1203 = vmatpush1.bf16.msra.mxu0 0
    %1204 = vmatprep.subr.bf16.mxu0 0
    %1205 = vmatpush1.bf16.msra.mxu0 0
    %1206 = vmatprep.mubr.bf16.mxu0 0
    %1207 = vmatmul.mubr.bf16.gmra.mrb[0].mxu0 %v1169
    %v1208 = vpop.f32.mrb[0].mxu0
    %v1209 = vadd.f32 0.0, %v1208
    %v1210 = vpop.f32.mrb[0].mxu0
    %v1211 = vpop.f32.mrb[0].mxu0
    %v1212 = vpop.f32.mrb[0].mxu0
    %1213 = vdwg.mxu0
    %1214 = vrot.lane.b32.xlu0 %v528, 64
    %v1215 = vpop.permute.xlu0 %1214
    %v1217 = vsel %vm535, %v1017, 0
    %v1220 = vsel %vm1026, %v1215, 0
    %1222 = vmatprep.subr.bf16.mxu0 0
    %1223 = vmatpush1.bf16.msra.mxu0 %v1220
    %1224 = vmatprep.subr.bf16.mxu0 0
    %1225 = vmatpush1.bf16.msra.mxu0 0
    %1226 = vmatprep.subr.bf16.mxu0 0
    %1227 = vmatpush1.bf16.msra.mxu0 0
    %1228 = vmatprep.subr.bf16.mxu0 0
    %1229 = vmatpush1.bf16.msra.mxu0 0
    %1230 = vmatprep.subr.bf16.mxu0 0
    %1231 = vmatpush1.bf16.msra.mxu0 0
    %1232 = vmatprep.subr.bf16.mxu0 0
    %1233 = vmatpush1.bf16.msra.mxu0 0
    %1234 = vmatprep.subr.bf16.mxu0 0
    %1235 = vmatpush1.bf16.msra.mxu0 0
    %1236 = vmatprep.subr.bf16.mxu0 0
    %1237 = vmatpush1.bf16.msra.mxu0 0
    %1238 = vmatprep.subr.bf16.mxu0 0
    %1239 = vmatpush1.bf16.msra.mxu0 0
    %1240 = vmatprep.subr.bf16.mxu0 0
    %1241 = vmatpush1.bf16.msra.mxu0 0
    %1242 = vmatprep.subr.bf16.mxu0 0
    %1243 = vmatpush1.bf16.msra.mxu0 0
    %1244 = vmatprep.subr.bf16.mxu0 0
    %1245 = vmatpush1.bf16.msra.mxu0 0
    %1246 = vmatprep.subr.bf16.mxu0 0
    %1247 = vmatpush1.bf16.msra.mxu0 0
    %1248 = vmatprep.subr.bf16.mxu0 0
    %1249 = vmatpush1.bf16.msra.mxu0 0
    %1250 = vmatprep.subr.bf16.mxu0 0
    %1251 = vmatpush1.bf16.msra.mxu0 0
    %1252 = vmatprep.subr.bf16.mxu0 0
    %1253 = vmatpush1.bf16.msra.mxu0 0
    %1254 = vmatprep.mubr.bf16.mxu0 0
    %1255 = vmatmul.mubr.bf16.gmra.mrb[0].mxu0 %v1217
    %v1256 = vpop.f32.mrb[0].mxu0
    %v1257 = vadd.f32 0.0, %v1256
    %v1258 = vpop.f32.mrb[0].mxu0
    %v1259 = vpop.f32.mrb[0].mxu0
    %v1260 = vpop.f32.mrb[0].mxu0
    %1261 = vdwg.mxu0
    %1262 = vrot.lane.b32.xlu0 %v529, 64
    %v1263 = vpop.permute.xlu0 %1262
    %v1265 = vsel %vm535, %v1018, 0
    %v1268 = vsel %vm1026, %v1263, 0
    %1270 = vmatprep.subr.bf16.mxu0 0
    %1271 = vmatpush1.bf16.msra.mxu0 %v1268
    %1272 = vmatprep.subr.bf16.mxu0 0
    %1273 = vmatpush1.bf16.msra.mxu0 0
    %1274 = vmatprep.subr.bf16.mxu0 0
    %1275 = vmatpush1.bf16.msra.mxu0 0
    %1276 = vmatprep.subr.bf16.mxu0 0
    %1277 = vmatpush1.bf16.msra.mxu0 0
    %1278 = vmatprep.subr.bf16.mxu0 0
    %1279 = vmatpush1.bf16.msra.mxu0 0
    %1280 = vmatprep.subr.bf16.mxu0 0
    %1281 = vmatpush1.bf16.msra.mxu0 0
    %1282 = vmatprep.subr.bf16.mxu0 0
    %1283 = vmatpush1.bf16.msra.mxu0 0
    %1284 = vmatprep.subr.bf16.mxu0 0
    %1285 = vmatpush1.bf16.msra.mxu0 0
    %1286 = vmatprep.subr.bf16.mxu0 0
    %1287 = vmatpush1.bf16.msra.mxu0 0
    %1288 = vmatprep.subr.bf16.mxu0 0
    %1289 = vmatpush1.bf16.msra.mxu0 0
    %1290 = vmatprep.subr.bf16.mxu0 0
    %1291 = vmatpush1.bf16.msra.mxu0 0
    %1292 = vmatprep.subr.bf16.mxu0 0
    %1293 = vmatpush1.bf16.msra.mxu0 0
    %1294 = vmatprep.subr.bf16.mxu0 0
    %1295 = vmatpush1.bf16.msra.mxu0 0
    %1296 = vmatprep.subr.bf16.mxu0 0
    %1297 = vmatpush1.bf16.msra.mxu0 0
    %1298 = vmatprep.subr.bf16.mxu0 0
    %1299 = vmatpush1.bf16.msra.mxu0 0
    %1300 = vmatprep.subr.bf16.mxu0 0
    %1301 = vmatpush1.bf16.msra.mxu0 0
    %1302 = vmatprep.mubr.bf16.mxu0 0
    %1303 = vmatmul.mubr.bf16.gmra.mrb[0].mxu0 %v1265
    %v1304 = vpop.f32.mrb[0].mxu0
    %v1305 = vadd.f32 0.0, %v1304
    %v1306 = vpop.f32.mrb[0].mxu0
    %v1307 = vpop.f32.mrb[0].mxu0
    %v1308 = vpop.f32.mrb[0].mxu0
    %1309 = vdwg.mxu0
    %1310 = vrot.lane.b32.xlu0 %v530, 64
    %v1311 = vpop.permute.xlu0 %1310
    %v1313 = vsel %vm535, %v1019, 0
    %v1316 = vsel %vm1026, %v1311, 0
    %1318 = vmatprep.subr.bf16.mxu0 0
    %1319 = vmatpush1.bf16.msra.mxu0 %v1316
    %1320 = vmatprep.subr.bf16.mxu0 0
    %1321 = vmatpush1.bf16.msra.mxu0 0
    %1322 = vmatprep.subr.bf16.mxu0 0
    %1323 = vmatpush1.bf16.msra.mxu0 0
    %1324 = vmatprep.subr.bf16.mxu0 0
    %1325 = vmatpush1.bf16.msra.mxu0 0
    %1326 = vmatprep.subr.bf16.mxu0 0
    %1327 = vmatpush1.bf16.msra.mxu0 0
    %1328 = vmatprep.subr.bf16.mxu0 0
    %1329 = vmatpush1.bf16.msra.mxu0 0
    %1330 = vmatprep.subr.bf16.mxu0 0
    %1331 = vmatpush1.bf16.msra.mxu0 0
    %1332 = vmatprep.subr.bf16.mxu0 0
    %1333 = vmatpush1.bf16.msra.mxu0 0
    %1334 = vmatprep.subr.bf16.mxu0 0
    %1335 = vmatpush1.bf16.msra.mxu0 0
    %1336 = vmatprep.subr.bf16.mxu0 0
    %1337 = vmatpush1.bf16.msra.mxu0 0
    %1338 = vmatprep.subr.bf16.mxu0 0
    %1339 = vmatpush1.bf16.msra.mxu0 0
    %1340 = vmatprep.subr.bf16.mxu0 0
    %1341 = vmatpush1.bf16.msra.mxu0 0
    %1342 = vmatprep.subr.bf16.mxu0 0
    %1343 = vmatpush1.bf16.msra.mxu0 0
    %1344 = vmatprep.subr.bf16.mxu0 0
    %1345 = vmatpush1.bf16.msra.mxu0 0
    %1346 = vmatprep.subr.bf16.mxu0 0
    %1347 = vmatpush1.bf16.msra.mxu0 0
    %1348 = vmatprep.subr.bf16.mxu0 0
    %1349 = vmatpush1.bf16.msra.mxu0 0
    %1350 = vmatprep.mubr.bf16.mxu0 0
    %1351 = vmatmul.mubr.bf16.gmra.mrb[0].mxu0 %v1313
    %v1352 = vpop.f32.mrb[0].mxu0
    %v1353 = vadd.f32 0.0, %v1352
    %v1354 = vpop.f32.mrb[0].mxu0
    %v1355 = vpop.f32.mrb[0].mxu0
    %v1356 = vpop.f32.mrb[0].mxu0
    %1357 = vdwg.mxu0
    %1358 = vrot.lane.b32.xlu0 %v531, 64
    %v1359 = vpop.permute.xlu0 %1358
    %v1361 = vsel %vm535, %v1020, 0
    %v1364 = vsel %vm1026, %v1359, 0
    %1366 = vmatprep.subr.bf16.mxu0 0
    %1367 = vmatpush1.bf16.msra.mxu0 %v1364
    %1368 = vmatprep.subr.bf16.mxu0 0
    %1369 = vmatpush1.bf16.msra.mxu0 0
    %1370 = vmatprep.subr.bf16.mxu0 0
    %1371 = vmatpush1.bf16.msra.mxu0 0
    %1372 = vmatprep.subr.bf16.mxu0 0
    %1373 = vmatpush1.bf16.msra.mxu0 0
    %1374 = vmatprep.subr.bf16.mxu0 0
    %1375 = vmatpush1.bf16.msra.mxu0 0
    %1376 = vmatprep.subr.bf16.mxu0 0
    %1377 = vmatpush1.bf16.msra.mxu0 0
    %1378 = vmatprep.subr.bf16.mxu0 0
    %1379 = vmatpush1.bf16.msra.mxu0 0
    %1380 = vmatprep.subr.bf16.mxu0 0
    %1381 = vmatpush1.bf16.msra.mxu0 0
    %1382 = vmatprep.subr.bf16.mxu0 0
    %1383 = vmatpush1.bf16.msra.mxu0 0
    %1384 = vmatprep.subr.bf16.mxu0 0
    %1385 = vmatpush1.bf16.msra.mxu0 0
    %1386 = vmatprep.subr.bf16.mxu0 0
    %1387 = vmatpush1.bf16.msra.mxu0 0
    %1388 = vmatprep.subr.bf16.mxu0 0
    %1389 = vmatpush1.bf16.msra.mxu0 0
    %1390 = vmatprep.subr.bf16.mxu0 0
    %1391 = vmatpush1.bf16.msra.mxu0 0
    %1392 = vmatprep.subr.bf16.mxu0 0
    %1393 = vmatpush1.bf16.msra.mxu0 0
    %1394 = vmatprep.subr.bf16.mxu0 0
    %1395 = vmatpush1.bf16.msra.mxu0 0
    %1396 = vmatprep.subr.bf16.mxu0 0
    %1397 = vmatpush1.bf16.msra.mxu0 0
    %1398 = vmatprep.mubr.bf16.mxu0 0
    %1399 = vmatmul.mubr.bf16.gmra.mrb[0].mxu0 %v1361
    %v1400 = vpop.f32.mrb[0].mxu0
    %v1401 = vadd.f32 0.0, %v1400
    %v1402 = vpop.f32.mrb[0].mxu0
    %v1403 = vpop.f32.mrb[0].mxu0
    %v1404 = vpop.f32.mrb[0].mxu0
    %1405 = vdwg.mxu0
    %1408 = vrot.lane.b32.xlu0 %v1161, 8
    %v1409 = vpop.permute.xlu0 %1408
    %1410 = vrot.lane.b32.xlu0 %v1209, 8
    %v1411 = vpop.permute.xlu0 %1410
    %1416 = vrot.lane.b32.xlu0 %v1257, 16
    %v1417 = vpop.permute.xlu0 %1416
    %1418 = vrot.lane.b32.xlu0 %v1305, 16
    %v1419 = vpop.permute.xlu0 %1418
    %1424 = vrot.lane.b32.xlu0 %v1353, 24
    %v1425 = vpop.permute.xlu0 %1424
    %1426 = vrot.lane.b32.xlu0 %v1401, 24
    %v1427 = vpop.permute.xlu0 %1426
    %v1430 = vsel %vm535, %v1065, %v1409
    %v1431 = vsel %vm535, %v1113, %v1411
    %vm1432 = vcmask 130048
    %v1433 = vsel %vm1432, %v1430, %v1417
    %v1434 = vsel %vm1432, %v1431, %v1419
    %vm1435 = vcmask 195584
    %v1436 = vsel %vm1435, %v1433, %v1425
    %v1437 = vsel %vm1435, %v1434, %v1427
    %v1438 = vpack.c.bf16 %v1437, %v1436
    %v1439 = vld [vmem:[#allocation8] sm:$0xf]
    %v1440 = vld [vmem:[#allocation8 + $0x4] sm:$0xf]
    %v1441 = vld [vmem:[#allocation8 + $0x8] sm:$0xf]
    %v1442 = vld [vmem:[#allocation8 + $0xc] sm:$0xf]
    %v1447 = vunpack.c.l.b16 %v1439
    %v1448 = vunpack.c.l.b16 %v1440
    %v1449 = vunpack.c.l.b16 %v1441
    %v1450 = vunpack.c.l.b16 %v1442
    %v1451 = vpack.c.b16 %v1448, %v1447
    %v1452 = vpack.c.b16 %v1450, %v1449
    %v1456 = vsel %vm418, %v1438, 0
    %1458 = vmatprep.subr.bf16.mxu0 0
    %1459 = vmatpush1.bf16.msra.mxu0 %v1451
    %1460 = vmatprep.subr.bf16.mxu0 0
    %1461 = vmatpush1.bf16.msra.mxu0 %v1452
    %1462 = vmatprep.subr.bf16.mxu0 0
    %1463 = vmatpush1.bf16.msra.mxu0 0
    %1464 = vmatprep.subr.bf16.mxu0 0
    %1465 = vmatpush1.bf16.msra.mxu0 0
    %1466 = vmatprep.subr.bf16.mxu0 0
    %1467 = vmatpush1.bf16.msra.mxu0 0
    %1468 = vmatprep.subr.bf16.mxu0 0
    %1469 = vmatpush1.bf16.msra.mxu0 0
    %1470 = vmatprep.subr.bf16.mxu0 0
    %1471 = vmatpush1.bf16.msra.mxu0 0
    %1472 = vmatprep.subr.bf16.mxu0 0
    %1473 = vmatpush1.bf16.msra.mxu0 0
    %1474 = vmatprep.subr.bf16.mxu0 0
    %1475 = vmatpush1.bf16.msra.mxu0 0
    %1476 = vmatprep.subr.bf16.mxu0 0
    %1477 = vmatpush1.bf16.msra.mxu0 0
    %1478 = vmatprep.subr.bf16.mxu0 0
    %1479 = vmatpush1.bf16.msra.mxu0 0
    %1480 = vmatprep.subr.bf16.mxu0 0
    %1481 = vmatpush1.bf16.msra.mxu0 0
    %1482 = vmatprep.subr.bf16.mxu0 0
    %1483 = vmatpush1.bf16.msra.mxu0 0
    %1484 = vmatprep.subr.bf16.mxu0 0
    %1485 = vmatpush1.bf16.msra.mxu0 0
    %1486 = vmatprep.subr.bf16.mxu0 0
    %1487 = vmatpush1.bf16.msra.mxu0 0
    %1488 = vmatprep.subr.bf16.mxu0 0
    %1489 = vmatpush1.bf16.msra.mxu0 0
    %1490 = vmatprep.mubr.bf16.mxu0 0
    %1491 = vmatmul.mubr.bf16.gmra.mrb[0].mxu0 %v1456
    %v1492 = vpop.f32.mrb[0].mxu0
    %v1493 = vadd.f32 0.0, %v1492
    %v1494 = vpop.f32.mrb[0].mxu0
    %v1495 = vpop.f32.mrb[0].mxu0
    %v1496 = vadd.f32 0.0, %v1495
    %v1497 = vpop.f32.mrb[0].mxu0
    %1498 = vdwg.mxu0
    %v1499 = vadd.f32 %v406, %v1493
    %v1500 = vadd.f32 %v409, %v1496
    %v1501 = vmul.f32 %v1499, %v1499
    %v1502 = vmul.f32 %v1500, %v1500
    %v1503 = vsel %vm418, %v1501, 0.0
    %1504 = vadd.xlane.f32.xlu0 %v1503
    %v1505 = vpop.xlane.xlu0 %1504
    %v1506 = vsel %vm418, %v1502, 0.0
    %1507 = vadd.xlane.f32.xlu0 %v1506
    %v1508 = vpop.xlane.xlu0 %1507
    %v1509 = vmul.f32 %v1505, %v425
    %v1510 = vmul.f32 %v1508, %v425
    %v1511 = vadd.f32 %v1509, 1e-06
    %v1512 = vadd.f32 %v1510, 1e-06
    %v1513 = vrsqrt.pop %v1511
    %v1514 = vrsqrt.pop %v1512
    %v1515 = vmul.f32 %v1499, %v1513
    %v1516 = vmul.f32 %v1500, %v1514
    %v1517 = vld [vmem:[%s6] sm:$0x1]
    %v1519 = vlaneseq
    %v1520 = vshrl.u32 %v1519, 7
    %v1521 = vsub.s32 0, %v1520
    %v1522 = vrot.slane %v1517, %v1521
    %v1524 = vmul.f32 %v1515, %v1522
    %v1525 = vmul.f32 %v1516, %v1522
    %v1526 = vpack.c.bf16 %v1525, %v1524
    %v1527 = vld [vmem:[#allocation10] sm:$0xf]
    %v1528 = vld [vmem:[#allocation10 + $0x4] sm:$0xf]
    %v1529 = vld [vmem:[#allocation10 + $0x8] sm:$0xf]
    %v1530 = vld [vmem:[#allocation10 + $0xc] sm:$0xf]
    %v1535 = vunpack.c.l.b16 %v1527
    %v1536 = vunpack.c.l.b16 %v1528
    %v1537 = vunpack.c.l.b16 %v1529
    %v1538 = vunpack.c.l.b16 %v1530
    %v1539 = vpack.c.b16 %v1536, %v1535
    %v1540 = vpack.c.b16 %v1538, %v1537
    %v1544 = vsel %vm418, %v1526, 0
    %1546 = vmatprep.subr.bf16.mxu0 0
    %1547 = vmatpush1.bf16.msra.mxu0 %v1539
    %1548 = vmatprep.subr.bf16.mxu0 0
    %1549 = vmatpush1.bf16.msra.mxu0 %v1540
    %1550 = vmatprep.subr.bf16.mxu0 0
    %1551 = vmatpush1.bf16.msra.mxu0 0
    %1552 = vmatprep.subr.bf16.mxu0 0
    %1553 = vmatpush1.bf16.msra.mxu0 0
    %1554 = vmatprep.subr.bf16.mxu0 0
    %1555 = vmatpush1.bf16.msra.mxu0 0
    %1556 = vmatprep.subr.bf16.mxu0 0
    %1557 = vmatpush1.bf16.msra.mxu0 0
    %1558 = vmatprep.subr.bf16.mxu0 0
    %1559 = vmatpush1.bf16.msra.mxu0 0
    %1560 = vmatprep.subr.bf16.mxu0 0
    %1561 = vmatpush1.bf16.msra.mxu0 0
    %1562 = vmatprep.subr.bf16.mxu0 0
    %1563 = vmatpush1.bf16.msra.mxu0 0
    %1564 = vmatprep.subr.bf16.mxu0 0
    %1565 = vmatpush1.bf16.msra.mxu0 0
    %1566 = vmatprep.subr.bf16.mxu0 0
    %1567 = vmatpush1.bf16.msra.mxu0 0
    %1568 = vmatprep.subr.bf16.mxu0 0
    %1569 = vmatpush1.bf16.msra.mxu0 0
    %1570 = vmatprep.subr.bf16.mxu0 0
    %1571 = vmatpush1.bf16.msra.mxu0 0
    %1572 = vmatprep.subr.bf16.mxu0 0
    %1573 = vmatpush1.bf16.msra.mxu0 0
    %1574 = vmatprep.subr.bf16.mxu0 0
    %1575 = vmatpush1.bf16.msra.mxu0 0
    %1576 = vmatprep.subr.bf16.mxu0 0
    %1577 = vmatpush1.bf16.msra.mxu0 0
    %1578 = vmatprep.mubr.bf16.mxu0 0
    %1579 = vmatmul.mubr.bf16.gmra.mrb[0].mxu0 %v1544
    %v1580 = vpop.f32.mrb[0].mxu0
    %v1581 = vadd.f32 0.0, %v1580
    %v1582 = vpop.f32.mrb[0].mxu0
    %v1583 = vpop.f32.mrb[0].mxu0
    %v1584 = vadd.f32 0.0, %v1583
    %v1585 = vpop.f32.mrb[0].mxu0
    %1586 = vdwg.mxu0
    %v1587 = vmax.f32 %v1581, 0.0
    %v1588 = vmax.f32 %v1584, 0.0
    %v1589 = vpack.c.bf16 %v1588, %v1587
    %v1590 = vld [vmem:[%s8] sm:$0xf]
    %v1591 = vld [vmem:[%s8 + $0x4] sm:$0xf]
    %v1592 = vld [vmem:[%s8 + $0x8] sm:$0xf]
    %v1593 = vld [vmem:[%s8 + $0xc] sm:$0xf]
    %v1594 = vld [vmem:[%s8 + $0x10] sm:$0xf]
    %v1595 = vld [vmem:[%s8 + $0x14] sm:$0xf]
    %v1596 = vld [vmem:[%s8 + $0x18] sm:$0xf]
    %v1597 = vld [vmem:[%s8 + $0x1c] sm:$0xf]
    %v1606 = vunpack.c.l.b16 %v1590
    %v1607 = vunpack.c.l.b16 %v1591
    %v1608 = vunpack.c.l.b16 %v1592
    %v1609 = vunpack.c.l.b16 %v1593
    %v1610 = vunpack.c.l.b16 %v1594
    %v1611 = vunpack.c.l.b16 %v1595
    %v1612 = vunpack.c.l.b16 %v1596
    %v1613 = vunpack.c.l.b16 %v1597
    %v1614 = vpack.c.b16 %v1607, %v1606
    %v1615 = vpack.c.b16 %v1609, %v1608
    %v1616 = vpack.c.b16 %v1611, %v1610
    %v1617 = vpack.c.b16 %v1613, %v1612
    %vm1622 = vcmask 523264
    %v1624 = vsel %vm1622, %v1589, 0
    %1626 = vmatprep.subr.bf16.mxu0 0
    %1627 = vmatpush1.bf16.msra.mxu0 %v1614
    %1628 = vmatprep.subr.bf16.mxu0 0
    %1629 = vmatpush1.bf16.msra.mxu0 %v1615
    %1630 = vmatprep.subr.bf16.mxu0 0
    %1631 = vmatpush1.bf16.msra.mxu0 %v1616
    %1632 = vmatprep.subr.bf16.mxu0 0
    %1633 = vmatpush1.bf16.msra.mxu0 %v1617
    %1634 = vmatprep.subr.bf16.mxu0 0
    %1635 = vmatpush1.bf16.msra.mxu0 0
    %1636 = vmatprep.subr.bf16.mxu0 0
    %1637 = vmatpush1.bf16.msra.mxu0 0
    %1638 = vmatprep.subr.bf16.mxu0 0
    %1639 = vmatpush1.bf16.msra.mxu0 0
    %1640 = vmatprep.subr.bf16.mxu0 0
    %1641 = vmatpush1.bf16.msra.mxu0 0
    %1642 = vmatprep.subr.bf16.mxu0 0
    %1643 = vmatpush1.bf16.msra.mxu0 0
    %1644 = vmatprep.subr.bf16.mxu0 0
    %1645 = vmatpush1.bf16.msra.mxu0 0
    %1646 = vmatprep.subr.bf16.mxu0 0
    %1647 = vmatpush1.bf16.msra.mxu0 0
    %1648 = vmatprep.subr.bf16.mxu0 0
    %1649 = vmatpush1.bf16.msra.mxu0 0
    %1650 = vmatprep.subr.bf16.mxu0 0
    %1651 = vmatpush1.bf16.msra.mxu0 0
    %1652 = vmatprep.subr.bf16.mxu0 0
    %1653 = vmatpush1.bf16.msra.mxu0 0
    %1654 = vmatprep.subr.bf16.mxu0 0
    %1655 = vmatpush1.bf16.msra.mxu0 0
    %1656 = vmatprep.subr.bf16.mxu0 0
    %1657 = vmatpush1.bf16.msra.mxu0 0
    %1658 = vmatprep.mubr.bf16.mxu0 0
    %1659 = vmatmul.mubr.bf16.gmra.mrb[0].mxu0 %v1624
    %v1660 = vpop.f32.mrb[0].mxu0
    %v1661 = vadd.f32 0.0, %v1660
    %v1662 = vpop.f32.mrb[0].mxu0
    %v1663 = vpop.f32.mrb[0].mxu0
    %v1664 = vadd.f32 0.0, %v1663
    %v1665 = vpop.f32.mrb[0].mxu0
    %1666 = vdwg.mxu0
    %v1667 = vadd.f32 %v1499, %v1661
    %v1668 = vadd.f32 %v1500, %v1664
    %v1669 = vmul.f32 %v1667, %v1667
    %v1670 = vmul.f32 %v1668, %v1668
    %v1671 = vsel %vm418, %v1669, 0.0
    %1672 = vadd.xlane.f32.xlu0 %v1671
    %v1673 = vpop.xlane.xlu0 %1672
    %v1674 = vsel %vm418, %v1670, 0.0
    %1675 = vadd.xlane.f32.xlu0 %v1674
    %v1676 = vpop.xlane.xlu0 %1675
    %v1677 = vmul.f32 %v1673, %v425
    %v1678 = vmul.f32 %v1676, %v425
    %v1679 = vadd.f32 %v1677, 1e-06
    %v1680 = vadd.f32 %v1678, 1e-06
    %v1681 = vrsqrt.pop %v1679
    %v1682 = vrsqrt.pop %v1680
    %v1683 = vmul.f32 %v1667, %v1681
    %v1684 = vmul.f32 %v1668, %v1682
    %s1685 = scalar_lea.vmem %s3, 1
    %v1686 = vld [vmem:[%s1685] sm:$0x1]
    %v1688 = vlaneseq
    %v1689 = vshrl.u32 %v1688, 7
    %v1690 = vsub.s32 0, %v1689
    %v1691 = vrot.slane %v1686, %v1690
    %v1693 = vmul.f32 %v1683, %v1691
    %v1694 = vmul.f32 %v1684, %v1691
    %v1695 = vpack.c.bf16 %v1694, %v1693
    %s1696 = scalar_lea.vmem [#allocation7], 16
    %v1697 = vld [vmem:[%s1696] sm:$0xf]
    %v1698 = vld [vmem:[%s1696 + $0x4] sm:$0xf]
    %v1699 = vld [vmem:[%s1696 + $0x8] sm:$0xf]
    %v1700 = vld [vmem:[%s1696 + $0xc] sm:$0xf]
    %v1705 = vunpack.c.l.b16 %v1697
    %v1706 = vunpack.c.l.b16 %v1698
    %v1707 = vunpack.c.l.b16 %v1699
    %v1708 = vunpack.c.l.b16 %v1700
    %v1709 = vpack.c.b16 %v1706, %v1705
    %v1710 = vpack.c.b16 %v1708, %v1707
    %v1714 = vsel %vm418, %v1695, 0
    %1716 = vmatprep.subr.bf16.mxu0 0
    %1717 = vmatpush1.bf16.msra.mxu0 %v1709
    %1718 = vmatprep.subr.bf16.mxu0 0
    %1719 = vmatpush1.bf16.msra.mxu0 %v1710
    %1720 = vmatprep.subr.bf16.mxu0 0
    %1721 = vmatpush1.bf16.msra.mxu0 0
    %1722 = vmatprep.subr.bf16.mxu0 0
    %1723 = vmatpush1.bf16.msra.mxu0 0
    %1724 = vmatprep.subr.bf16.mxu0 0
    %1725 = vmatpush1.bf16.msra.mxu0 0
    %1726 = vmatprep.subr.bf16.mxu0 0
    %1727 = vmatpush1.bf16.msra.mxu0 0
    %1728 = vmatprep.subr.bf16.mxu0 0
    %1729 = vmatpush1.bf16.msra.mxu0 0
    %1730 = vmatprep.subr.bf16.mxu0 0
    %1731 = vmatpush1.bf16.msra.mxu0 0
    %1732 = vmatprep.subr.bf16.mxu0 0
    %1733 = vmatpush1.bf16.msra.mxu0 0
    %1734 = vmatprep.subr.bf16.mxu0 0
    %1735 = vmatpush1.bf16.msra.mxu0 0
    %1736 = vmatprep.subr.bf16.mxu0 0
    %1737 = vmatpush1.bf16.msra.mxu0 0
    %1738 = vmatprep.subr.bf16.mxu0 0
    %1739 = vmatpush1.bf16.msra.mxu0 0
    %1740 = vmatprep.subr.bf16.mxu0 0
    %1741 = vmatpush1.bf16.msra.mxu0 0
    %1742 = vmatprep.subr.bf16.mxu0 0
    %1743 = vmatpush1.bf16.msra.mxu0 0
    %1744 = vmatprep.subr.bf16.mxu0 0
    %1745 = vmatpush1.bf16.msra.mxu0 0
    %1746 = vmatprep.subr.bf16.mxu0 0
    %1747 = vmatpush1.bf16.msra.mxu0 0
    %1748 = vmatprep.mubr.bf16.mxu0 0
    %1749 = vmatmul.mubr.bf16.gmra.mrb[0].mxu0 %v1714
    %v1750 = vpop.f32.mrb[0].mxu0
    %v1751 = vadd.f32 0.0, %v1750
    %v1752 = vpop.f32.mrb[0].mxu0
    %v1753 = vpop.f32.mrb[0].mxu0
    %v1754 = vadd.f32 0.0, %v1753
    %v1755 = vpop.f32.mrb[0].mxu0
    %1756 = vdwg.mxu0
    %1759 = vrot.lane.b32.xlu0 %v1751, 120
    %v1760 = vpop.permute.xlu0 %1759
    %1761 = vrot.lane.b32.xlu0 %v1754, 120
    %v1762 = vpop.permute.xlu0 %1761
    %1765 = vrot.lane.b32.xlu0 %v1751, 112
    %v1766 = vpop.permute.xlu0 %1765
    %1767 = vrot.lane.b32.xlu0 %v1754, 112
    %v1768 = vpop.permute.xlu0 %1767
    %1771 = vrot.lane.b32.xlu0 %v1751, 104
    %v1772 = vpop.permute.xlu0 %1771
    %1773 = vrot.lane.b32.xlu0 %v1754, 104
    %v1774 = vpop.permute.xlu0 %1773
    %v1777 = vpack.c.bf16 %v1751, %v1751
    %v1778 = vpack.c.bf16 %v1754, %v1754
    %v1779 = vpack.c.bf16 %v1760, %v1760
    %v1780 = vpack.c.bf16 %v1762, %v1762
    %v1781 = vpack.c.bf16 %v1766, %v1766
    %v1782 = vpack.c.bf16 %v1768, %v1768
    %v1783 = vpack.c.bf16 %v1772, %v1772
    %v1784 = vpack.c.bf16 %v1774, %v1774
    %1786 = vrot.lane.b32.xlu0 %v1777, 96
    %v1787 = vpop.permute.xlu0 %1786
    %v1789 = vsel %vm535, %v1777, 0
    %v1792 = vsel %vm535, %v1787, 0
    %1794 = vmatprep.subr.bf16.mxu0 0
    %1795 = vmatpush1.bf16.xpose.msra.mxu0 %v1792
    %1796 = vmatprep.subr.bf16.mxu0 0
    %1797 = vmatpush1.bf16.xpose.msra.mxu0 0
    %1798 = vmatprep.subr.bf16.mxu0 0
    %1799 = vmatpush1.bf16.xpose.msra.mxu0 0
    %1800 = vmatprep.subr.bf16.mxu0 0
    %1801 = vmatpush1.bf16.xpose.msra.mxu0 0
    %1802 = vmatprep.subr.bf16.mxu0 0
    %1803 = vmatpush1.bf16.xpose.msra.mxu0 0
    %1804 = vmatprep.subr.bf16.mxu0 0
    %1805 = vmatpush1.bf16.xpose.msra.mxu0 0
    %1806 = vmatprep.subr.bf16.mxu0 0
    %1807 = vmatpush1.bf16.xpose.msra.mxu0 0
    %1808 = vmatprep.subr.bf16.mxu0 0
    %1809 = vmatpush1.bf16.xpose.msra.mxu0 0
    %1810 = vmatprep.subr.bf16.mxu0 0
    %1811 = vmatpush1.bf16.xpose.msra.mxu0 0
    %1812 = vmatprep.subr.bf16.mxu0 0
    %1813 = vmatpush1.bf16.xpose.msra.mxu0 0
    %1814 = vmatprep.subr.bf16.mxu0 0
    %1815 = vmatpush1.bf16.xpose.msra.mxu0 0
    %1816 = vmatprep.subr.bf16.mxu0 0
    %1817 = vmatpush1.bf16.xpose.msra.mxu0 0
    %1818 = vmatprep.subr.bf16.mxu0 0
    %1819 = vmatpush1.bf16.xpose.msra.mxu0 0
    %1820 = vmatprep.subr.bf16.mxu0 0
    %1821 = vmatpush1.bf16.xpose.msra.mxu0 0
    %1822 = vmatprep.subr.bf16.mxu0 0
    %1823 = vmatpush1.bf16.xpose.msra.mxu0 0
    %1824 = vmatprep.subr.bf16.mxu0 0
    %1825 = vmatpush1.bf16.xpose.msra.mxu0 0
    %1826 = vmatprep.mubr.bf16.mxu0 0
    %1827 = vmatmul.mubr.bf16.gmra.mrb[0].mxu0 %v1789
    %v1828 = vpop.f32.mrb[0].mxu0
    %v1829 = vadd.f32 %v412, %v1828
    %v1830 = vpop.f32.mrb[0].mxu0
    %v1831 = vpop.f32.mrb[0].mxu0
    %v1832 = vpop.f32.mrb[0].mxu0
    %1833 = vdwg.mxu0
    %1835 = vrot.lane.b32.xlu0 %v1778, 96
    %v1836 = vpop.permute.xlu0 %1835
    %v1838 = vsel %vm535, %v1778, 0
    %v1841 = vsel %vm535, %v1836, 0
    %1843 = vmatprep.subr.bf16.mxu0 0
    %1844 = vmatpush1.bf16.xpose.msra.mxu0 %v1841
    %1845 = vmatprep.subr.bf16.mxu0 0
    %1846 = vmatpush1.bf16.xpose.msra.mxu0 0
    %1847 = vmatprep.subr.bf16.mxu0 0
    %1848 = vmatpush1.bf16.xpose.msra.mxu0 0
    %1849 = vmatprep.subr.bf16.mxu0 0
    %1850 = vmatpush1.bf16.xpose.msra.mxu0 0
    %1851 = vmatprep.subr.bf16.mxu0 0
    %1852 = vmatpush1.bf16.xpose.msra.mxu0 0
    %1853 = vmatprep.subr.bf16.mxu0 0
    %1854 = vmatpush1.bf16.xpose.msra.mxu0 0
    %1855 = vmatprep.subr.bf16.mxu0 0
    %1856 = vmatpush1.bf16.xpose.msra.mxu0 0
    %1857 = vmatprep.subr.bf16.mxu0 0
    %1858 = vmatpush1.bf16.xpose.msra.mxu0 0
    %1859 = vmatprep.subr.bf16.mxu0 0
    %1860 = vmatpush1.bf16.xpose.msra.mxu0 0
    %1861 = vmatprep.subr.bf16.mxu0 0
    %1862 = vmatpush1.bf16.xpose.msra.mxu0 0
    %1863 = vmatprep.subr.bf16.mxu0 0
    %1864 = vmatpush1.bf16.xpose.msra.mxu0 0
    %1865 = vmatprep.subr.bf16.mxu0 0
    %1866 = vmatpush1.bf16.xpose.msra.mxu0 0
    %1867 = vmatprep.subr.bf16.mxu0 0
    %1868 = vmatpush1.bf16.xpose.msra.mxu0 0
    %1869 = vmatprep.subr.bf16.mxu0 0
    %1870 = vmatpush1.bf16.xpose.msra.mxu0 0
    %1871 = vmatprep.subr.bf16.mxu0 0
    %1872 = vmatpush1.bf16.xpose.msra.mxu0 0
    %1873 = vmatprep.subr.bf16.mxu0 0
    %1874 = vmatpush1.bf16.xpose.msra.mxu0 0
    %1875 = vmatprep.mubr.bf16.mxu0 0
    %1876 = vmatmul.mubr.bf16.gmra.mrb[0].mxu0 %v1838
    %v1877 = vpop.f32.mrb[0].mxu0
    %v1878 = vadd.f32 %v412, %v1877
    %v1879 = vpop.f32.mrb[0].mxu0
    %v1880 = vpop.f32.mrb[0].mxu0
    %v1881 = vpop.f32.mrb[0].mxu0
    %1882 = vdwg.mxu0
    %1884 = vrot.lane.b32.xlu0 %v1779, 96
    %v1885 = vpop.permute.xlu0 %1884
    %v1887 = vsel %vm535, %v1779, 0
    %v1890 = vsel %vm535, %v1885, 0
    %1892 = vmatprep.subr.bf16.mxu0 0
    %1893 = vmatpush1.bf16.xpose.msra.mxu0 %v1890
    %1894 = vmatprep.subr.bf16.mxu0 0
    %1895 = vmatpush1.bf16.xpose.msra.mxu0 0
    %1896 = vmatprep.subr.bf16.mxu0 0
    %1897 = vmatpush1.bf16.xpose.msra.mxu0 0
    %1898 = vmatprep.subr.bf16.mxu0 0
    %1899 = vmatpush1.bf16.xpose.msra.mxu0 0
    %1900 = vmatprep.subr.bf16.mxu0 0
    %1901 = vmatpush1.bf16.xpose.msra.mxu0 0
    %1902 = vmatprep.subr.bf16.mxu0 0
    %1903 = vmatpush1.bf16.xpose.msra.mxu0 0
    %1904 = vmatprep.subr.bf16.mxu0 0
    %1905 = vmatpush1.bf16.xpose.msra.mxu0 0
    %1906 = vmatprep.subr.bf16.mxu0 0
    %1907 = vmatpush1.bf16.xpose.msra.mxu0 0
    %1908 = vmatprep.subr.bf16.mxu0 0
    %1909 = vmatpush1.bf16.xpose.msra.mxu0 0
    %1910 = vmatprep.subr.bf16.mxu0 0
    %1911 = vmatpush1.bf16.xpose.msra.mxu0 0
    %1912 = vmatprep.subr.bf16.mxu0 0
    %1913 = vmatpush1.bf16.xpose.msra.mxu0 0
    %1914 = vmatprep.subr.bf16.mxu0 0
    %1915 = vmatpush1.bf16.xpose.msra.mxu0 0
    %1916 = vmatprep.subr.bf16.mxu0 0
    %1917 = vmatpush1.bf16.xpose.msra.mxu0 0
    %1918 = vmatprep.subr.bf16.mxu0 0
    %1919 = vmatpush1.bf16.xpose.msra.mxu0 0
    %1920 = vmatprep.subr.bf16.mxu0 0
    %1921 = vmatpush1.bf16.xpose.msra.mxu0 0
    %1922 = vmatprep.subr.bf16.mxu0 0
    %1923 = vmatpush1.bf16.xpose.msra.mxu0 0
    %1924 = vmatprep.mubr.bf16.mxu0 0
    %1925 = vmatmul.mubr.bf16.gmra.mrb[0].mxu0 %v1887
    %v1926 = vpop.f32.mrb[0].mxu0
    %v1927 = vadd.f32 %v413, %v1926
    %v1928 = vpop.f32.mrb[0].mxu0
    %v1929 = vpop.f32.mrb[0].mxu0
    %v1930 = vpop.f32.mrb[0].mxu0
    %1931 = vdwg.mxu0
    %1933 = vrot.lane.b32.xlu0 %v1780, 96
    %v1934 = vpop.permute.xlu0 %1933
    %v1936 = vsel %vm535, %v1780, 0
    %v1939 = vsel %vm535, %v1934, 0
    %1941 = vmatprep.subr.bf16.mxu0 0
    %1942 = vmatpush1.bf16.xpose.msra.mxu0 %v1939
    %1943 = vmatprep.subr.bf16.mxu0 0
    %1944 = vmatpush1.bf16.xpose.msra.mxu0 0
    %1945 = vmatprep.subr.bf16.mxu0 0
    %1946 = vmatpush1.bf16.xpose.msra.mxu0 0
    %1947 = vmatprep.subr.bf16.mxu0 0
    %1948 = vmatpush1.bf16.xpose.msra.mxu0 0
    %1949 = vmatprep.subr.bf16.mxu0 0
    %1950 = vmatpush1.bf16.xpose.msra.mxu0 0
    %1951 = vmatprep.subr.bf16.mxu0 0
    %1952 = vmatpush1.bf16.xpose.msra.mxu0 0
    %1953 = vmatprep.subr.bf16.mxu0 0
    %1954 = vmatpush1.bf16.xpose.msra.mxu0 0
    %1955 = vmatprep.subr.bf16.mxu0 0
    %1956 = vmatpush1.bf16.xpose.msra.mxu0 0
    %1957 = vmatprep.subr.bf16.mxu0 0
    %1958 = vmatpush1.bf16.xpose.msra.mxu0 0
    %1959 = vmatprep.subr.bf16.mxu0 0
    %1960 = vmatpush1.bf16.xpose.msra.mxu0 0
    %1961 = vmatprep.subr.bf16.mxu0 0
    %1962 = vmatpush1.bf16.xpose.msra.mxu0 0
    %1963 = vmatprep.subr.bf16.mxu0 0
    %1964 = vmatpush1.bf16.xpose.msra.mxu0 0
    %1965 = vmatprep.subr.bf16.mxu0 0
    %1966 = vmatpush1.bf16.xpose.msra.mxu0 0
    %1967 = vmatprep.subr.bf16.mxu0 0
    %1968 = vmatpush1.bf16.xpose.msra.mxu0 0
    %1969 = vmatprep.subr.bf16.mxu0 0
    %1970 = vmatpush1.bf16.xpose.msra.mxu0 0
    %1971 = vmatprep.subr.bf16.mxu0 0
    %1972 = vmatpush1.bf16.xpose.msra.mxu0 0
    %1973 = vmatprep.mubr.bf16.mxu0 0
    %1974 = vmatmul.mubr.bf16.gmra.mrb[0].mxu0 %v1936
    %v1975 = vpop.f32.mrb[0].mxu0
    %v1976 = vadd.f32 %v413, %v1975
    %v1977 = vpop.f32.mrb[0].mxu0
    %v1978 = vpop.f32.mrb[0].mxu0
    %v1979 = vpop.f32.mrb[0].mxu0
    %1980 = vdwg.mxu0
    %1982 = vrot.lane.b32.xlu0 %v1781, 96
    %v1983 = vpop.permute.xlu0 %1982
    %v1985 = vsel %vm535, %v1781, 0
    %v1988 = vsel %vm535, %v1983, 0
    %1990 = vmatprep.subr.bf16.mxu0 0
    %1991 = vmatpush1.bf16.xpose.msra.mxu0 %v1988
    %1992 = vmatprep.subr.bf16.mxu0 0
    %1993 = vmatpush1.bf16.xpose.msra.mxu0 0
    %1994 = vmatprep.subr.bf16.mxu0 0
    %1995 = vmatpush1.bf16.xpose.msra.mxu0 0
    %1996 = vmatprep.subr.bf16.mxu0 0
    %1997 = vmatpush1.bf16.xpose.msra.mxu0 0
    %1998 = vmatprep.subr.bf16.mxu0 0
    %1999 = vmatpush1.bf16.xpose.msra.mxu0 0
    %2000 = vmatprep.subr.bf16.mxu0 0
    %2001 = vmatpush1.bf16.xpose.msra.mxu0 0
    %2002 = vmatprep.subr.bf16.mxu0 0
    %2003 = vmatpush1.bf16.xpose.msra.mxu0 0
    %2004 = vmatprep.subr.bf16.mxu0 0
    %2005 = vmatpush1.bf16.xpose.msra.mxu0 0
    %2006 = vmatprep.subr.bf16.mxu0 0
    %2007 = vmatpush1.bf16.xpose.msra.mxu0 0
    %2008 = vmatprep.subr.bf16.mxu0 0
    %2009 = vmatpush1.bf16.xpose.msra.mxu0 0
    %2010 = vmatprep.subr.bf16.mxu0 0
    %2011 = vmatpush1.bf16.xpose.msra.mxu0 0
    %2012 = vmatprep.subr.bf16.mxu0 0
    %2013 = vmatpush1.bf16.xpose.msra.mxu0 0
    %2014 = vmatprep.subr.bf16.mxu0 0
    %2015 = vmatpush1.bf16.xpose.msra.mxu0 0
    %2016 = vmatprep.subr.bf16.mxu0 0
    %2017 = vmatpush1.bf16.xpose.msra.mxu0 0
    %2018 = vmatprep.subr.bf16.mxu0 0
    %2019 = vmatpush1.bf16.xpose.msra.mxu0 0
    %2020 = vmatprep.subr.bf16.mxu0 0
    %2021 = vmatpush1.bf16.xpose.msra.mxu0 0
    %2022 = vmatprep.mubr.bf16.mxu0 0
    %2023 = vmatmul.mubr.bf16.gmra.mrb[0].mxu0 %v1985
    %v2024 = vpop.f32.mrb[0].mxu0
    %v2025 = vadd.f32 %v414, %v2024
    %v2026 = vpop.f32.mrb[0].mxu0
    %v2027 = vpop.f32.mrb[0].mxu0
    %v2028 = vpop.f32.mrb[0].mxu0
    %2029 = vdwg.mxu0
    %2031 = vrot.lane.b32.xlu0 %v1782, 96
    %v2032 = vpop.permute.xlu0 %2031
    %v2034 = vsel %vm535, %v1782, 0
    %v2037 = vsel %vm535, %v2032, 0
    %2039 = vmatprep.subr.bf16.mxu0 0
    %2040 = vmatpush1.bf16.xpose.msra.mxu0 %v2037
    %2041 = vmatprep.subr.bf16.mxu0 0
    %2042 = vmatpush1.bf16.xpose.msra.mxu0 0
    %2043 = vmatprep.subr.bf16.mxu0 0
    %2044 = vmatpush1.bf16.xpose.msra.mxu0 0
    %2045 = vmatprep.subr.bf16.mxu0 0
    %2046 = vmatpush1.bf16.xpose.msra.mxu0 0
    %2047 = vmatprep.subr.bf16.mxu0 0
    %2048 = vmatpush1.bf16.xpose.msra.mxu0 0
    %2049 = vmatprep.subr.bf16.mxu0 0
    %2050 = vmatpush1.bf16.xpose.msra.mxu0 0
    %2051 = vmatprep.subr.bf16.mxu0 0
    %2052 = vmatpush1.bf16.xpose.msra.mxu0 0
    %2053 = vmatprep.subr.bf16.mxu0 0
    %2054 = vmatpush1.bf16.xpose.msra.mxu0 0
    %2055 = vmatprep.subr.bf16.mxu0 0
    %2056 = vmatpush1.bf16.xpose.msra.mxu0 0
    %2057 = vmatprep.subr.bf16.mxu0 0
    %2058 = vmatpush1.bf16.xpose.msra.mxu0 0
    %2059 = vmatprep.subr.bf16.mxu0 0
    %2060 = vmatpush1.bf16.xpose.msra.mxu0 0
    %2061 = vmatprep.subr.bf16.mxu0 0
    %2062 = vmatpush1.bf16.xpose.msra.mxu0 0
    %2063 = vmatprep.subr.bf16.mxu0 0
    %2064 = vmatpush1.bf16.xpose.msra.mxu0 0
    %2065 = vmatprep.subr.bf16.mxu0 0
    %2066 = vmatpush1.bf16.xpose.msra.mxu0 0
    %2067 = vmatprep.subr.bf16.mxu0 0
    %2068 = vmatpush1.bf16.xpose.msra.mxu0 0
    %2069 = vmatprep.subr.bf16.mxu0 0
    %2070 = vmatpush1.bf16.xpose.msra.mxu0 0
    %2071 = vmatprep.mubr.bf16.mxu0 0
    %2072 = vmatmul.mubr.bf16.gmra.mrb[0].mxu0 %v2034
    %v2073 = vpop.f32.mrb[0].mxu0
    %v2074 = vadd.f32 %v414, %v2073
    %v2075 = vpop.f32.mrb[0].mxu0
    %v2076 = vpop.f32.mrb[0].mxu0
    %v2077 = vpop.f32.mrb[0].mxu0
    %2078 = vdwg.mxu0
    %2080 = vrot.lane.b32.xlu0 %v1783, 96
    %v2081 = vpop.permute.xlu0 %2080
    %v2083 = vsel %vm535, %v1783, 0
    %v2086 = vsel %vm535, %v2081, 0
    %2088 = vmatprep.subr.bf16.mxu0 0
    %2089 = vmatpush1.bf16.xpose.msra.mxu0 %v2086
    %2090 = vmatprep.subr.bf16.mxu0 0
    %2091 = vmatpush1.bf16.xpose.msra.mxu0 0
    %2092 = vmatprep.subr.bf16.mxu0 0
    %2093 = vmatpush1.bf16.xpose.msra.mxu0 0
    %2094 = vmatprep.subr.bf16.mxu0 0
    %2095 = vmatpush1.bf16.xpose.msra.mxu0 0
    %2096 = vmatprep.subr.bf16.mxu0 0
    %2097 = vmatpush1.bf16.xpose.msra.mxu0 0
    %2098 = vmatprep.subr.bf16.mxu0 0
    %2099 = vmatpush1.bf16.xpose.msra.mxu0 0
    %2100 = vmatprep.subr.bf16.mxu0 0
    %2101 = vmatpush1.bf16.xpose.msra.mxu0 0
    %2102 = vmatprep.subr.bf16.mxu0 0
    %2103 = vmatpush1.bf16.xpose.msra.mxu0 0
    %2104 = vmatprep.subr.bf16.mxu0 0
    %2105 = vmatpush1.bf16.xpose.msra.mxu0 0
    %2106 = vmatprep.subr.bf16.mxu0 0
    %2107 = vmatpush1.bf16.xpose.msra.mxu0 0
    %2108 = vmatprep.subr.bf16.mxu0 0
    %2109 = vmatpush1.bf16.xpose.msra.mxu0 0
    %2110 = vmatprep.subr.bf16.mxu0 0
    %2111 = vmatpush1.bf16.xpose.msra.mxu0 0
    %2112 = vmatprep.subr.bf16.mxu0 0
    %2113 = vmatpush1.bf16.xpose.msra.mxu0 0
    %2114 = vmatprep.subr.bf16.mxu0 0
    %2115 = vmatpush1.bf16.xpose.msra.mxu0 0
    %2116 = vmatprep.subr.bf16.mxu0 0
    %2117 = vmatpush1.bf16.xpose.msra.mxu0 0
    %2118 = vmatprep.subr.bf16.mxu0 0
    %2119 = vmatpush1.bf16.xpose.msra.mxu0 0
    %2120 = vmatprep.mubr.bf16.mxu0 0
    %2121 = vmatmul.mubr.bf16.gmra.mrb[0].mxu0 %v2083
    %v2122 = vpop.f32.mrb[0].mxu0
    %v2123 = vadd.f32 %v415, %v2122
    %v2124 = vpop.f32.mrb[0].mxu0
    %v2125 = vpop.f32.mrb[0].mxu0
    %v2126 = vpop.f32.mrb[0].mxu0
    %2127 = vdwg.mxu0
    %2129 = vrot.lane.b32.xlu0 %v1784, 96
    %v2130 = vpop.permute.xlu0 %2129
    %v2132 = vsel %vm535, %v1784, 0
    %v2135 = vsel %vm535, %v2130, 0
    %2137 = vmatprep.subr.bf16.mxu0 0
    %2138 = vmatpush1.bf16.xpose.msra.mxu0 %v2135
    %2139 = vmatprep.subr.bf16.mxu0 0
    %2140 = vmatpush1.bf16.xpose.msra.mxu0 0
    %2141 = vmatprep.subr.bf16.mxu0 0
    %2142 = vmatpush1.bf16.xpose.msra.mxu0 0
    %2143 = vmatprep.subr.bf16.mxu0 0
    %2144 = vmatpush1.bf16.xpose.msra.mxu0 0
    %2145 = vmatprep.subr.bf16.mxu0 0
    %2146 = vmatpush1.bf16.xpose.msra.mxu0 0
    %2147 = vmatprep.subr.bf16.mxu0 0
    %2148 = vmatpush1.bf16.xpose.msra.mxu0 0
    %2149 = vmatprep.subr.bf16.mxu0 0
    %2150 = vmatpush1.bf16.xpose.msra.mxu0 0
    %2151 = vmatprep.subr.bf16.mxu0 0
    %2152 = vmatpush1.bf16.xpose.msra.mxu0 0
    %2153 = vmatprep.subr.bf16.mxu0 0
    %2154 = vmatpush1.bf16.xpose.msra.mxu0 0
    %2155 = vmatprep.subr.bf16.mxu0 0
    %2156 = vmatpush1.bf16.xpose.msra.mxu0 0
    %2157 = vmatprep.subr.bf16.mxu0 0
    %2158 = vmatpush1.bf16.xpose.msra.mxu0 0
    %2159 = vmatprep.subr.bf16.mxu0 0
    %2160 = vmatpush1.bf16.xpose.msra.mxu0 0
    %2161 = vmatprep.subr.bf16.mxu0 0
    %2162 = vmatpush1.bf16.xpose.msra.mxu0 0
    %2163 = vmatprep.subr.bf16.mxu0 0
    %2164 = vmatpush1.bf16.xpose.msra.mxu0 0
    %2165 = vmatprep.subr.bf16.mxu0 0
    %2166 = vmatpush1.bf16.xpose.msra.mxu0 0
    %2167 = vmatprep.subr.bf16.mxu0 0
    %2168 = vmatpush1.bf16.xpose.msra.mxu0 0
    %2169 = vmatprep.mubr.bf16.mxu0 0
    %2170 = vmatmul.mubr.bf16.gmra.mrb[0].mxu0 %v2132
    %v2171 = vpop.f32.mrb[0].mxu0
    %v2172 = vadd.f32 %v415, %v2171
    %v2173 = vpop.f32.mrb[0].mxu0
    %v2174 = vpop.f32.mrb[0].mxu0
    %v2175 = vpop.f32.mrb[0].mxu0
    %2176 = vdwg.mxu0
    %v2177 = vsel %vm535, %v1829, -inf
    %2178 = vmax.xlane.f32.xlu0 %v2177
    %v2179 = vpop.xlane.xlu0 %2178
    %v2180 = vsel %vm535, %v1878, -inf
    %2181 = vmax.xlane.f32.xlu0 %v2180
    %v2182 = vpop.xlane.xlu0 %2181
    %v2183 = vsel %vm535, %v1927, -inf
    %2184 = vmax.xlane.f32.xlu0 %v2183
    %v2185 = vpop.xlane.xlu0 %2184
    %v2186 = vsel %vm535, %v1976, -inf
    %2187 = vmax.xlane.f32.xlu0 %v2186
    %v2188 = vpop.xlane.xlu0 %2187
    %v2189 = vsel %vm535, %v2025, -inf
    %2190 = vmax.xlane.f32.xlu0 %v2189
    %v2191 = vpop.xlane.xlu0 %2190
    %v2192 = vsel %vm535, %v2074, -inf
    %2193 = vmax.xlane.f32.xlu0 %v2192
    %v2194 = vpop.xlane.xlu0 %2193
    %v2195 = vsel %vm535, %v2123, -inf
    %2196 = vmax.xlane.f32.xlu0 %v2195
    %v2197 = vpop.xlane.xlu0 %2196
    %v2198 = vsel %vm535, %v2172, -inf
    %2199 = vmax.xlane.f32.xlu0 %v2198
    %v2200 = vpop.xlane.xlu0 %2199
    %v2201 = vsub.f32 %v1829, %v2179
    %v2202 = vsub.f32 %v1878, %v2182
    %v2203 = vsub.f32 %v1927, %v2185
    %v2204 = vsub.f32 %v1976, %v2188
    %v2205 = vsub.f32 %v2025, %v2191
    %v2206 = vsub.f32 %v2074, %v2194
    %v2207 = vsub.f32 %v2123, %v2197
    %v2208 = vsub.f32 %v2172, %v2200
    %v2209 = vmul.f32 %v2201, 1.442695
    %v2210 = vpow.pop %v2209
    %v2211 = vmul.f32 %v2202, 1.442695
    %v2212 = vpow.pop %v2211
    %v2213 = vmul.f32 %v2203, 1.442695
    %v2214 = vpow.pop %v2213
    %v2215 = vmul.f32 %v2204, 1.442695
    %v2216 = vpow.pop %v2215
    %v2217 = vmul.f32 %v2205, 1.442695
    %v2218 = vpow.pop %v2217
    %v2219 = vmul.f32 %v2206, 1.442695
    %v2220 = vpow.pop %v2219
    %v2221 = vmul.f32 %v2207, 1.442695
    %v2222 = vpow.pop %v2221
    %v2223 = vmul.f32 %v2208, 1.442695
    %v2224 = vpow.pop %v2223
    %v2225 = vsel %vm535, %v2210, 0.0
    %2226 = vadd.xlane.f32.xlu0 %v2225
    %v2227 = vpop.xlane.xlu0 %2226
    %v2228 = vsel %vm535, %v2212, 0.0
    %2229 = vadd.xlane.f32.xlu0 %v2228
    %v2230 = vpop.xlane.xlu0 %2229
    %v2231 = vsel %vm535, %v2214, 0.0
    %2232 = vadd.xlane.f32.xlu0 %v2231
    %v2233 = vpop.xlane.xlu0 %2232
    %v2234 = vsel %vm535, %v2216, 0.0
    %2235 = vadd.xlane.f32.xlu0 %v2234
    %v2236 = vpop.xlane.xlu0 %2235
    %v2237 = vsel %vm535, %v2218, 0.0
    %2238 = vadd.xlane.f32.xlu0 %v2237
    %v2239 = vpop.xlane.xlu0 %2238
    %v2240 = vsel %vm535, %v2220, 0.0
    %2241 = vadd.xlane.f32.xlu0 %v2240
    %v2242 = vpop.xlane.xlu0 %2241
    %v2243 = vsel %vm535, %v2222, 0.0
    %2244 = vadd.xlane.f32.xlu0 %v2243
    %v2245 = vpop.xlane.xlu0 %2244
    %v2246 = vsel %vm535, %v2224, 0.0
    %2247 = vadd.xlane.f32.xlu0 %v2246
    %v2248 = vpop.xlane.xlu0 %2247
    %v2249 = vrcp.pop %v2227
    %v2250 = vrcp.pop %v2230
    %v2251 = vrcp.pop %v2233
    %v2252 = vrcp.pop %v2236
    %v2253 = vrcp.pop %v2239
    %v2254 = vrcp.pop %v2242
    %v2255 = vrcp.pop %v2245
    %v2256 = vrcp.pop %v2248
    %v2257 = vmul.f32 %v2210, %v2249
    %v2258 = vmul.f32 %v2212, %v2250
    %v2259 = vmul.f32 %v2214, %v2251
    %v2260 = vmul.f32 %v2216, %v2252
    %v2261 = vmul.f32 %v2218, %v2253
    %v2262 = vmul.f32 %v2220, %v2254
    %v2263 = vmul.f32 %v2222, %v2255
    %v2264 = vmul.f32 %v2224, %v2256
    %v2265 = vpack.c.bf16 %v2257, %v2257
    %v2266 = vpack.c.bf16 %v2258, %v2258
    %v2267 = vpack.c.bf16 %v2259, %v2259
    %v2268 = vpack.c.bf16 %v2260, %v2260
    %v2269 = vpack.c.bf16 %v2261, %v2261
    %v2270 = vpack.c.bf16 %v2262, %v2262
    %v2271 = vpack.c.bf16 %v2263, %v2263
    %v2272 = vpack.c.bf16 %v2264, %v2264
    %2273 = vrot.lane.b32.xlu0 %v1777, 64
    %v2274 = vpop.permute.xlu0 %2273
    %v2276 = vsel %vm535, %v2265, 0
    %v2279 = vsel %vm1026, %v2274, 0
    %2281 = vmatprep.subr.bf16.mxu0 0
    %2282 = vmatpush1.bf16.msra.mxu0 %v2279
    %2283 = vmatprep.subr.bf16.mxu0 0
    %2284 = vmatpush1.bf16.msra.mxu0 0
    %2285 = vmatprep.subr.bf16.mxu0 0
    %2286 = vmatpush1.bf16.msra.mxu0 0
    %2287 = vmatprep.subr.bf16.mxu0 0
    %2288 = vmatpush1.bf16.msra.mxu0 0
    %2289 = vmatprep.subr.bf16.mxu0 0
    %2290 = vmatpush1.bf16.msra.mxu0 0
    %2291 = vmatprep.subr.bf16.mxu0 0
    %2292 = vmatpush1.bf16.msra.mxu0 0
    %2293 = vmatprep.subr.bf16.mxu0 0
    %2294 = vmatpush1.bf16.msra.mxu0 0
    %2295 = vmatprep.subr.bf16.mxu0 0
    %2296 = vmatpush1.bf16.msra.mxu0 0
    %2297 = vmatprep.subr.bf16.mxu0 0
    %2298 = vmatpush1.bf16.msra.mxu0 0
    %2299 = vmatprep.subr.bf16.mxu0 0
    %2300 = vmatpush1.bf16.msra.mxu0 0
    %2301 = vmatprep.subr.bf16.mxu0 0
    %2302 = vmatpush1.bf16.msra.mxu0 0
    %2303 = vmatprep.subr.bf16.mxu0 0
    %2304 = vmatpush1.bf16.msra.mxu0 0
    %2305 = vmatprep.subr.bf16.mxu0 0
    %2306 = vmatpush1.bf16.msra.mxu0 0
    %2307 = vmatprep.subr.bf16.mxu0 0
    %2308 = vmatpush1.bf16.msra.mxu0 0
    %2309 = vmatprep.subr.bf16.mxu0 0
    %2310 = vmatpush1.bf16.msra.mxu0 0
    %2311 = vmatprep.subr.bf16.mxu0 0
    %2312 = vmatpush1.bf16.msra.mxu0 0
    %2313 = vmatprep.mubr.bf16.mxu0 0
    %2314 = vmatmul.mubr.bf16.gmra.mrb[0].mxu0 %v2276
    %v2315 = vpop.f32.mrb[0].mxu0
    %v2316 = vadd.f32 0.0, %v2315
    %v2317 = vpop.f32.mrb[0].mxu0
    %v2318 = vpop.f32.mrb[0].mxu0
    %v2319 = vpop.f32.mrb[0].mxu0
    %2320 = vdwg.mxu0
    %2321 = vrot.lane.b32.xlu0 %v1778, 64
    %v2322 = vpop.permute.xlu0 %2321
    %v2324 = vsel %vm535, %v2266, 0
    %v2327 = vsel %vm1026, %v2322, 0
    %2329 = vmatprep.subr.bf16.mxu0 0
    %2330 = vmatpush1.bf16.msra.mxu0 %v2327
    %2331 = vmatprep.subr.bf16.mxu0 0
    %2332 = vmatpush1.bf16.msra.mxu0 0
    %2333 = vmatprep.subr.bf16.mxu0 0
    %2334 = vmatpush1.bf16.msra.mxu0 0
    %2335 = vmatprep.subr.bf16.mxu0 0
    %2336 = vmatpush1.bf16.msra.mxu0 0
    %2337 = vmatprep.subr.bf16.mxu0 0
    %2338 = vmatpush1.bf16.msra.mxu0 0
    %2339 = vmatprep.subr.bf16.mxu0 0
    %2340 = vmatpush1.bf16.msra.mxu0 0
    %2341 = vmatprep.subr.bf16.mxu0 0
    %2342 = vmatpush1.bf16.msra.mxu0 0
    %2343 = vmatprep.subr.bf16.mxu0 0
    %2344 = vmatpush1.bf16.msra.mxu0 0
    %2345 = vmatprep.subr.bf16.mxu0 0
    %2346 = vmatpush1.bf16.msra.mxu0 0
    %2347 = vmatprep.subr.bf16.mxu0 0
    %2348 = vmatpush1.bf16.msra.mxu0 0
    %2349 = vmatprep.subr.bf16.mxu0 0
    %2350 = vmatpush1.bf16.msra.mxu0 0
    %2351 = vmatprep.subr.bf16.mxu0 0
    %2352 = vmatpush1.bf16.msra.mxu0 0
    %2353 = vmatprep.subr.bf16.mxu0 0
    %2354 = vmatpush1.bf16.msra.mxu0 0
    %2355 = vmatprep.subr.bf16.mxu0 0
    %2356 = vmatpush1.bf16.msra.mxu0 0
    %2357 = vmatprep.subr.bf16.mxu0 0
    %2358 = vmatpush1.bf16.msra.mxu0 0
    %2359 = vmatprep.subr.bf16.mxu0 0
    %2360 = vmatpush1.bf16.msra.mxu0 0
    %2361 = vmatprep.mubr.bf16.mxu0 0
    %2362 = vmatmul.mubr.bf16.gmra.mrb[0].mxu0 %v2324
    %v2363 = vpop.f32.mrb[0].mxu0
    %v2364 = vadd.f32 0.0, %v2363
    %v2365 = vpop.f32.mrb[0].mxu0
    %v2366 = vpop.f32.mrb[0].mxu0
    %v2367 = vpop.f32.mrb[0].mxu0
    %2368 = vdwg.mxu0
    %2369 = vrot.lane.b32.xlu0 %v1779, 64
    %v2370 = vpop.permute.xlu0 %2369
    %v2372 = vsel %vm535, %v2267, 0
    %v2375 = vsel %vm1026, %v2370, 0
    %2377 = vmatprep.subr.bf16.mxu0 0
    %2378 = vmatpush1.bf16.msra.mxu0 %v2375
    %2379 = vmatprep.subr.bf16.mxu0 0
    %2380 = vmatpush1.bf16.msra.mxu0 0
    %2381 = vmatprep.subr.bf16.mxu0 0
    %2382 = vmatpush1.bf16.msra.mxu0 0
    %2383 = vmatprep.subr.bf16.mxu0 0
    %2384 = vmatpush1.bf16.msra.mxu0 0
    %2385 = vmatprep.subr.bf16.mxu0 0
    %2386 = vmatpush1.bf16.msra.mxu0 0
    %2387 = vmatprep.subr.bf16.mxu0 0
    %2388 = vmatpush1.bf16.msra.mxu0 0
    %2389 = vmatprep.subr.bf16.mxu0 0
    %2390 = vmatpush1.bf16.msra.mxu0 0
    %2391 = vmatprep.subr.bf16.mxu0 0
    %2392 = vmatpush1.bf16.msra.mxu0 0
    %2393 = vmatprep.subr.bf16.mxu0 0
    %2394 = vmatpush1.bf16.msra.mxu0 0
    %2395 = vmatprep.subr.bf16.mxu0 0
    %2396 = vmatpush1.bf16.msra.mxu0 0
    %2397 = vmatprep.subr.bf16.mxu0 0
    %2398 = vmatpush1.bf16.msra.mxu0 0
    %2399 = vmatprep.subr.bf16.mxu0 0
    %2400 = vmatpush1.bf16.msra.mxu0 0
    %2401 = vmatprep.subr.bf16.mxu0 0
    %2402 = vmatpush1.bf16.msra.mxu0 0
    %2403 = vmatprep.subr.bf16.mxu0 0
    %2404 = vmatpush1.bf16.msra.mxu0 0
    %2405 = vmatprep.subr.bf16.mxu0 0
    %2406 = vmatpush1.bf16.msra.mxu0 0
    %2407 = vmatprep.subr.bf16.mxu0 0
    %2408 = vmatpush1.bf16.msra.mxu0 0
    %2409 = vmatprep.mubr.bf16.mxu0 0
    %2410 = vmatmul.mubr.bf16.gmra.mrb[0].mxu0 %v2372
    %v2411 = vpop.f32.mrb[0].mxu0
    %v2412 = vadd.f32 0.0, %v2411
    %v2413 = vpop.f32.mrb[0].mxu0
    %v2414 = vpop.f32.mrb[0].mxu0
    %v2415 = vpop.f32.mrb[0].mxu0
    %2416 = vdwg.mxu0
    %2417 = vrot.lane.b32.xlu0 %v1780, 64
    %v2418 = vpop.permute.xlu0 %2417
    %v2420 = vsel %vm535, %v2268, 0
    %v2423 = vsel %vm1026, %v2418, 0
    %2425 = vmatprep.subr.bf16.mxu0 0
    %2426 = vmatpush1.bf16.msra.mxu0 %v2423
    %2427 = vmatprep.subr.bf16.mxu0 0
    %2428 = vmatpush1.bf16.msra.mxu0 0
    %2429 = vmatprep.subr.bf16.mxu0 0
    %2430 = vmatpush1.bf16.msra.mxu0 0
    %2431 = vmatprep.subr.bf16.mxu0 0
    %2432 = vmatpush1.bf16.msra.mxu0 0
    %2433 = vmatprep.subr.bf16.mxu0 0
    %2434 = vmatpush1.bf16.msra.mxu0 0
    %2435 = vmatprep.subr.bf16.mxu0 0
    %2436 = vmatpush1.bf16.msra.mxu0 0
    %2437 = vmatprep.subr.bf16.mxu0 0
    %2438 = vmatpush1.bf16.msra.mxu0 0
    %2439 = vmatprep.subr.bf16.mxu0 0
    %2440 = vmatpush1.bf16.msra.mxu0 0
    %2441 = vmatprep.subr.bf16.mxu0 0
    %2442 = vmatpush1.bf16.msra.mxu0 0
    %2443 = vmatprep.subr.bf16.mxu0 0
    %2444 = vmatpush1.bf16.msra.mxu0 0
    %2445 = vmatprep.subr.bf16.mxu0 0
    %2446 = vmatpush1.bf16.msra.mxu0 0
    %2447 = vmatprep.subr.bf16.mxu0 0
    %2448 = vmatpush1.bf16.msra.mxu0 0
    %2449 = vmatprep.subr.bf16.mxu0 0
    %2450 = vmatpush1.bf16.msra.mxu0 0
    %2451 = vmatprep.subr.bf16.mxu0 0
    %2452 = vmatpush1.bf16.msra.mxu0 0
    %2453 = vmatprep.subr.bf16.mxu0 0
    %2454 = vmatpush1.bf16.msra.mxu0 0
    %2455 = vmatprep.subr.bf16.mxu0 0
    %2456 = vmatpush1.bf16.msra.mxu0 0
    %2457 = vmatprep.mubr.bf16.mxu0 0
    %2458 = vmatmul.mubr.bf16.gmra.mrb[0].mxu0 %v2420
    %v2459 = vpop.f32.mrb[0].mxu0
    %v2460 = vadd.f32 0.0, %v2459
    %v2461 = vpop.f32.mrb[0].mxu0
    %v2462 = vpop.f32.mrb[0].mxu0
    %v2463 = vpop.f32.mrb[0].mxu0
    %2464 = vdwg.mxu0
    %2465 = vrot.lane.b32.xlu0 %v1781, 64
    %v2466 = vpop.permute.xlu0 %2465
    %v2468 = vsel %vm535, %v2269, 0
    %v2471 = vsel %vm1026, %v2466, 0
    %2473 = vmatprep.subr.bf16.mxu0 0
    %2474 = vmatpush1.bf16.msra.mxu0 %v2471
    %2475 = vmatprep.subr.bf16.mxu0 0
    %2476 = vmatpush1.bf16.msra.mxu0 0
    %2477 = vmatprep.subr.bf16.mxu0 0
    %2478 = vmatpush1.bf16.msra.mxu0 0
    %2479 = vmatprep.subr.bf16.mxu0 0
    %2480 = vmatpush1.bf16.msra.mxu0 0
    %2481 = vmatprep.subr.bf16.mxu0 0
    %2482 = vmatpush1.bf16.msra.mxu0 0
    %2483 = vmatprep.subr.bf16.mxu0 0
    %2484 = vmatpush1.bf16.msra.mxu0 0
    %2485 = vmatprep.subr.bf16.mxu0 0
    %2486 = vmatpush1.bf16.msra.mxu0 0
    %2487 = vmatprep.subr.bf16.mxu0 0
    %2488 = vmatpush1.bf16.msra.mxu0 0
    %2489 = vmatprep.subr.bf16.mxu0 0
    %2490 = vmatpush1.bf16.msra.mxu0 0
    %2491 = vmatprep.subr.bf16.mxu0 0
    %2492 = vmatpush1.bf16.msra.mxu0 0
    %2493 = vmatprep.subr.bf16.mxu0 0
    %2494 = vmatpush1.bf16.msra.mxu0 0
    %2495 = vmatprep.subr.bf16.mxu0 0
    %2496 = vmatpush1.bf16.msra.mxu0 0
    %2497 = vmatprep.subr.bf16.mxu0 0
    %2498 = vmatpush1.bf16.msra.mxu0 0
    %2499 = vmatprep.subr.bf16.mxu0 0
    %2500 = vmatpush1.bf16.msra.mxu0 0
    %2501 = vmatprep.subr.bf16.mxu0 0
    %2502 = vmatpush1.bf16.msra.mxu0 0
    %2503 = vmatprep.subr.bf16.mxu0 0
    %2504 = vmatpush1.bf16.msra.mxu0 0
    %2505 = vmatprep.mubr.bf16.mxu0 0
    %2506 = vmatmul.mubr.bf16.gmra.mrb[0].mxu0 %v2468
    %v2507 = vpop.f32.mrb[0].mxu0
    %v2508 = vadd.f32 0.0, %v2507
    %v2509 = vpop.f32.mrb[0].mxu0
    %v2510 = vpop.f32.mrb[0].mxu0
    %v2511 = vpop.f32.mrb[0].mxu0
    %2512 = vdwg.mxu0
    %2513 = vrot.lane.b32.xlu0 %v1782, 64
    %v2514 = vpop.permute.xlu0 %2513
    %v2516 = vsel %vm535, %v2270, 0
    %v2519 = vsel %vm1026, %v2514, 0
    %2521 = vmatprep.subr.bf16.mxu0 0
    %2522 = vmatpush1.bf16.msra.mxu0 %v2519
    %2523 = vmatprep.subr.bf16.mxu0 0
    %2524 = vmatpush1.bf16.msra.mxu0 0
    %2525 = vmatprep.subr.bf16.mxu0 0
    %2526 = vmatpush1.bf16.msra.mxu0 0
    %2527 = vmatprep.subr.bf16.mxu0 0
    %2528 = vmatpush1.bf16.msra.mxu0 0
    %2529 = vmatprep.subr.bf16.mxu0 0
    %2530 = vmatpush1.bf16.msra.mxu0 0
    %2531 = vmatprep.subr.bf16.mxu0 0
    %2532 = vmatpush1.bf16.msra.mxu0 0
    %2533 = vmatprep.subr.bf16.mxu0 0
    %2534 = vmatpush1.bf16.msra.mxu0 0
    %2535 = vmatprep.subr.bf16.mxu0 0
    %2536 = vmatpush1.bf16.msra.mxu0 0
    %2537 = vmatprep.subr.bf16.mxu0 0
    %2538 = vmatpush1.bf16.msra.mxu0 0
    %2539 = vmatprep.subr.bf16.mxu0 0
    %2540 = vmatpush1.bf16.msra.mxu0 0
    %2541 = vmatprep.subr.bf16.mxu0 0
    %2542 = vmatpush1.bf16.msra.mxu0 0
    %2543 = vmatprep.subr.bf16.mxu0 0
    %2544 = vmatpush1.bf16.msra.mxu0 0
    %2545 = vmatprep.subr.bf16.mxu0 0
    %2546 = vmatpush1.bf16.msra.mxu0 0
    %2547 = vmatprep.subr.bf16.mxu0 0
    %2548 = vmatpush1.bf16.msra.mxu0 0
    %2549 = vmatprep.subr.bf16.mxu0 0
    %2550 = vmatpush1.bf16.msra.mxu0 0
    %2551 = vmatprep.subr.bf16.mxu0 0
    %2552 = vmatpush1.bf16.msra.mxu0 0
    %2553 = vmatprep.mubr.bf16.mxu0 0
    %2554 = vmatmul.mubr.bf16.gmra.mrb[0].mxu0 %v2516
    %v2555 = vpop.f32.mrb[0].mxu0
    %v2556 = vadd.f32 0.0, %v2555
    %v2557 = vpop.f32.mrb[0].mxu0
    %v2558 = vpop.f32.mrb[0].mxu0
    %v2559 = vpop.f32.mrb[0].mxu0
    %2560 = vdwg.mxu0
    %2561 = vrot.lane.b32.xlu0 %v1783, 64
    %v2562 = vpop.permute.xlu0 %2561
    %v2564 = vsel %vm535, %v2271, 0
    %v2567 = vsel %vm1026, %v2562, 0
    %2569 = vmatprep.subr.bf16.mxu0 0
    %2570 = vmatpush1.bf16.msra.mxu0 %v2567
    %2571 = vmatprep.subr.bf16.mxu0 0
    %2572 = vmatpush1.bf16.msra.mxu0 0
    %2573 = vmatprep.subr.bf16.mxu0 0
    %2574 = vmatpush1.bf16.msra.mxu0 0
    %2575 = vmatprep.subr.bf16.mxu0 0
    %2576 = vmatpush1.bf16.msra.mxu0 0
    %2577 = vmatprep.subr.bf16.mxu0 0
    %2578 = vmatpush1.bf16.msra.mxu0 0
    %2579 = vmatprep.subr.bf16.mxu0 0
    %2580 = vmatpush1.bf16.msra.mxu0 0
    %2581 = vmatprep.subr.bf16.mxu0 0
    %2582 = vmatpush1.bf16.msra.mxu0 0
    %2583 = vmatprep.subr.bf16.mxu0 0
    %2584 = vmatpush1.bf16.msra.mxu0 0
    %2585 = vmatprep.subr.bf16.mxu0 0
    %2586 = vmatpush1.bf16.msra.mxu0 0
    %2587 = vmatprep.subr.bf16.mxu0 0
    %2588 = vmatpush1.bf16.msra.mxu0 0
    %2589 = vmatprep.subr.bf16.mxu0 0
    %2590 = vmatpush1.bf16.msra.mxu0 0
    %2591 = vmatprep.subr.bf16.mxu0 0
    %2592 = vmatpush1.bf16.msra.mxu0 0
    %2593 = vmatprep.subr.bf16.mxu0 0
    %2594 = vmatpush1.bf16.msra.mxu0 0
    %2595 = vmatprep.subr.bf16.mxu0 0
    %2596 = vmatpush1.bf16.msra.mxu0 0
    %2597 = vmatprep.subr.bf16.mxu0 0
    %2598 = vmatpush1.bf16.msra.mxu0 0
    %2599 = vmatprep.subr.bf16.mxu0 0
    %2600 = vmatpush1.bf16.msra.mxu0 0
    %2601 = vmatprep.mubr.bf16.mxu0 0
    %2602 = vmatmul.mubr.bf16.gmra.mrb[0].mxu0 %v2564
    %v2603 = vpop.f32.mrb[0].mxu0
    %v2604 = vadd.f32 0.0, %v2603
    %v2605 = vpop.f32.mrb[0].mxu0
    %v2606 = vpop.f32.mrb[0].mxu0
    %v2607 = vpop.f32.mrb[0].mxu0
    %2608 = vdwg.mxu0
    %2609 = vrot.lane.b32.xlu0 %v1784, 64
    %v2610 = vpop.permute.xlu0 %2609
    %v2612 = vsel %vm535, %v2272, 0
    %v2615 = vsel %vm1026, %v2610, 0
    %2617 = vmatprep.subr.bf16.mxu0 0
    %2618 = vmatpush1.bf16.msra.mxu0 %v2615
    %2619 = vmatprep.subr.bf16.mxu0 0
    %2620 = vmatpush1.bf16.msra.mxu0 0
    %2621 = vmatprep.subr.bf16.mxu0 0
    %2622 = vmatpush1.bf16.msra.mxu0 0
    %2623 = vmatprep.subr.bf16.mxu0 0
    %2624 = vmatpush1.bf16.msra.mxu0 0
    %2625 = vmatprep.subr.bf16.mxu0 0
    %2626 = vmatpush1.bf16.msra.mxu0 0
    %2627 = vmatprep.subr.bf16.mxu0 0
    %2628 = vmatpush1.bf16.msra.mxu0 0
    %2629 = vmatprep.subr.bf16.mxu0 0
    %2630 = vmatpush1.bf16.msra.mxu0 0
    %2631 = vmatprep.subr.bf16.mxu0 0
    %2632 = vmatpush1.bf16.msra.mxu0 0
    %2633 = vmatprep.subr.bf16.mxu0 0
    %2634 = vmatpush1.bf16.msra.mxu0 0
    %2635 = vmatprep.subr.bf16.mxu0 0
    %2636 = vmatpush1.bf16.msra.mxu0 0
    %2637 = vmatprep.subr.bf16.mxu0 0
    %2638 = vmatpush1.bf16.msra.mxu0 0
    %2639 = vmatprep.subr.bf16.mxu0 0
    %2640 = vmatpush1.bf16.msra.mxu0 0
    %2641 = vmatprep.subr.bf16.mxu0 0
    %2642 = vmatpush1.bf16.msra.mxu0 0
    %2643 = vmatprep.subr.bf16.mxu0 0
    %2644 = vmatpush1.bf16.msra.mxu0 0
    %2645 = vmatprep.subr.bf16.mxu0 0
    %2646 = vmatpush1.bf16.msra.mxu0 0
    %2647 = vmatprep.subr.bf16.mxu0 0
    %2648 = vmatpush1.bf16.msra.mxu0 0
    %2649 = vmatprep.mubr.bf16.mxu0 0
    %2650 = vmatmul.mubr.bf16.gmra.mrb[0].mxu0 %v2612
    %v2651 = vpop.f32.mrb[0].mxu0
    %v2652 = vadd.f32 0.0, %v2651
    %v2653 = vpop.f32.mrb[0].mxu0
    %v2654 = vpop.f32.mrb[0].mxu0
    %v2655 = vpop.f32.mrb[0].mxu0
    %2656 = vdwg.mxu0
    %2659 = vrot.lane.b32.xlu0 %v2412, 8
    %v2660 = vpop.permute.xlu0 %2659
    %2661 = vrot.lane.b32.xlu0 %v2460, 8
    %v2662 = vpop.permute.xlu0 %2661
    %2667 = vrot.lane.b32.xlu0 %v2508, 16
    %v2668 = vpop.permute.xlu0 %2667
    %2669 = vrot.lane.b32.xlu0 %v2556, 16
    %v2670 = vpop.permute.xlu0 %2669
    %2675 = vrot.lane.b32.xlu0 %v2604, 24
    %v2676 = vpop.permute.xlu0 %2675
    %2677 = vrot.lane.b32.xlu0 %v2652, 24
    %v2678 = vpop.permute.xlu0 %2677
    %v2681 = vsel %vm535, %v2316, %v2660
    %v2682 = vsel %vm535, %v2364, %v2662
    %v2683 = vsel %vm1432, %v2681, %v2668
    %v2684 = vsel %vm1432, %v2682, %v2670
    %v2685 = vsel %vm1435, %v2683, %v2676
    %v2686 = vsel %vm1435, %v2684, %v2678
    %v2687 = vpack.c.bf16 %v2686, %v2685
    %s2688 = scalar_lea.vmem [#allocation8], 16
    %v2689 = vld [vmem:[%s2688] sm:$0xf]
    %v2690 = vld [vmem:[%s2688 + $0x4] sm:$0xf]
    %v2691 = vld [vmem:[%s2688 + $0x8] sm:$0xf]
    %v2692 = vld [vmem:[%s2688 + $0xc] sm:$0xf]
    %v2697 = vunpack.c.l.b16 %v2689
    %v2698 = vunpack.c.l.b16 %v2690
    %v2699 = vunpack.c.l.b16 %v2691
    %v2700 = vunpack.c.l.b16 %v2692
    %v2701 = vpack.c.b16 %v2698, %v2697
    %v2702 = vpack.c.b16 %v2700, %v2699
    %v2706 = vsel %vm418, %v2687, 0
    %2708 = vmatprep.subr.bf16.mxu0 0
    %2709 = vmatpush1.bf16.msra.mxu0 %v2701
    %2710 = vmatprep.subr.bf16.mxu0 0
    %2711 = vmatpush1.bf16.msra.mxu0 %v2702
    %2712 = vmatprep.subr.bf16.mxu0 0
    %2713 = vmatpush1.bf16.msra.mxu0 0
    %2714 = vmatprep.subr.bf16.mxu0 0
    %2715 = vmatpush1.bf16.msra.mxu0 0
    %2716 = vmatprep.subr.bf16.mxu0 0
    %2717 = vmatpush1.bf16.msra.mxu0 0
    %2718 = vmatprep.subr.bf16.mxu0 0
    %2719 = vmatpush1.bf16.msra.mxu0 0
    %2720 = vmatprep.subr.bf16.mxu0 0
    %2721 = vmatpush1.bf16.msra.mxu0 0
    %2722 = vmatprep.subr.bf16.mxu0 0
    %2723 = vmatpush1.bf16.msra.mxu0 0
    %2724 = vmatprep.subr.bf16.mxu0 0
    %2725 = vmatpush1.bf16.msra.mxu0 0
    %2726 = vmatprep.subr.bf16.mxu0 0
    %2727 = vmatpush1.bf16.msra.mxu0 0
    %2728 = vmatprep.subr.bf16.mxu0 0
    %2729 = vmatpush1.bf16.msra.mxu0 0
    %2730 = vmatprep.subr.bf16.mxu0 0
    %2731 = vmatpush1.bf16.msra.mxu0 0
    %2732 = vmatprep.subr.bf16.mxu0 0
    %2733 = vmatpush1.bf16.msra.mxu0 0
    %2734 = vmatprep.subr.bf16.mxu0 0
    %2735 = vmatpush1.bf16.msra.mxu0 0
    %2736 = vmatprep.subr.bf16.mxu0 0
    %2737 = vmatpush1.bf16.msra.mxu0 0
    %2738 = vmatprep.subr.bf16.mxu0 0
    %2739 = vmatpush1.bf16.msra.mxu0 0
    %2740 = vmatprep.mubr.bf16.mxu0 0
    %2741 = vmatmul.mubr.bf16.gmra.mrb[0].mxu0 %v2706
    %v2742 = vpop.f32.mrb[0].mxu0
    %v2743 = vadd.f32 0.0, %v2742
    %v2744 = vpop.f32.mrb[0].mxu0
    %v2745 = vpop.f32.mrb[0].mxu0
    %v2746 = vadd.f32 0.0, %v2745
    %v2747 = vpop.f32.mrb[0].mxu0
    %2748 = vdwg.mxu0
    %v2749 = vadd.f32 %v1667, %v2743
    %v2750 = vadd.f32 %v1668, %v2746
    %v2751 = vmul.f32 %v2749, %v2749
    %v2752 = vmul.f32 %v2750, %v2750
    %v2753 = vsel %vm418, %v2751, 0.0
    %2754 = vadd.xlane.f32.xlu0 %v2753
    %v2755 = vpop.xlane.xlu0 %2754
    %v2756 = vsel %vm418, %v2752, 0.0
    %2757 = vadd.xlane.f32.xlu0 %v2756
    %v2758 = vpop.xlane.xlu0 %2757
    %v2759 = vmul.f32 %v2755, %v425
    %v2760 = vmul.f32 %v2758, %v425
    %v2761 = vadd.f32 %v2759, 1e-06
    %v2762 = vadd.f32 %v2760, 1e-06
    %v2763 = vrsqrt.pop %v2761
    %v2764 = vrsqrt.pop %v2762
    %v2765 = vmul.f32 %v2749, %v2763
    %v2766 = vmul.f32 %v2750, %v2764
    %s2767 = scalar_lea.vmem %s6, 1
    %v2768 = vld [vmem:[%s2767] sm:$0x1]
    %v2770 = vlaneseq
    %v2771 = vshrl.u32 %v2770, 7
    %v2772 = vsub.s32 0, %v2771
    %v2773 = vrot.slane %v2768, %v2772
    %v2775 = vmul.f32 %v2765, %v2773
    %v2776 = vmul.f32 %v2766, %v2773
    %v2777 = vpack.c.bf16 %v2776, %v2775
    %s2778 = scalar_lea.vmem [#allocation10], 16
    %v2779 = vld [vmem:[%s2778] sm:$0xf]
    %v2780 = vld [vmem:[%s2778 + $0x4] sm:$0xf]
    %v2781 = vld [vmem:[%s2778 + $0x8] sm:$0xf]
    %v2782 = vld [vmem:[%s2778 + $0xc] sm:$0xf]
    %v2787 = vunpack.c.l.b16 %v2779
    %v2788 = vunpack.c.l.b16 %v2780
    %v2789 = vunpack.c.l.b16 %v2781
    %v2790 = vunpack.c.l.b16 %v2782
    %v2791 = vpack.c.b16 %v2788, %v2787
    %v2792 = vpack.c.b16 %v2790, %v2789
    %v2796 = vsel %vm418, %v2777, 0
    %2798 = vmatprep.subr.bf16.mxu0 0
    %2799 = vmatpush1.bf16.msra.mxu0 %v2791
    %2800 = vmatprep.subr.bf16.mxu0 0
    %2801 = vmatpush1.bf16.msra.mxu0 %v2792
    %2802 = vmatprep.subr.bf16.mxu0 0
    %2803 = vmatpush1.bf16.msra.mxu0 0
    %2804 = vmatprep.subr.bf16.mxu0 0
    %2805 = vmatpush1.bf16.msra.mxu0 0
    %2806 = vmatprep.subr.bf16.mxu0 0
    %2807 = vmatpush1.bf16.msra.mxu0 0
    %2808 = vmatprep.subr.bf16.mxu0 0
    %2809 = vmatpush1.bf16.msra.mxu0 0
    %2810 = vmatprep.subr.bf16.mxu0 0
    %2811 = vmatpush1.bf16.msra.mxu0 0
    %2812 = vmatprep.subr.bf16.mxu0 0
    %2813 = vmatpush1.bf16.msra.mxu0 0
    %2814 = vmatprep.subr.bf16.mxu0 0
    %2815 = vmatpush1.bf16.msra.mxu0 0
    %2816 = vmatprep.subr.bf16.mxu0 0
    %2817 = vmatpush1.bf16.msra.mxu0 0
    %2818 = vmatprep.subr.bf16.mxu0 0
    %2819 = vmatpush1.bf16.msra.mxu0 0
    %2820 = vmatprep.subr.bf16.mxu0 0
    %2821 = vmatpush1.bf16.msra.mxu0 0
    %2822 = vmatprep.subr.bf16.mxu0 0
    %2823 = vmatpush1.bf16.msra.mxu0 0
    %2824 = vmatprep.subr.bf16.mxu0 0
    %2825 = vmatpush1.bf16.msra.mxu0 0
    %2826 = vmatprep.subr.bf16.mxu0 0
    %2827 = vmatpush1.bf16.msra.mxu0 0
    %2828 = vmatprep.subr.bf16.mxu0 0
    %2829 = vmatpush1.bf16.msra.mxu0 0
    %2830 = vmatprep.mubr.bf16.mxu0 0
    %2831 = vmatmul.mubr.bf16.gmra.mrb[0].mxu0 %v2796
    %v2832 = vpop.f32.mrb[0].mxu0
    %v2833 = vadd.f32 0.0, %v2832
    %v2834 = vpop.f32.mrb[0].mxu0
    %v2835 = vpop.f32.mrb[0].mxu0
    %v2836 = vadd.f32 0.0, %v2835
    %v2837 = vpop.f32.mrb[0].mxu0
    %2838 = vdwg.mxu0
    %v2839 = vmax.f32 %v2833, 0.0
    %v2840 = vmax.f32 %v2836, 0.0
    %v2841 = vpack.c.bf16 %v2840, %v2839
    %s2842 = scalar_lea.vmem %s8, 32
    %v2843 = vld [vmem:[%s2842] sm:$0xf]
    %v2844 = vld [vmem:[%s2842 + $0x4] sm:$0xf]
    %v2845 = vld [vmem:[%s2842 + $0x8] sm:$0xf]
    %v2846 = vld [vmem:[%s2842 + $0xc] sm:$0xf]
    %v2847 = vld [vmem:[%s2842 + $0x10] sm:$0xf]
    %v2848 = vld [vmem:[%s2842 + $0x14] sm:$0xf]
    %v2849 = vld [vmem:[%s2842 + $0x18] sm:$0xf]
    %v2850 = vld [vmem:[%s2842 + $0x1c] sm:$0xf]
    %v2859 = vunpack.c.l.b16 %v2843
    %v2860 = vunpack.c.l.b16 %v2844
    %v2861 = vunpack.c.l.b16 %v2845
    %v2862 = vunpack.c.l.b16 %v2846
    %v2863 = vunpack.c.l.b16 %v2847
    %v2864 = vunpack.c.l.b16 %v2848
    %v2865 = vunpack.c.l.b16 %v2849
    %v2866 = vunpack.c.l.b16 %v2850
    %v2867 = vpack.c.b16 %v2860, %v2859
    %v2868 = vpack.c.b16 %v2862, %v2861
    %v2869 = vpack.c.b16 %v2864, %v2863
    %v2870 = vpack.c.b16 %v2866, %v2865
    %v2876 = vsel %vm1622, %v2841, 0
    %2878 = vmatprep.subr.bf16.mxu0 0
    %2879 = vmatpush1.bf16.msra.mxu0 %v2867
    %2880 = vmatprep.subr.bf16.mxu0 0
    %2881 = vmatpush1.bf16.msra.mxu0 %v2868
    %2882 = vmatprep.subr.bf16.mxu0 0
    %2883 = vmatpush1.bf16.msra.mxu0 %v2869
    %2884 = vmatprep.subr.bf16.mxu0 0
    %2885 = vmatpush1.bf16.msra.mxu0 %v2870
    %2886 = vmatprep.subr.bf16.mxu0 0
    %2887 = vmatpush1.bf16.msra.mxu0 0
    %2888 = vmatprep.subr.bf16.mxu0 0
    %2889 = vmatpush1.bf16.msra.mxu0 0
    %2890 = vmatprep.subr.bf16.mxu0 0
    %2891 = vmatpush1.bf16.msra.mxu0 0
    %2892 = vmatprep.subr.bf16.mxu0 0
    %2893 = vmatpush1.bf16.msra.mxu0 0
    %2894 = vmatprep.subr.bf16.mxu0 0
    %2895 = vmatpush1.bf16.msra.mxu0 0
    %2896 = vmatprep.subr.bf16.mxu0 0
    %2897 = vmatpush1.bf16.msra.mxu0 0
    %2898 = vmatprep.subr.bf16.mxu0 0
    %2899 = vmatpush1.bf16.msra.mxu0 0
    %2900 = vmatprep.subr.bf16.mxu0 0
    %2901 = vmatpush1.bf16.msra.mxu0 0
    %2902 = vmatprep.subr.bf16.mxu0 0
    %2903 = vmatpush1.bf16.msra.mxu0 0
    %2904 = vmatprep.subr.bf16.mxu0 0
    %2905 = vmatpush1.bf16.msra.mxu0 0
    %2906 = vmatprep.subr.bf16.mxu0 0
    %2907 = vmatpush1.bf16.msra.mxu0 0
    %2908 = vmatprep.subr.bf16.mxu0 0
    %2909 = vmatpush1.bf16.msra.mxu0 0
    %2910 = vmatprep.mubr.bf16.mxu0 0
    %2911 = vmatmul.mubr.bf16.gmra.mrb[0].mxu0 %v2876
    %v2912 = vpop.f32.mrb[0].mxu0
    %v2913 = vadd.f32 0.0, %v2912
    %v2914 = vpop.f32.mrb[0].mxu0
    %v2915 = vpop.f32.mrb[0].mxu0
    %v2916 = vadd.f32 0.0, %v2915
    %v2917 = vpop.f32.mrb[0].mxu0
    %2918 = vdwg.mxu0
    %v2919 = vadd.f32 %v2749, %v2913
    %v2920 = vadd.f32 %v2750, %v2916
    %v2921 = vmul.f32 %v2919, %v2919
    %v2922 = vmul.f32 %v2920, %v2920
    %v2925 = vrot.slane %v2922, 7
    %vm2926 = vcmask 1041409
    %v2927 = vsel %vm2926, %v2925, %v2921
    %vm2929 = vcmask 254976
    %v2930 = vsel %vm2929, %v2927, 0.0
    %2931 = vadd.xlane.f32.xlu0 %v2930
    %v2932 = vpop.xlane.xlu0 %2931
    %v2933 = vmul.f32 %v2932, %v425
    %v2934 = vadd.f32 %v2933, 1e-06
    %v2935 = vrsqrt.pop %v2934
    %v2937 = vrot.slane %v2935, 1
    %v2940 = vmul.f32 %v2919, %v2935
    %v2941 = vmul.f32 %v2920, %v2937
    %v2942 = vld [vmem:[%s9] sm:$0x1]
    %v2944 = vlaneseq
    %v2945 = vshrl.u32 %v2944, 7
    %v2946 = vsub.s32 0, %v2945
    %v2947 = vrot.slane %v2942, %v2946
    %v2949 = vmul.f32 %v2940, %v2947
    %v2950 = vmul.f32 %v2941, %v2947
    %v2951 = vpack.c.bf16 %v2949, %v2949
    %v2952 = vpack.c.bf16 %v2950, %v2950
    %v2953 = vld [vmem:[%s10] sm:$0xf]
    %v2954 = vld [vmem:[%s10 + $0x4] sm:$0xf]
    %v2955 = vld [vmem:[%s10 + $0x8] sm:$0xf]
    %v2956 = vld [vmem:[%s10 + $0xc] sm:$0xf]
    %v2957 = vld [vmem:[%s11] sm:$0x1]
    %v2959 = vlaneseq
    %v2960 = vshrl.u32 %v2959, 7
    %v2961 = vsub.s32 0, %v2960
    %v2962 = vrot.slane %v2957, %v2961
    %v2966 = vunpack.c.l.b16 %v2951
    %v2967 = vunpack.c.l.b16 %v2952
    %v2968 = vrot.slane %v2967, 7
    %v2969 = vsel %vm2926, %v2968, %v2966
    %v2970 = vpack.c.b16 %v2969, %v2969
    %v2975 = vunpack.c.l.b16 %v2953
    %v2976 = vunpack.c.l.b16 %v2954
    %v2977 = vunpack.c.l.b16 %v2955
    %v2978 = vunpack.c.l.b16 %v2956
    %v2979 = vpack.c.b16 %v2976, %v2975
    %v2980 = vpack.c.b16 %v2978, %v2977
    %v2984 = vsel %vm418, %v2970, 0
    %2986 = vmatprep.subr.bf16.mxu0 0
    %2987 = vmatpush1.bf16.msra.mxu0 %v2979
    %2988 = vmatprep.subr.bf16.mxu0 0
    %2989 = vmatpush1.bf16.msra.mxu0 %v2980
    %2990 = vmatprep.subr.bf16.mxu0 0
    %2991 = vmatpush1.bf16.msra.mxu0 0
    %2992 = vmatprep.subr.bf16.mxu0 0
    %2993 = vmatpush1.bf16.msra.mxu0 0
    %2994 = vmatprep.subr.bf16.mxu0 0
    %2995 = vmatpush1.bf16.msra.mxu0 0
    %2996 = vmatprep.subr.bf16.mxu0 0
    %2997 = vmatpush1.bf16.msra.mxu0 0
    %2998 = vmatprep.subr.bf16.mxu0 0
    %2999 = vmatpush1.bf16.msra.mxu0 0
    %3000 = vmatprep.subr.bf16.mxu0 0
    %3001 = vmatpush1.bf16.msra.mxu0 0
    %3002 = vmatprep.subr.bf16.mxu0 0
    %3003 = vmatpush1.bf16.msra.mxu0 0
    %3004 = vmatprep.subr.bf16.mxu0 0
    %3005 = vmatpush1.bf16.msra.mxu0 0
    %3006 = vmatprep.subr.bf16.mxu0 0
    %3007 = vmatpush1.bf16.msra.mxu0 0
    %3008 = vmatprep.subr.bf16.mxu0 0
    %3009 = vmatpush1.bf16.msra.mxu0 0
    %3010 = vmatprep.subr.bf16.mxu0 0
    %3011 = vmatpush1.bf16.msra.mxu0 0
    %3012 = vmatprep.subr.bf16.mxu0 0
    %3013 = vmatpush1.bf16.msra.mxu0 0
    %3014 = vmatprep.subr.bf16.mxu0 0
    %3015 = vmatpush1.bf16.msra.mxu0 0
    %3016 = vmatprep.subr.bf16.mxu0 0
    %3017 = vmatpush1.bf16.msra.mxu0 0
    %3018 = vmatprep.mubr.bf16.mxu0 0
    %3019 = vmatmul.mubr.bf16.gmra.mrb[0].mxu0 %v2984
    %v3020 = vpop.f32.mrb[0].mxu0
    %v3021 = vadd.f32 %v2962, %v3020
    %v3022 = vpop.f32.mrb[0].mxu0
    %v3023 = vpop.f32.mrb[0].mxu0
    %v3024 = vpop.f32.mrb[0].mxu0
    %3025 = vdwg.mxu0
    %3026 = vst [vmem:[#allocation11] sm:$0x3] %v3021
    // Predicated region
    $region70: #{_lambda_.1} parent=1 // pred_check
      _
    $region71: #{_lambda_.1} parent=1 // pred_check_branch
      %3028 = sbr.rel (0) target = $region73
    $region72: #{_lambda_.1} parent=1 // pred_region
      %s3030 = ssub.s32 32, 32
      %3031 = vsyncadd [#allocation4], %s3030
      %s3033 = sshll.u32 [#allocation11], 4
      %s3034 = int_to_ptr.vmem [resolvable:$true] %s3033
      %3036 = dma.vmem_to_hbm [thread:$0]  %s3034, 32, %s12, [#allocation4]
    $region73: #{_lambda_.1} parent=1 // pred_fallthru
      _
    // Predicated region
    $region74: #{_lambda_.1} parent=1 // pred_check
      _
    $region75: #{_lambda_.1} parent=1 // pred_check_branch
      %3038 = sbr.rel (0) target = $region77
    $region76: #{_lambda_.1} parent=1 // pred_region
      %3039 = dma.done [#allocation4], 32
    $region77: #{_lambda_.1} parent=1 // pred_fallthru
      _
    %3040 = vsyncpa [#allocation3], 1
    %3041 = vsyncpa [#allocation6], 1
    %3042 = vsyncpa [#allocation9], 1
    %3043 = vsyncpa [#allocation4], 1

</llo_original>
